<compile_context>
chip_gen: v7x
topology: tpu7x:2x2x1
jax: 0.10.0
libtpu: 0.0.40
codegen_flags: <defaults>
</compile_context>

<pallas_src>
import math

import jax
import jax.numpy as jnp
from jax.experimental import pallas as pl
from jax.experimental.pallas import tpu as pltpu

# ---------------- module configuration (mirrors MDCBlock.__init__) ----------------
IN_CH = 6                  # in_channels
OUT_CH = 8                 # out_channels
SPLIT = [2, 2, 2]          # divmod(6, 3) -> [2, 2, 2]
KERNELS = [1, 3, 3]        # custom_params['kernel']
PADDINGS = [0, 1, 2]       # custom_params['padding']
DILATIONS = [1, 1, 2]      # custom_params['dilation']
H = W = 16
HW = H * W                 # 256 lanes (multiple of 128)
BN_EPS = 1e-5

MISC_R = max(IN_CH, OUT_CH)   # packed small-params operand rows
MISC_C = IN_CH + 2            # [W_pre_eff | b_pre | b_fus]


def _build_shifts():
    """Unique spatial shifts (dh, dw) used by the three (dilated) split convs."""
    shifts = []
    for g in range(3):
        k, d, p = KERNELS[g], DILATIONS[g], PADDINGS[g]
        for kh in range(k):
            for kw in range(k):
                s = (kh * d - p, kw * d - p)
                if s not in shifts:
                    shifts.append(s)
    return shifts


SHIFTS = _build_shifts()        # 17 unique shifts ({0,0} ∪ {-1,0,1}^2 ∪ {-2,0,2}^2)
NSHIFT = len(SHIFTS)


# ------------------------------- Pallas kernel ------------------------------------
def mdc_kernel(x_ref, misc_ref, wshift_ref, masks_ref, o_ref):
    b_tile = x_ref.shape[0]
    lanes = b_tile * HW

    misc = misc_ref[...]
    w_pre = misc[0:IN_CH, 0:IN_CH]                    # (Cin, Cin), BN scale folded
    b_pre = misc[0:IN_CH, IN_CH:IN_CH + 1]            # (Cin, 1)
    b_fus = misc[0:OUT_CH, IN_CH + 1:IN_CH + 2]       # (Cout, 1)

    # Gather this step's images into one lane-dense (Cin, b_tile*HW) slab
    # (concat offsets are multiples of 256 lanes -> whole-vreg placement).
    if b_tile == 1:
        x = x_ref[0].astype(jnp.float32)
    else:
        x = jnp.concatenate(
            [x_ref[b].astype(jnp.float32) for b in range(b_tile)], axis=-1)

    # pre_conv: 1x1 conv (BN scale folded into weights) + bias + ReLU6.
    t = jnp.dot(w_pre, x, preferred_element_type=jnp.float32) + b_pre
    t = jnp.clip(t, 0.0, 6.0)

    # split dilated convs -> concat -> fusion 1x1 + BN, pre-composed into one
    # (Cout, Cin) matmul per unique spatial shift.  Shifted taps come from XLU
    # rolls along the flattened HW axis plus 0/1 edge masks (no padded scratch).
    acc = jnp.zeros((OUT_CH, lanes), jnp.float32)
    for s_idx, (dh, dw) in enumerate(SHIFTS):
        w_s = wshift_ref[s_idx]                       # (Cout, Cin)
        if dh == 0 and dw == 0:
            src = t
        else:
            shift = (-(dh * W + dw)) % lanes
            rolled = pltpu.roll(t, shift=shift, axis=1)
            src = rolled * masks_ref[s_idx]           # (1, lanes) mask, bcast over C
        acc = acc + jnp.dot(w_s, src, preferred_element_type=jnp.float32)

    out = jnp.clip(acc + b_fus, 0.0, 6.0)
    for b in range(b_tile):                           # lane-aligned, unmasked stores
        o_ref[b] = out[:, b * HW:(b + 1) * HW].astype(o_ref.dtype)


# ---------------------- offline weight folding / composition ----------------------
def _fold_bn(gamma, beta, mean, var):
    scale = gamma / jnp.sqrt(var + BN_EPS)
    return scale, beta - mean * scale


def prepare_operands(params, b_tile):
    (w_pre, g_pre, be_pre, m_pre, v_pre,
     wg0, wg1, wg2,
     w_fus, g_fus, be_fus, m_fus, v_fus) = params
    hp = jax.lax.Precision.HIGHEST

    s_pre, b_pre = _fold_bn(g_pre, be_pre, m_pre, v_pre)
    s_fus, b_fus = _fold_bn(g_fus, be_fus, m_fus, v_fus)
    w_pre_eff = w_pre * s_pre[:, None]                # (Cin, Cin)
    w_fus_eff = w_fus * s_fus[:, None]                # (Cout, Cin)

    # Pack the tiny per-channel params into a single (8, 8) operand.
    misc = jnp.zeros((MISC_R, MISC_C), jnp.float32)
    misc = misc.at[:IN_CH, :IN_CH].set(w_pre_eff)
    misc = misc.at[:IN_CH, IN_CH].set(b_pre)
    misc = misc.at[:OUT_CH, IN_CH + 1].set(b_fus)

    # Compose (group-conv tap) x (fusion 1x1 with BN scale) per unique shift.
    shift_w = {s: jnp.zeros((OUT_CH, IN_CH), jnp.float32) for s in SHIFTS}
    wgs = [wg0, wg1, wg2]
    c0 = 0
    for g in range(3):
        cg, k, d, p = SPLIT[g], KERNELS[g], DILATIONS[g], PADDINGS[g]
        wf_g = w_fus_eff[:, c0:c0 + cg]               # (Cout, cg_out)
        for kh in range(k):
            for kw in range(k):
                s = (kh * d - p, kw * d - p)
                tap = wgs[g][:, :, kh, kw]            # (cg_out, cg_in)
                contrib = jnp.matmul(wf_g, tap, precision=hp)   # (Cout, cg_in)
                shift_w[s] = shift_w[s].at[:, c0:c0 + cg].add(contrib)
        c0 += cg
    wshift = jnp.stack([shift_w[s] for s in SHIFTS], axis=0)    # (NSHIFT, Cout, Cin)

    # 0/1 validity masks per shift, tiled across the b_tile images of a grid step.
    hh, ww = jnp.meshgrid(jnp.arange(H), jnp.arange(W), indexing="ij")
    masks = []
    for (dh, dw) in SHIFTS:
        ok = ((hh + dh >= 0) & (hh + dh < H) & (ww + dw >= 0) & (ww + dw < W))
        m = ok.astype(jnp.float32).reshape(1, HW)
        masks.append(jnp.tile(m, (1, b_tile)))
    masks = jnp.stack(masks, axis=0)                  # (NSHIFT, 1, b_tile*HW)

    return misc, wshift, masks


# --------------------------------- wrapper -----------------------------------------
def mdc_block(x_nchw, params, b_tile=None):
    N = x_nchw.shape[0]
    if b_tile is None:
        # Fewer, larger grid steps amortize the ~0.35us/step pipeline overhead
        # (v5e/v6e, single TC).  On v7x pass a smaller b_tile so the "parallel"
        # batch axis has >= 2 steps and both TensorCores are used.
        b_tile = math.gcd(N, 4)
    assert N % b_tile == 0, "batch must be divisible by b_tile"

    x = x_nchw.reshape(N, IN_CH, HW)                  # free reshape, stays NCHW
    misc, wshift, masks = prepare_operands(params, b_tile)

    out = pl.pallas_call(
        mdc_kernel,
        out_shape=jax.ShapeDtypeStruct((N, OUT_CH, HW), jnp.float32),
        grid_spec=pltpu.PrefetchScalarGridSpec(
            num_scalar_prefetch=0,
            grid=(N // b_tile,),
            in_specs=[
                pl.BlockSpec((b_tile, IN_CH, HW), lambda n: (n, 0, 0)),
                pl.BlockSpec((MISC_R, MISC_C), lambda n: (0, 0)),
                pl.BlockSpec((NSHIFT, OUT_CH, IN_CH), lambda n: (0, 0, 0)),
                pl.BlockSpec((NSHIFT, 1, b_tile * HW), lambda n: (0, 0, 0)),
            ],
            out_specs=pl.BlockSpec((b_tile, OUT_CH, HW), lambda n: (n, 0, 0)),
        ),
        compiler_params=pltpu.CompilerParams(dimension_semantics=("parallel",)),
    )(x, misc, wshift, masks)
    return out.reshape(N, OUT_CH, H, W)


# ------------------------- deterministic parameter init ----------------------------
def init_params(key):
    ks = jax.random.split(key, 16)

    def w(k, shape, scale=0.2):
        return (jax.random.normal(k, shape, jnp.float32) * scale).astype(jnp.float32)

    def bn(k1, k2, k3, k4, c):
        gamma = 1.0 + 0.1 * jax.random.normal(k1, (c,), jnp.float32)
        beta = 0.1 * jax.random.normal(k2, (c,), jnp.float32)
        mean = 0.1 * jax.random.normal(k3, (c,), jnp.float32)
        var = 1.0 + 0.1 * jax.random.uniform(k4, (c,), jnp.float32)
        return gamma, beta, mean, var

    w_pre = w(ks[0], (IN_CH, IN_CH))                          # Conv2d(Cin,Cin,1) OI
    g_pre, be_pre, m_pre, v_pre = bn(ks[1], ks[2], ks[3], ks[4], IN_CH)
    wgs = [w(ks[5 + g], (SPLIT[g], SPLIT[g], KERNELS[g], KERNELS[g]))   # OIHW
           for g in range(3)]
    w_fus = w(ks[8], (OUT_CH, IN_CH))                         # Conv2d(Cin,Cout,1) OI
    g_fus, be_fus, m_fus, v_fus = bn(ks[9], ks[10], ks[11], ks[12], OUT_CH)

    return (w_pre, g_pre, be_pre, m_pre, v_pre,
            wgs[0], wgs[1], wgs[2],
            w_fus, g_fus, be_fus, m_fus, v_fus)


# ---------------------------- pure-JAX reference ------------------------------------
def reference(x_nchw, params):
    (w_pre, g_pre, be_pre, m_pre, v_pre,
     wg0, wg1, wg2,
     w_fus, g_fus, be_fus, m_fus, v_fus) = params
    hp = jax.lax.Precision.HIGHEST

    def bn(x, g, b, m, v):
        s = g / jnp.sqrt(v + BN_EPS)
        return x * s[None, :, None, None] + (b - m * s)[None, :, None, None]

    def conv(x, wt, d=1, p=0):
        return jax.lax.conv_general_dilated(
            x, wt, window_strides=(1, 1), padding=[(p, p), (p, p)],
            rhs_dilation=(d, d),
            dimension_numbers=("NCHW", "OIHW", "NCHW"), precision=hp)

    t = conv(x_nchw, w_pre[:, :, None, None])
    t = jnp.clip(bn(t, g_pre, be_pre, m_pre, v_pre), 0.0, 6.0)

    parts, c0 = [], 0
    wgs = [wg0, wg1, wg2]
    for g in range(3):
        cg = SPLIT[g]
        parts.append(conv(t[:, c0:c0 + cg], wgs[g], d=DILATIONS[g], p=PADDINGS[g]))
        c0 += cg
    cat = jnp.concatenate(parts, axis=1)
    out = conv(cat, w_fus[:, :, None, None])
    return jnp.clip(bn(out, g_fus, be_fus, m_fus, v_fus), 0.0, 6.0)


# --------------------------------------- main ---------------------------------------
if __name__ == "__main__":
    key = jax.random.PRNGKey(0)
    kx, kp = jax.random.split(key)

    x = jax.random.normal(kx, (2, IN_CH, H, W), jnp.float32)   # PyTorch NCHW layout
    params = init_params(kp)

    out = jax.block_until_ready(mdc_block(x, params))
    ref = jax.block_until_ready(reference(x, params))

    assert out.shape == (2, OUT_CH, H, W)
    max_err = float(jnp.max(jnp.abs(out - ref)))
    assert jnp.allclose(out, ref, atol=2e-2, rtol=2e-2), max_err

    print("KERNEL_OK")
</pallas_src>

<mosaic_0001>
module attributes {stable_mosaic.version = 11 : i64} {
  func.func @mdc_kernel(%arg0: i32, %arg1: memref<2x6x256xf32, #tpu.memory_space<vmem>>, %arg2: memref<8x8xf32, #tpu.memory_space<vmem>>, %arg3: memref<17x8x6xf32, #tpu.memory_space<vmem>>, %arg4: memref<17x1x512xf32, #tpu.memory_space<vmem>>, %arg5: memref<2x8x256xf32, #tpu.memory_space<vmem>>) attributes {dimension_semantics = [#tpu.dimension_semantics<parallel>], iteration_bounds = array<i64: 1>, scalar_prefetch = 0 : i64, scratch_operands = 0 : i64, tpu.core_type = #tpu.core_type<tc>, window_params = [{transform_indices = @transform_0, window_bounds = array<i64: 2, 6, 256>}, {pipeline_mode = #tpu.pipeline_mode<synchronous>, transform_indices = @transform_1, window_bounds = array<i64: 8, 8>}, {pipeline_mode = #tpu.pipeline_mode<synchronous>, transform_indices = @transform_2, window_bounds = array<i64: 17, 8, 6>}, {pipeline_mode = #tpu.pipeline_mode<synchronous>, transform_indices = @transform_3, window_bounds = array<i64: 17, 1, 512>}, {transform_indices = @transform_4, window_bounds = array<i64: 2, 8, 256>}]} {
    %c0 = arith.constant 0 : index
    %c0_0 = arith.constant 0 : index
    %0 = vector.load %arg2[%c0, %c0_0] : memref<8x8xf32, #tpu.memory_space<vmem>>, vector<8x8xf32>
    %1 = vector.extract_strided_slice %0 {offsets = [0, 0], sizes = [6, 6], strides = [1, 1]} : vector<8x8xf32> to vector<6x6xf32>
    %2 = vector.extract_strided_slice %0 {offsets = [0, 6], sizes = [6, 1], strides = [1, 1]} : vector<8x8xf32> to vector<6x1xf32>
    %3 = vector.extract_strided_slice %0 {offsets = [0, 7], sizes = [8, 1], strides = [1, 1]} : vector<8x8xf32> to vector<8x1xf32>
    %c0_1 = arith.constant 0 : index
    %c0_2 = arith.constant 0 : index
    %c0_3 = arith.constant 0 : index
    %4 = vector.load %arg1[%c0_1, %c0_2, %c0_3] : memref<2x6x256xf32, #tpu.memory_space<vmem>>, vector<1x6x256xf32>
    %5 = vector.shape_cast %4 : vector<1x6x256xf32> to vector<6x256xf32>
    %c1 = arith.constant 1 : index
    %c0_4 = arith.constant 0 : index
    %c0_5 = arith.constant 0 : index
    %6 = vector.load %arg1[%c1, %c0_4, %c0_5] : memref<2x6x256xf32, #tpu.memory_space<vmem>>, vector<1x6x256xf32>
    %7 = vector.shape_cast %6 : vector<1x6x256xf32> to vector<6x256xf32>
    %8 = tpu.concatenate %5, %7 in 1 : vector<6x256xf32>, vector<6x256xf32> -> vector<6x512xf32>
    %cst = arith.constant dense<0.000000e+00> : vector<6x512xf32>
    %9 = tpu.matmul %1, %8, %cst {dimension_numbers = #tpu.dot_dimension_numbers<[1], [0], [0], [1], [0, 0, 1, 1], [], []>} : vector<6x6xf32>, vector<6x512xf32>, vector<6x512xf32> -> vector<6x512xf32>
    %10 = vector.broadcast %2 : vector<6x1xf32> to vector<6x512xf32>
    %11 = arith.addf %9, %10 : vector<6x512xf32>
    %cst_6 = arith.constant 0.000000e+00 : f32
    %cst_7 = arith.constant 6.000000e+00 : f32
    %12 = vector.broadcast %cst_6 : f32 to vector<6x512xf32>
    %13 = arith.maximumf %12, %11 : vector<6x512xf32>
    %14 = vector.broadcast %cst_7 : f32 to vector<6x512xf32>
    %15 = arith.minimumf %14, %13 : vector<6x512xf32>
    %cst_8 = arith.constant 0.000000e+00 : f32
    %16 = vector.broadcast %cst_8 : f32 to vector<8x512xf32>
    %c0_9 = arith.constant 0 : index
    %c0_10 = arith.constant 0 : index
    %c0_11 = arith.constant 0 : index
    %17 = vector.load %arg3[%c0_9, %c0_10, %c0_11] : memref<17x8x6xf32, #tpu.memory_space<vmem>>, vector<1x8x6xf32>
    %18 = vector.shape_cast %17 : vector<1x8x6xf32> to vector<8x6xf32>
    %cst_12 = arith.constant dense<0.000000e+00> : vector<8x512xf32>
    %19 = tpu.matmul %18, %15, %cst_12 {dimension_numbers = #tpu.dot_dimension_numbers<[1], [0], [0], [1], [0, 0, 1, 1], [], []>} : vector<8x6xf32>, vector<6x512xf32>, vector<8x512xf32> -> vector<8x512xf32>
    %20 = arith.addf %16, %19 : vector<8x512xf32>
    %c1_13 = arith.constant 1 : index
    %c0_14 = arith.constant 0 : index
    %c0_15 = arith.constant 0 : index
    %21 = vector.load %arg3[%c1_13, %c0_14, %c0_15] : memref<17x8x6xf32, #tpu.memory_space<vmem>>, vector<1x8x6xf32>
    %22 = vector.shape_cast %21 : vector<1x8x6xf32> to vector<8x6xf32>
    %c17_i32 = arith.constant 17 : i32
    %23 = tpu.dynamic_rotate %15 by %c17_i32 dim 1 : vector<6x512xf32>, i32 -> vector<6x512xf32>
    %c1_16 = arith.constant 1 : index
    %c0_17 = arith.constant 0 : index
    %c0_18 = arith.constant 0 : index
    %24 = vector.load %arg4[%c1_16, %c0_17, %c0_18] : memref<17x1x512xf32, #tpu.memory_space<vmem>>, vector<1x1x512xf32>
    %25 = vector.shape_cast %24 : vector<1x1x512xf32> to vector<1x512xf32>
    %26 = vector.broadcast %25 : vector<1x512xf32> to vector<6x512xf32>
    %27 = arith.mulf %23, %26 : vector<6x512xf32>
    %cst_19 = arith.constant dense<0.000000e+00> : vector<8x512xf32>
    %28 = tpu.matmul %22, %27, %cst_19 {dimension_numbers = #tpu.dot_dimension_numbers<[1], [0], [0], [1], [0, 0, 1, 1], [], []>} : vector<8x6xf32>, vector<6x512xf32>, vector<8x512xf32> -> vector<8x512xf32>
    %29 = arith.addf %20, %28 : vector<8x512xf32>
    %c2 = arith.constant 2 : index
    %c0_20 = arith.constant 0 : index
    %c0_21 = arith.constant 0 : index
    %30 = vector.load %arg3[%c2, %c0_20, %c0_21] : memref<17x8x6xf32, #tpu.memory_space<vmem>>, vector<1x8x6xf32>
    %31 = vector.shape_cast %30 : vector<1x8x6xf32> to vector<8x6xf32>
    %c16_i32 = arith.constant 16 : i32
    %32 = tpu.dynamic_rotate %15 by %c16_i32 dim 1 : vector<6x512xf32>, i32 -> vector<6x512xf32>
    %c2_22 = arith.constant 2 : index
    %c0_23 = arith.constant 0 : index
    %c0_24 = arith.constant 0 : index
    %33 = vector.load %arg4[%c2_22, %c0_23, %c0_24] : memref<17x1x512xf32, #tpu.memory_space<vmem>>, vector<1x1x512xf32>
    %34 = vector.shape_cast %33 : vector<1x1x512xf32> to vector<1x512xf32>
    %35 = vector.broadcast %34 : vector<1x512xf32> to vector<6x512xf32>
    %36 = arith.mulf %32, %35 : vector<6x512xf32>
    %cst_25 = arith.constant dense<0.000000e+00> : vector<8x512xf32>
    %37 = tpu.matmul %31, %36, %cst_25 {dimension_numbers = #tpu.dot_dimension_numbers<[1], [0], [0], [1], [0, 0, 1, 1], [], []>} : vector<8x6xf32>, vector<6x512xf32>, vector<8x512xf32> -> vector<8x512xf32>
    %38 = arith.addf %29, %37 : vector<8x512xf32>
    %c3 = arith.constant 3 : index
    %c0_26 = arith.constant 0 : index
    %c0_27 = arith.constant 0 : index
    %39 = vector.load %arg3[%c3, %c0_26, %c0_27] : memref<17x8x6xf32, #tpu.memory_space<vmem>>, vector<1x8x6xf32>
    %40 = vector.shape_cast %39 : vector<1x8x6xf32> to vector<8x6xf32>
    %c15_i32 = arith.constant 15 : i32
    %41 = tpu.dynamic_rotate %15 by %c15_i32 dim 1 : vector<6x512xf32>, i32 -> vector<6x512xf32>
    %c3_28 = arith.constant 3 : index
    %c0_29 = arith.constant 0 : index
    %c0_30 = arith.constant 0 : index
    %42 = vector.load %arg4[%c3_28, %c0_29, %c0_30] : memref<17x1x512xf32, #tpu.memory_space<vmem>>, vector<1x1x512xf32>
    %43 = vector.shape_cast %42 : vector<1x1x512xf32> to vector<1x512xf32>
    %44 = vector.broadcast %43 : vector<1x512xf32> to vector<6x512xf32>
    %45 = arith.mulf %41, %44 : vector<6x512xf32>
    %cst_31 = arith.constant dense<0.000000e+00> : vector<8x512xf32>
    %46 = tpu.matmul %40, %45, %cst_31 {dimension_numbers = #tpu.dot_dimension_numbers<[1], [0], [0], [1], [0, 0, 1, 1], [], []>} : vector<8x6xf32>, vector<6x512xf32>, vector<8x512xf32> -> vector<8x512xf32>
    %47 = arith.addf %38, %46 : vector<8x512xf32>
    %c4 = arith.constant 4 : index
    %c0_32 = arith.constant 0 : index
    %c0_33 = arith.constant 0 : index
    %48 = vector.load %arg3[%c4, %c0_32, %c0_33] : memref<17x8x6xf32, #tpu.memory_space<vmem>>, vector<1x8x6xf32>
    %49 = vector.shape_cast %48 : vector<1x8x6xf32> to vector<8x6xf32>
    %c1_i32 = arith.constant 1 : i32
    %50 = tpu.dynamic_rotate %15 by %c1_i32 dim 1 : vector<6x512xf32>, i32 -> vector<6x512xf32>
    %c4_34 = arith.constant 4 : index
    %c0_35 = arith.constant 0 : index
    %c0_36 = arith.constant 0 : index
    %51 = vector.load %arg4[%c4_34, %c0_35, %c0_36] : memref<17x1x512xf32, #tpu.memory_space<vmem>>, vector<1x1x512xf32>
    %52 = vector.shape_cast %51 : vector<1x1x512xf32> to vector<1x512xf32>
    %53 = vector.broadcast %52 : vector<1x512xf32> to vector<6x512xf32>
    %54 = arith.mulf %50, %53 : vector<6x512xf32>
    %cst_37 = arith.constant dense<0.000000e+00> : vector<8x512xf32>
    %55 = tpu.matmul %49, %54, %cst_37 {dimension_numbers = #tpu.dot_dimension_numbers<[1], [0], [0], [1], [0, 0, 1, 1], [], []>} : vector<8x6xf32>, vector<6x512xf32>, vector<8x512xf32> -> vector<8x512xf32>
    %56 = arith.addf %47, %55 : vector<8x512xf32>
    %c5 = arith.constant 5 : index
    %c0_38 = arith.constant 0 : index
    %c0_39 = arith.constant 0 : index
    %57 = vector.load %arg3[%c5, %c0_38, %c0_39] : memref<17x8x6xf32, #tpu.memory_space<vmem>>, vector<1x8x6xf32>
    %58 = vector.shape_cast %57 : vector<1x8x6xf32> to vector<8x6xf32>
    %c511_i32 = arith.constant 511 : i32
    %59 = tpu.dynamic_rotate %15 by %c511_i32 dim 1 : vector<6x512xf32>, i32 -> vector<6x512xf32>
    %c5_40 = arith.constant 5 : index
    %c0_41 = arith.constant 0 : index
    %c0_42 = arith.constant 0 : index
    %60 = vector.load %arg4[%c5_40, %c0_41, %c0_42] : memref<17x1x512xf32, #tpu.memory_space<vmem>>, vector<1x1x512xf32>
    %61 = vector.shape_cast %60 : vector<1x1x512xf32> to vector<1x512xf32>
    %62 = vector.broadcast %61 : vector<1x512xf32> to vector<6x512xf32>
    %63 = arith.mulf %59, %62 : vector<6x512xf32>
    %cst_43 = arith.constant dense<0.000000e+00> : vector<8x512xf32>
    %64 = tpu.matmul %58, %63, %cst_43 {dimension_numbers = #tpu.dot_dimension_numbers<[1], [0], [0], [1], [0, 0, 1, 1], [], []>} : vector<8x6xf32>, vector<6x512xf32>, vector<8x512xf32> -> vector<8x512xf32>
    %65 = arith.addf %56, %64 : vector<8x512xf32>
    %c6 = arith.constant 6 : index
    %c0_44 = arith.constant 0 : index
    %c0_45 = arith.constant 0 : index
    %66 = vector.load %arg3[%c6, %c0_44, %c0_45] : memref<17x8x6xf32, #tpu.memory_space<vmem>>, vector<1x8x6xf32>
    %67 = vector.shape_cast %66 : vector<1x8x6xf32> to vector<8x6xf32>
    %c497_i32 = arith.constant 497 : i32
    %68 = tpu.dynamic_rotate %15 by %c497_i32 dim 1 : vector<6x512xf32>, i32 -> vector<6x512xf32>
    %c6_46 = arith.constant 6 : index
    %c0_47 = arith.constant 0 : index
    %c0_48 = arith.constant 0 : index
    %69 = vector.load %arg4[%c6_46, %c0_47, %c0_48] : memref<17x1x512xf32, #tpu.memory_space<vmem>>, vector<1x1x512xf32>
    %70 = vector.shape_cast %69 : vector<1x1x512xf32> to vector<1x512xf32>
    %71 = vector.broadcast %70 : vector<1x512xf32> to vector<6x512xf32>
    %72 = arith.mulf %68, %71 : vector<6x512xf32>
    %cst_49 = arith.constant dense<0.000000e+00> : vector<8x512xf32>
    %73 = tpu.matmul %67, %72, %cst_49 {dimension_numbers = #tpu.dot_dimension_numbers<[1], [0], [0], [1], [0, 0, 1, 1], [], []>} : vector<8x6xf32>, vector<6x512xf32>, vector<8x512xf32> -> vector<8x512xf32>
    %74 = arith.addf %65, %73 : vector<8x512xf32>
    %c7 = arith.constant 7 : index
    %c0_50 = arith.constant 0 : index
    %c0_51 = arith.constant 0 : index
    %75 = vector.load %arg3[%c7, %c0_50, %c0_51] : memref<17x8x6xf32, #tpu.memory_space<vmem>>, vector<1x8x6xf32>
    %76 = vector.shape_cast %75 : vector<1x8x6xf32> to vector<8x6xf32>
    %c496_i32 = arith.constant 496 : i32
    %77 = tpu.dynamic_rotate %15 by %c496_i32 dim 1 : vector<6x512xf32>, i32 -> vector<6x512xf32>
    %c7_52 = arith.constant 7 : index
    %c0_53 = arith.constant 0 : index
    %c0_54 = arith.constant 0 : index
    %78 = vector.load %arg4[%c7_52, %c0_53, %c0_54] : memref<17x1x512xf32, #tpu.memory_space<vmem>>, vector<1x1x512xf32>
    %79 = vector.shape_cast %78 : vector<1x1x512xf32> to vector<1x512xf32>
    %80 = vector.broadcast %79 : vector<1x512xf32> to vector<6x512xf32>
    %81 = arith.mulf %77, %80 : vector<6x512xf32>
    %cst_55 = arith.constant dense<0.000000e+00> : vector<8x512xf32>
    %82 = tpu.matmul %76, %81, %cst_55 {dimension_numbers = #tpu.dot_dimension_numbers<[1], [0], [0], [1], [0, 0, 1, 1], [], []>} : vector<8x6xf32>, vector<6x512xf32>, vector<8x512xf32> -> vector<8x512xf32>
    %83 = arith.addf %74, %82 : vector<8x512xf32>
    %c8 = arith.constant 8 : index
    %c0_56 = arith.constant 0 : index
    %c0_57 = arith.constant 0 : index
    %84 = vector.load %arg3[%c8, %c0_56, %c0_57] : memref<17x8x6xf32, #tpu.memory_space<vmem>>, vector<1x8x6xf32>
    %85 = vector.shape_cast %84 : vector<1x8x6xf32> to vector<8x6xf32>
    %c495_i32 = arith.constant 495 : i32
    %86 = tpu.dynamic_rotate %15 by %c495_i32 dim 1 : vector<6x512xf32>, i32 -> vector<6x512xf32>
    %c8_58 = arith.constant 8 : index
    %c0_59 = arith.constant 0 : index
    %c0_60 = arith.constant 0 : index
    %87 = vector.load %arg4[%c8_58, %c0_59, %c0_60] : memref<17x1x512xf32, #tpu.memory_space<vmem>>, vector<1x1x512xf32>
    %88 = vector.shape_cast %87 : vector<1x1x512xf32> to vector<1x512xf32>
    %89 = vector.broadcast %88 : vector<1x512xf32> to vector<6x512xf32>
    %90 = arith.mulf %86, %89 : vector<6x512xf32>
    %cst_61 = arith.constant dense<0.000000e+00> : vector<8x512xf32>
    %91 = tpu.matmul %85, %90, %cst_61 {dimension_numbers = #tpu.dot_dimension_numbers<[1], [0], [0], [1], [0, 0, 1, 1], [], []>} : vector<8x6xf32>, vector<6x512xf32>, vector<8x512xf32> -> vector<8x512xf32>
    %92 = arith.addf %83, %91 : vector<8x512xf32>
    %c9 = arith.constant 9 : index
    %c0_62 = arith.constant 0 : index
    %c0_63 = arith.constant 0 : index
    %93 = vector.load %arg3[%c9, %c0_62, %c0_63] : memref<17x8x6xf32, #tpu.memory_space<vmem>>, vector<1x8x6xf32>
    %94 = vector.shape_cast %93 : vector<1x8x6xf32> to vector<8x6xf32>
    %c34_i32 = arith.constant 34 : i32
    %95 = tpu.dynamic_rotate %15 by %c34_i32 dim 1 : vector<6x512xf32>, i32 -> vector<6x512xf32>
    %c9_64 = arith.constant 9 : index
    %c0_65 = arith.constant 0 : index
    %c0_66 = arith.constant 0 : index
    %96 = vector.load %arg4[%c9_64, %c0_65, %c0_66] : memref<17x1x512xf32, #tpu.memory_space<vmem>>, vector<1x1x512xf32>
    %97 = vector.shape_cast %96 : vector<1x1x512xf32> to vector<1x512xf32>
    %98 = vector.broadcast %97 : vector<1x512xf32> to vector<6x512xf32>
    %99 = arith.mulf %95, %98 : vector<6x512xf32>
    %cst_67 = arith.constant dense<0.000000e+00> : vector<8x512xf32>
    %100 = tpu.matmul %94, %99, %cst_67 {dimension_numbers = #tpu.dot_dimension_numbers<[1], [0], [0], [1], [0, 0, 1, 1], [], []>} : vector<8x6xf32>, vector<6x512xf32>, vector<8x512xf32> -> vector<8x512xf32>
    %101 = arith.addf %92, %100 : vector<8x512xf32>
    %c10 = arith.constant 10 : index
    %c0_68 = arith.constant 0 : index
    %c0_69 = arith.constant 0 : index
    %102 = vector.load %arg3[%c10, %c0_68, %c0_69] : memref<17x8x6xf32, #tpu.memory_space<vmem>>, vector<1x8x6xf32>
    %103 = vector.shape_cast %102 : vector<1x8x6xf32> to vector<8x6xf32>
    %c32_i32 = arith.constant 32 : i32
    %104 = tpu.dynamic_rotate %15 by %c32_i32 dim 1 : vector<6x512xf32>, i32 -> vector<6x512xf32>
    %c10_70 = arith.constant 10 : index
    %c0_71 = arith.constant 0 : index
    %c0_72 = arith.constant 0 : index
    %105 = vector.load %arg4[%c10_70, %c0_71, %c0_72] : memref<17x1x512xf32, #tpu.memory_space<vmem>>, vector<1x1x512xf32>
    %106 = vector.shape_cast %105 : vector<1x1x512xf32> to vector<1x512xf32>
    %107 = vector.broadcast %106 : vector<1x512xf32> to vector<6x512xf32>
    %108 = arith.mulf %104, %107 : vector<6x512xf32>
    %cst_73 = arith.constant dense<0.000000e+00> : vector<8x512xf32>
    %109 = tpu.matmul %103, %108, %cst_73 {dimension_numbers = #tpu.dot_dimension_numbers<[1], [0], [0], [1], [0, 0, 1, 1], [], []>} : vector<8x6xf32>, vector<6x512xf32>, vector<8x512xf32> -> vector<8x512xf32>
    %110 = arith.addf %101, %109 : vector<8x512xf32>
    %c11 = arith.constant 11 : index
    %c0_74 = arith.constant 0 : index
    %c0_75 = arith.constant 0 : index
    %111 = vector.load %arg3[%c11, %c0_74, %c0_75] : memref<17x8x6xf32, #tpu.memory_space<vmem>>, vector<1x8x6xf32>
    %112 = vector.shape_cast %111 : vector<1x8x6xf32> to vector<8x6xf32>
    %c30_i32 = arith.constant 30 : i32
    %113 = tpu.dynamic_rotate %15 by %c30_i32 dim 1 : vector<6x512xf32>, i32 -> vector<6x512xf32>
    %c11_76 = arith.constant 11 : index
    %c0_77 = arith.constant 0 : index
    %c0_78 = arith.constant 0 : index
    %114 = vector.load %arg4[%c11_76, %c0_77, %c0_78] : memref<17x1x512xf32, #tpu.memory_space<vmem>>, vector<1x1x512xf32>
    %115 = vector.shape_cast %114 : vector<1x1x512xf32> to vector<1x512xf32>
    %116 = vector.broadcast %115 : vector<1x512xf32> to vector<6x512xf32>
    %117 = arith.mulf %113, %116 : vector<6x512xf32>
    %cst_79 = arith.constant dense<0.000000e+00> : vector<8x512xf32>
    %118 = tpu.matmul %112, %117, %cst_79 {dimension_numbers = #tpu.dot_dimension_numbers<[1], [0], [0], [1], [0, 0, 1, 1], [], []>} : vector<8x6xf32>, vector<6x512xf32>, vector<8x512xf32> -> vector<8x512xf32>
    %119 = arith.addf %110, %118 : vector<8x512xf32>
    %c12 = arith.constant 12 : index
    %c0_80 = arith.constant 0 : index
    %c0_81 = arith.constant 0 : index
    %120 = vector.load %arg3[%c12, %c0_80, %c0_81] : memref<17x8x6xf32, #tpu.memory_space<vmem>>, vector<1x8x6xf32>
    %121 = vector.shape_cast %120 : vector<1x8x6xf32> to vector<8x6xf32>
    %c2_i32 = arith.constant 2 : i32
    %122 = tpu.dynamic_rotate %15 by %c2_i32 dim 1 : vector<6x512xf32>, i32 -> vector<6x512xf32>
    %c12_82 = arith.constant 12 : index
    %c0_83 = arith.constant 0 : index
    %c0_84 = arith.constant 0 : index
    %123 = vector.load %arg4[%c12_82, %c0_83, %c0_84] : memref<17x1x512xf32, #tpu.memory_space<vmem>>, vector<1x1x512xf32>
    %124 = vector.shape_cast %123 : vector<1x1x512xf32> to vector<1x512xf32>
    %125 = vector.broadcast %124 : vector<1x512xf32> to vector<6x512xf32>
    %126 = arith.mulf %122, %125 : vector<6x512xf32>
    %cst_85 = arith.constant dense<0.000000e+00> : vector<8x512xf32>
    %127 = tpu.matmul %121, %126, %cst_85 {dimension_numbers = #tpu.dot_dimension_numbers<[1], [0], [0], [1], [0, 0, 1, 1], [], []>} : vector<8x6xf32>, vector<6x512xf32>, vector<8x512xf32> -> vector<8x512xf32>
    %128 = arith.addf %119, %127 : vector<8x512xf32>
    %c13 = arith.constant 13 : index
    %c0_86 = arith.constant 0 : index
    %c0_87 = arith.constant 0 : index
    %129 = vector.load %arg3[%c13, %c0_86, %c0_87] : memref<17x8x6xf32, #tpu.memory_space<vmem>>, vector<1x8x6xf32>
    %130 = vector.shape_cast %129 : vector<1x8x6xf32> to vector<8x6xf32>
    %c510_i32 = arith.constant 510 : i32
    %131 = tpu.dynamic_rotate %15 by %c510_i32 dim 1 : vector<6x512xf32>, i32 -> vector<6x512xf32>
    %c13_88 = arith.constant 13 : index
    %c0_89 = arith.constant 0 : index
    %c0_90 = arith.constant 0 : index
    %132 = vector.load %arg4[%c13_88, %c0_89, %c0_90] : memref<17x1x512xf32, #tpu.memory_space<vmem>>, vector<1x1x512xf32>
    %133 = vector.shape_cast %132 : vector<1x1x512xf32> to vector<1x512xf32>
    %134 = vector.broadcast %133 : vector<1x512xf32> to vector<6x512xf32>
    %135 = arith.mulf %131, %134 : vector<6x512xf32>
    %cst_91 = arith.constant dense<0.000000e+00> : vector<8x512xf32>
    %136 = tpu.matmul %130, %135, %cst_91 {dimension_numbers = #tpu.dot_dimension_numbers<[1], [0], [0], [1], [0, 0, 1, 1], [], []>} : vector<8x6xf32>, vector<6x512xf32>, vector<8x512xf32> -> vector<8x512xf32>
    %137 = arith.addf %128, %136 : vector<8x512xf32>
    %c14 = arith.constant 14 : index
    %c0_92 = arith.constant 0 : index
    %c0_93 = arith.constant 0 : index
    %138 = vector.load %arg3[%c14, %c0_92, %c0_93] : memref<17x8x6xf32, #tpu.memory_space<vmem>>, vector<1x8x6xf32>
    %139 = vector.shape_cast %138 : vector<1x8x6xf32> to vector<8x6xf32>
    %c482_i32 = arith.constant 482 : i32
    %140 = tpu.dynamic_rotate %15 by %c482_i32 dim 1 : vector<6x512xf32>, i32 -> vector<6x512xf32>
    %c14_94 = arith.constant 14 : index
    %c0_95 = arith.constant 0 : index
    %c0_96 = arith.constant 0 : index
    %141 = vector.load %arg4[%c14_94, %c0_95, %c0_96] : memref<17x1x512xf32, #tpu.memory_space<vmem>>, vector<1x1x512xf32>
    %142 = vector.shape_cast %141 : vector<1x1x512xf32> to vector<1x512xf32>
    %143 = vector.broadcast %142 : vector<1x512xf32> to vector<6x512xf32>
    %144 = arith.mulf %140, %143 : vector<6x512xf32>
    %cst_97 = arith.constant dense<0.000000e+00> : vector<8x512xf32>
    %145 = tpu.matmul %139, %144, %cst_97 {dimension_numbers = #tpu.dot_dimension_numbers<[1], [0], [0], [1], [0, 0, 1, 1], [], []>} : vector<8x6xf32>, vector<6x512xf32>, vector<8x512xf32> -> vector<8x512xf32>
    %146 = arith.addf %137, %145 : vector<8x512xf32>
    %c15 = arith.constant 15 : index
    %c0_98 = arith.constant 0 : index
    %c0_99 = arith.constant 0 : index
    %147 = vector.load %arg3[%c15, %c0_98, %c0_99] : memref<17x8x6xf32, #tpu.memory_space<vmem>>, vector<1x8x6xf32>
    %148 = vector.shape_cast %147 : vector<1x8x6xf32> to vector<8x6xf32>
    %c480_i32 = arith.constant 480 : i32
    %149 = tpu.dynamic_rotate %15 by %c480_i32 dim 1 : vector<6x512xf32>, i32 -> vector<6x512xf32>
    %c15_100 = arith.constant 15 : index
    %c0_101 = arith.constant 0 : index
    %c0_102 = arith.constant 0 : index
    %150 = vector.load %arg4[%c15_100, %c0_101, %c0_102] : memref<17x1x512xf32, #tpu.memory_space<vmem>>, vector<1x1x512xf32>
    %151 = vector.shape_cast %150 : vector<1x1x512xf32> to vector<1x512xf32>
    %152 = vector.broadcast %151 : vector<1x512xf32> to vector<6x512xf32>
    %153 = arith.mulf %149, %152 : vector<6x512xf32>
    %cst_103 = arith.constant dense<0.000000e+00> : vector<8x512xf32>
    %154 = tpu.matmul %148, %153, %cst_103 {dimension_numbers = #tpu.dot_dimension_numbers<[1], [0], [0], [1], [0, 0, 1, 1], [], []>} : vector<8x6xf32>, vector<6x512xf32>, vector<8x512xf32> -> vector<8x512xf32>
    %155 = arith.addf %146, %154 : vector<8x512xf32>
    %c16 = arith.constant 16 : index
    %c0_104 = arith.constant 0 : index
    %c0_105 = arith.constant 0 : index
    %156 = vector.load %arg3[%c16, %c0_104, %c0_105] : memref<17x8x6xf32, #tpu.memory_space<vmem>>, vector<1x8x6xf32>
    %157 = vector.shape_cast %156 : vector<1x8x6xf32> to vector<8x6xf32>
    %c478_i32 = arith.constant 478 : i32
    %158 = tpu.dynamic_rotate %15 by %c478_i32 dim 1 : vector<6x512xf32>, i32 -> vector<6x512xf32>
    %c16_106 = arith.constant 16 : index
    %c0_107 = arith.constant 0 : index
    %c0_108 = arith.constant 0 : index
    %159 = vector.load %arg4[%c16_106, %c0_107, %c0_108] : memref<17x1x512xf32, #tpu.memory_space<vmem>>, vector<1x1x512xf32>
    %160 = vector.shape_cast %159 : vector<1x1x512xf32> to vector<1x512xf32>
    %161 = vector.broadcast %160 : vector<1x512xf32> to vector<6x512xf32>
    %162 = arith.mulf %158, %161 : vector<6x512xf32>
    %cst_109 = arith.constant dense<0.000000e+00> : vector<8x512xf32>
    %163 = tpu.matmul %157, %162, %cst_109 {dimension_numbers = #tpu.dot_dimension_numbers<[1], [0], [0], [1], [0, 0, 1, 1], [], []>} : vector<8x6xf32>, vector<6x512xf32>, vector<8x512xf32> -> vector<8x512xf32>
    %164 = arith.addf %155, %163 : vector<8x512xf32>
    %165 = vector.broadcast %3 : vector<8x1xf32> to vector<8x512xf32>
    %166 = arith.addf %164, %165 : vector<8x512xf32>
    %cst_110 = arith.constant 0.000000e+00 : f32
    %cst_111 = arith.constant 6.000000e+00 : f32
    %167 = vector.broadcast %cst_110 : f32 to vector<8x512xf32>
    %168 = arith.maximumf %167, %166 : vector<8x512xf32>
    %169 = vector.broadcast %cst_111 : f32 to vector<8x512xf32>
    %170 = arith.minimumf %169, %168 : vector<8x512xf32>
    %171 = vector.extract_strided_slice %170 {offsets = [0, 0], sizes = [8, 256], strides = [1, 1]} : vector<8x512xf32> to vector<8x256xf32>
    %c0_112 = arith.constant 0 : index
    %c0_113 = arith.constant 0 : index
    %c0_114 = arith.constant 0 : index
    %172 = vector.load %arg5[%c0_112, %c0_113, %c0_114] : memref<2x8x256xf32, #tpu.memory_space<vmem>>, vector<1x8x256xf32>
    %173 = vector.shape_cast %172 : vector<1x8x256xf32> to vector<8x256xf32>
    %174 = vector.shape_cast %171 : vector<8x256xf32> to vector<1x8x256xf32>
    tpu.vector_store %arg5[%c0_112, %c0_113, %c0_114], %174 {strides = array<i32>} : memref<2x8x256xf32, #tpu.memory_space<vmem>>, vector<1x8x256xf32>,
    %175 = vector.extract_strided_slice %170 {offsets = [0, 256], sizes = [8, 256], strides = [1, 1]} : vector<8x512xf32> to vector<8x256xf32>
    %c1_115 = arith.constant 1 : index
    %c0_116 = arith.constant 0 : index
    %c0_117 = arith.constant 0 : index
    %176 = vector.load %arg5[%c1_115, %c0_116, %c0_117] : memref<2x8x256xf32, #tpu.memory_space<vmem>>, vector<1x8x256xf32>
    %177 = vector.shape_cast %176 : vector<1x8x256xf32> to vector<8x256xf32>
    %178 = vector.shape_cast %175 : vector<8x256xf32> to vector<1x8x256xf32>
    tpu.vector_store %arg5[%c1_115, %c0_116, %c0_117], %178 {strides = array<i32>} : memref<2x8x256xf32, #tpu.memory_space<vmem>>, vector<1x8x256xf32>,
    return
  }
  func.func @transform_0(%arg0: i32) -> (i32, i32, i32) {
    %c0_i32 = arith.constant 0 : i32
    %c0_i32_0 = arith.constant 0 : i32
    %c0_i32_1 = arith.constant 0 : i32
    return %arg0, %c0_i32, %c0_i32_0 : i32, i32, i32
  }
  func.func @transform_1(%arg0: i32) -> (i32, i32) {
    %c0_i32 = arith.constant 0 : i32
    %c0_i32_0 = arith.constant 0 : i32
    %c0_i32_1 = arith.constant 0 : i32
    return %c0_i32, %c0_i32_0 : i32, i32
  }
  func.func @transform_2(%arg0: i32) -> (i32, i32, i32) {
    %c0_i32 = arith.constant 0 : i32
    %c0_i32_0 = arith.constant 0 : i32
    %c0_i32_1 = arith.constant 0 : i32
    %c0_i32_2 = arith.constant 0 : i32
    return %c0_i32, %c0_i32_0, %c0_i32_1 : i32, i32, i32
  }
  func.func @transform_3(%arg0: i32) -> (i32, i32, i32) {
    %c0_i32 = arith.constant 0 : i32
    %c0_i32_0 = arith.constant 0 : i32
    %c0_i32_1 = arith.constant 0 : i32
    %c0_i32_2 = arith.constant 0 : i32
    return %c0_i32, %c0_i32_0, %c0_i32_1 : i32, i32, i32
  }
  func.func @transform_4(%arg0: i32) -> (i32, i32, i32) {
    %c0_i32 = arith.constant 0 : i32
    %c0_i32_0 = arith.constant 0 : i32
    %c0_i32_1 = arith.constant 0 : i32
    return %arg0, %c0_i32, %c0_i32_0 : i32, i32, i32
  }
}

</mosaic_0001>

<llo_original>
// kernel: tpu_custom_call.1
$region0: #{tpu_custom_call.1}
  #allocation0 [shape = 'u32[]', space=smem, size = 0x4, offset = 0x4, fixed_abs, tag = 'smem constant byte address 0x4 - core index']
  #allocation1 [shape = 'u32[144,128]{1,0:T(1,128)}', space=vmem, size = 0x12000, scoped, tag = 'internal scratch']
  %s0 = inlined_call_operand.vmem [shape: f32[2,6,256], index: 0, kind: input, shape index: {}]
  %s1 = inlined_call_operand.vmem [shape: f32[8,8], index: 1, kind: input, shape index: {}]
  %s2 = inlined_call_operand.vmem [shape: f32[17,8,6], index: 2, kind: input, shape index: {}]
  %s3 = inlined_call_operand.vmem [shape: f32[17,1,512], index: 3, kind: input, shape index: {}]
  %s4 = inlined_call_operand.hbm [shape: f32[2,8,256], index: 4, kind: output, shape index: {}]
  %s5 = sld [smem:[#allocation0]]
  $region26: #{tpu_custom_call.1} parent=0
    _
  %s7 = ssub.s32 1, %s5
  %s8 = scalar_select 0, %s7, %s5
  $region1: #{tpu_custom_call.1} parent=0
    #allocation2 [shape = 'u8[16384]{0}', space=vmem, size = 0x4000, scoped, tag = 'output window, operand 0, single buffered']
    #allocation3 [shape = 's32[1]{0}', space=sflag, size = 0x4, scoped, tag = 'scoped memory for tpu_custom_call.1']
    %9 = vsyncpa [#allocation3], 0
    // Predicated region
    $region2: #{tpu_custom_call.1} parent=1 // pred_check
      _
    $region3: #{tpu_custom_call.1} parent=1 // pred_check_branch
      %11 = sbr.rel (0) target = $region5
    $region4: #{tpu_custom_call.1} parent=1 // pred_region
      _
    $region5: #{tpu_custom_call.1} parent=1 // pred_fallthru
      _
    // Predicated region
    $region6: #{tpu_custom_call.1} parent=1 // pred_check
      _
    $region7: #{tpu_custom_call.1} parent=1 // pred_check_branch
      %13 = sbr.rel (0) target = $region9
    $region8: #{tpu_custom_call.1} parent=1 // pred_region
      _
    $region9: #{tpu_custom_call.1} parent=1 // pred_fallthru
      _
    // Predicated region
    $region10: #{tpu_custom_call.1} parent=1 // pred_check
      _
    $region11: #{tpu_custom_call.1} parent=1 // pred_check_branch
      %15 = sbr.rel (0) target = $region13
    $region12: #{tpu_custom_call.1} parent=1 // pred_region
      _
    $region13: #{tpu_custom_call.1} parent=1 // pred_fallthru
      _
    // Predicated region
    $region14: #{tpu_custom_call.1} parent=1 // pred_check
      _
    $region15: #{tpu_custom_call.1} parent=1 // pred_check_branch
      %17 = sbr.rel (0) target = $region17
    $region16: #{tpu_custom_call.1} parent=1 // pred_region
      _
    $region17: #{tpu_custom_call.1} parent=1 // pred_fallthru
      _
    %v18 = vld [vmem:[%s1] sm:$0xff]
    %v19 = vld [vmem:[%s0] sm:$0x3f]
    %v20 = vld [vmem:[%s0 + $0x8] sm:$0x3f]
    %s21 = scalar_lea.vmem %s0, 16
    %v22 = vld [vmem:[%s21] sm:$0x3f]
    %v23 = vld [vmem:[%s21 + $0x8] sm:$0x3f]
    %25 = vset.pattern.permute.xlu0 6
    %26 = vperm.xlu0 %25, %v18
    %v27 = vpop.permute.xlu0 %26
    %vm29 = vcmask 48128
    %v30 = vsel %vm29, %v18, 0
    %vm32 = vcmask 1045504
    %v34 = vsel %vm32, %v19, 0
    %v37 = vsel %vm32, %v20, 0
    %v40 = vsel %vm32, %v22, 0
    %v43 = vsel %vm32, %v23, 0
    %45 = vmatprep.subr.mxu0 %v37
    %46 = vmatpush1.msra.mxu0 %v34
    %47 = vmatprep.subr.mxu0 0.0
    %48 = vmatpush1.msra.mxu0 0.0
    %49 = vmatprep.subr.mxu0 0.0
    %50 = vmatpush1.msra.mxu0 0.0
    %51 = vmatprep.subr.mxu0 0.0
    %52 = vmatpush1.msra.mxu0 0.0
    %53 = vmatprep.subr.mxu0 0.0
    %54 = vmatpush1.msra.mxu0 0.0
    %55 = vmatprep.subr.mxu0 0.0
    %56 = vmatpush1.msra.mxu0 0.0
    %57 = vmatprep.subr.mxu0 0.0
    %58 = vmatpush1.msra.mxu0 0.0
    %59 = vmatprep.subr.mxu0 0.0
    %60 = vmatpush1.msra.mxu0 0.0
    %61 = vmatprep.subr.mxu0 0.0
    %62 = vmatpush1.msra.mxu0 0.0
    %63 = vmatprep.subr.mxu0 0.0
    %64 = vmatpush1.msra.mxu0 0.0
    %65 = vmatprep.subr.mxu0 0.0
    %66 = vmatpush1.msra.mxu0 0.0
    %67 = vmatprep.subr.mxu0 0.0
    %68 = vmatpush1.msra.mxu0 0.0
    %69 = vmatprep.subr.mxu0 0.0
    %70 = vmatpush1.msra.mxu0 0.0
    %71 = vmatprep.subr.mxu0 0.0
    %72 = vmatpush1.msra.mxu0 0.0
    %73 = vmatprep.subr.mxu0 0.0
    %74 = vmatpush1.msra.mxu0 0.0
    %75 = vmatprep.subr.mxu0 0.0
    %76 = vmatpush1.msra.mxu0 0.0
    %77 = vmatprep.subr.mxu0 0.0
    %78 = vmatpush1.msra.mxu0 0.0
    %79 = vmatprep.subr.mxu0 0.0
    %80 = vmatpush1.msra.mxu0 0.0
    %81 = vmatprep.subr.mxu0 0.0
    %82 = vmatpush1.msra.mxu0 0.0
    %83 = vmatprep.subr.mxu0 0.0
    %84 = vmatpush1.msra.mxu0 0.0
    %85 = vmatprep.subr.mxu0 0.0
    %86 = vmatpush1.msra.mxu0 0.0
    %87 = vmatprep.subr.mxu0 0.0
    %88 = vmatpush1.msra.mxu0 0.0
    %89 = vmatprep.subr.mxu0 0.0
    %90 = vmatpush1.msra.mxu0 0.0
    %91 = vmatprep.subr.mxu0 0.0
    %92 = vmatpush1.msra.mxu0 0.0
    %93 = vmatprep.subr.mxu0 0.0
    %94 = vmatpush1.msra.mxu0 0.0
    %95 = vmatprep.subr.mxu0 0.0
    %96 = vmatpush1.msra.mxu0 0.0
    %97 = vmatprep.subr.mxu0 0.0
    %98 = vmatpush1.msra.mxu0 0.0
    %99 = vmatprep.subr.mxu0 0.0
    %100 = vmatpush1.msra.mxu0 0.0
    %101 = vmatprep.subr.mxu0 0.0
    %102 = vmatpush1.msra.mxu0 0.0
    %103 = vmatprep.subr.mxu0 0.0
    %104 = vmatpush1.msra.mxu0 0.0
    %105 = vmatprep.subr.mxu0 0.0
    %106 = vmatpush1.msra.mxu0 0.0
    %107 = vmatprep.subr.mxu0 0.0
    %108 = vmatpush1.msra.mxu0 0.0
    %109 = vmatprep.mubr.f32.mxu0 0.0
    %110 = vmatmul.mubr.f32.gmra.mrb[0].mxu0 %v30
    %v111 = vpop.f32.mrb[0].mxu0
    %v112 = vadd.f32 %v27, %v111
    %v113 = vpop.f32.mrb[0].mxu0
    %v114 = vadd.f32 %v27, %v113
    %115 = vdwg.mxu0
    %116 = vmatprep.subr.mxu0 %v43
    %117 = vmatpush1.msra.mxu0 %v40
    %118 = vmatprep.subr.mxu0 0.0
    %119 = vmatpush1.msra.mxu0 0.0
    %120 = vmatprep.subr.mxu0 0.0
    %121 = vmatpush1.msra.mxu0 0.0
    %122 = vmatprep.subr.mxu0 0.0
    %123 = vmatpush1.msra.mxu0 0.0
    %124 = vmatprep.subr.mxu0 0.0
    %125 = vmatpush1.msra.mxu0 0.0
    %126 = vmatprep.subr.mxu0 0.0
    %127 = vmatpush1.msra.mxu0 0.0
    %128 = vmatprep.subr.mxu0 0.0
    %129 = vmatpush1.msra.mxu0 0.0
    %130 = vmatprep.subr.mxu0 0.0
    %131 = vmatpush1.msra.mxu0 0.0
    %132 = vmatprep.subr.mxu0 0.0
    %133 = vmatpush1.msra.mxu0 0.0
    %134 = vmatprep.subr.mxu0 0.0
    %135 = vmatpush1.msra.mxu0 0.0
    %136 = vmatprep.subr.mxu0 0.0
    %137 = vmatpush1.msra.mxu0 0.0
    %138 = vmatprep.subr.mxu0 0.0
    %139 = vmatpush1.msra.mxu0 0.0
    %140 = vmatprep.subr.mxu0 0.0
    %141 = vmatpush1.msra.mxu0 0.0
    %142 = vmatprep.subr.mxu0 0.0
    %143 = vmatpush1.msra.mxu0 0.0
    %144 = vmatprep.subr.mxu0 0.0
    %145 = vmatpush1.msra.mxu0 0.0
    %146 = vmatprep.subr.mxu0 0.0
    %147 = vmatpush1.msra.mxu0 0.0
    %148 = vmatprep.subr.mxu0 0.0
    %149 = vmatpush1.msra.mxu0 0.0
    %150 = vmatprep.subr.mxu0 0.0
    %151 = vmatpush1.msra.mxu0 0.0
    %152 = vmatprep.subr.mxu0 0.0
    %153 = vmatpush1.msra.mxu0 0.0
    %154 = vmatprep.subr.mxu0 0.0
    %155 = vmatpush1.msra.mxu0 0.0
    %156 = vmatprep.subr.mxu0 0.0
    %157 = vmatpush1.msra.mxu0 0.0
    %158 = vmatprep.subr.mxu0 0.0
    %159 = vmatpush1.msra.mxu0 0.0
    %160 = vmatprep.subr.mxu0 0.0
    %161 = vmatpush1.msra.mxu0 0.0
    %162 = vmatprep.subr.mxu0 0.0
    %163 = vmatpush1.msra.mxu0 0.0
    %164 = vmatprep.subr.mxu0 0.0
    %165 = vmatpush1.msra.mxu0 0.0
    %166 = vmatprep.subr.mxu0 0.0
    %167 = vmatpush1.msra.mxu0 0.0
    %168 = vmatprep.subr.mxu0 0.0
    %169 = vmatpush1.msra.mxu0 0.0
    %170 = vmatprep.subr.mxu0 0.0
    %171 = vmatpush1.msra.mxu0 0.0
    %172 = vmatprep.subr.mxu0 0.0
    %173 = vmatpush1.msra.mxu0 0.0
    %174 = vmatprep.subr.mxu0 0.0
    %175 = vmatpush1.msra.mxu0 0.0
    %176 = vmatprep.subr.mxu0 0.0
    %177 = vmatpush1.msra.mxu0 0.0
    %178 = vmatprep.subr.mxu0 0.0
    %179 = vmatpush1.msra.mxu0 0.0
    %180 = vmatprep.mubr.f32.mxu0 0.0
    %181 = vmatmul.mubr.f32.gmra.mrb[0].mxu0 %v30
    %v182 = vpop.f32.mrb[0].mxu0
    %v183 = vadd.f32 %v27, %v182
    %v184 = vpop.f32.mrb[0].mxu0
    %v185 = vadd.f32 %v27, %v184
    %186 = vdwg.mxu0
    %v187 = vmax.f32 %v112, 0.0
    %v188 = vmax.f32 %v114, 0.0
    %v189 = vmax.f32 %v183, 0.0
    %v190 = vmax.f32 %v185, 0.0
    %v191 = vmin.f32 %v187, 6.0
    %v192 = vmin.f32 %v188, 6.0
    %v193 = vmin.f32 %v189, 6.0
    %v194 = vmin.f32 %v190, 6.0
    %v195 = vld [vmem:[%s2] sm:$0xff]
    %s196 = scalar_lea.vmem %s2, 8
    %v197 = vld [vmem:[%s196] sm:$0xff]
    %198 = vrot.lane.b32.xlu0 %v191, 17
    %v199 = vpop.permute.xlu0 %198
    %200 = vrot.lane.b32.xlu0 %v192, 17
    %v201 = vpop.permute.xlu0 %200
    %202 = vrot.lane.b32.xlu0 %v193, 17
    %v203 = vpop.permute.xlu0 %202
    %204 = vrot.lane.b32.xlu0 %v194, 17
    %v205 = vpop.permute.xlu0 %204
    %v206 = vlaneseq
    %v207 = vand.u32 %v206, 127
    %vm208 = vcmp.lt.s32.totalorder %v207, 17
    %v209 = vsel %vm208, %v203, %v205
    %v210 = vsel %vm208, %v201, %v203
    %v211 = vsel %vm208, %v199, %v201
    %v212 = vsel %vm208, %v205, %v199
    %s213 = scalar_lea.vmem %s3, 4
    %v214 = vld [vmem:[%s213] sm:$0xf]
    %v216 = vlaneseq
    %v217 = vshrl.u32 %v216, 7
    %v218 = vsub.s32 0, %v217
    %v219 = vrot.slane %v214, %v218
    %v220 = vlaneseq
    %v221 = vshrl.u32 %v220, 7
    %v222 = vsub.s32 1, %v221
    %v223 = vrot.slane %v214, %v222
    %v224 = vlaneseq
    %v225 = vshrl.u32 %v224, 7
    %v226 = vsub.s32 2, %v225
    %v227 = vrot.slane %v214, %v226
    %v228 = vlaneseq
    %v229 = vshrl.u32 %v228, 7
    %v230 = vsub.s32 3, %v229
    %v231 = vrot.slane %v214, %v230
    %v236 = vmul.f32 %v212, %v219
    %v237 = vmul.f32 %v211, %v223
    %v238 = vmul.f32 %v210, %v227
    %v239 = vmul.f32 %v209, %v231
    %v241 = vsel %vm29, %v197, 0
    %v244 = vsel %vm32, %v236, 0
    %v247 = vsel %vm32, %v237, 0
    %v250 = vsel %vm32, %v238, 0
    %v253 = vsel %vm32, %v239, 0
    %255 = vmatprep.subr.mxu0 %v247
    %256 = vmatpush1.msra.mxu0 %v244
    %257 = vmatprep.subr.mxu0 0.0
    %258 = vmatpush1.msra.mxu0 0.0
    %259 = vmatprep.subr.mxu0 0.0
    %260 = vmatpush1.msra.mxu0 0.0
    %261 = vmatprep.subr.mxu0 0.0
    %262 = vmatpush1.msra.mxu0 0.0
    %263 = vmatprep.subr.mxu0 0.0
    %264 = vmatpush1.msra.mxu0 0.0
    %265 = vmatprep.subr.mxu0 0.0
    %266 = vmatpush1.msra.mxu0 0.0
    %267 = vmatprep.subr.mxu0 0.0
    %268 = vmatpush1.msra.mxu0 0.0
    %269 = vmatprep.subr.mxu0 0.0
    %270 = vmatpush1.msra.mxu0 0.0
    %271 = vmatprep.subr.mxu0 0.0
    %272 = vmatpush1.msra.mxu0 0.0
    %273 = vmatprep.subr.mxu0 0.0
    %274 = vmatpush1.msra.mxu0 0.0
    %275 = vmatprep.subr.mxu0 0.0
    %276 = vmatpush1.msra.mxu0 0.0
    %277 = vmatprep.subr.mxu0 0.0
    %278 = vmatpush1.msra.mxu0 0.0
    %279 = vmatprep.subr.mxu0 0.0
    %280 = vmatpush1.msra.mxu0 0.0
    %281 = vmatprep.subr.mxu0 0.0
    %282 = vmatpush1.msra.mxu0 0.0
    %283 = vmatprep.subr.mxu0 0.0
    %284 = vmatpush1.msra.mxu0 0.0
    %285 = vmatprep.subr.mxu0 0.0
    %286 = vmatpush1.msra.mxu0 0.0
    %287 = vmatprep.subr.mxu0 0.0
    %288 = vmatpush1.msra.mxu0 0.0
    %289 = vmatprep.subr.mxu0 0.0
    %290 = vmatpush1.msra.mxu0 0.0
    %291 = vmatprep.subr.mxu0 0.0
    %292 = vmatpush1.msra.mxu0 0.0
    %293 = vmatprep.subr.mxu0 0.0
    %294 = vmatpush1.msra.mxu0 0.0
    %295 = vmatprep.subr.mxu0 0.0
    %296 = vmatpush1.msra.mxu0 0.0
    %297 = vmatprep.subr.mxu0 0.0
    %298 = vmatpush1.msra.mxu0 0.0
    %299 = vmatprep.subr.mxu0 0.0
    %300 = vmatpush1.msra.mxu0 0.0
    %301 = vmatprep.subr.mxu0 0.0
    %302 = vmatpush1.msra.mxu0 0.0
    %303 = vmatprep.subr.mxu0 0.0
    %304 = vmatpush1.msra.mxu0 0.0
    %305 = vmatprep.subr.mxu0 0.0
    %306 = vmatpush1.msra.mxu0 0.0
    %307 = vmatprep.subr.mxu0 0.0
    %308 = vmatpush1.msra.mxu0 0.0
    %309 = vmatprep.subr.mxu0 0.0
    %310 = vmatpush1.msra.mxu0 0.0
    %311 = vmatprep.subr.mxu0 0.0
    %312 = vmatpush1.msra.mxu0 0.0
    %313 = vmatprep.subr.mxu0 0.0
    %314 = vmatpush1.msra.mxu0 0.0
    %315 = vmatprep.subr.mxu0 0.0
    %316 = vmatpush1.msra.mxu0 0.0
    %317 = vmatprep.subr.mxu0 0.0
    %318 = vmatpush1.msra.mxu0 0.0
    %319 = vmatprep.mubr.f32.mxu0 0.0
    %320 = vmatmul.mubr.f32.gmra.mrb[0].mxu0 %v241
    %v321 = vpop.f32.mrb[0].mxu0
    %v322 = vadd.f32 0.0, %v321
    %v323 = vpop.f32.mrb[0].mxu0
    %v324 = vadd.f32 0.0, %v323
    %325 = vdwg.mxu0
    %326 = vmatprep.subr.mxu0 %v253
    %327 = vmatpush1.msra.mxu0 %v250
    %328 = vmatprep.subr.mxu0 0.0
    %329 = vmatpush1.msra.mxu0 0.0
    %330 = vmatprep.subr.mxu0 0.0
    %331 = vmatpush1.msra.mxu0 0.0
    %332 = vmatprep.subr.mxu0 0.0
    %333 = vmatpush1.msra.mxu0 0.0
    %334 = vmatprep.subr.mxu0 0.0
    %335 = vmatpush1.msra.mxu0 0.0
    %336 = vmatprep.subr.mxu0 0.0
    %337 = vmatpush1.msra.mxu0 0.0
    %338 = vmatprep.subr.mxu0 0.0
    %339 = vmatpush1.msra.mxu0 0.0
    %340 = vmatprep.subr.mxu0 0.0
    %341 = vmatpush1.msra.mxu0 0.0
    %342 = vmatprep.subr.mxu0 0.0
    %343 = vmatpush1.msra.mxu0 0.0
    %344 = vmatprep.subr.mxu0 0.0
    %345 = vmatpush1.msra.mxu0 0.0
    %346 = vmatprep.subr.mxu0 0.0
    %347 = vmatpush1.msra.mxu0 0.0
    %348 = vmatprep.subr.mxu0 0.0
    %349 = vmatpush1.msra.mxu0 0.0
    %350 = vmatprep.subr.mxu0 0.0
    %351 = vmatpush1.msra.mxu0 0.0
    %352 = vmatprep.subr.mxu0 0.0
    %353 = vmatpush1.msra.mxu0 0.0
    %354 = vmatprep.subr.mxu0 0.0
    %355 = vmatpush1.msra.mxu0 0.0
    %356 = vmatprep.subr.mxu0 0.0
    %357 = vmatpush1.msra.mxu0 0.0
    %358 = vmatprep.subr.mxu0 0.0
    %359 = vmatpush1.msra.mxu0 0.0
    %360 = vmatprep.subr.mxu0 0.0
    %361 = vmatpush1.msra.mxu0 0.0
    %362 = vmatprep.subr.mxu0 0.0
    %363 = vmatpush1.msra.mxu0 0.0
    %364 = vmatprep.subr.mxu0 0.0
    %365 = vmatpush1.msra.mxu0 0.0
    %366 = vmatprep.subr.mxu0 0.0
    %367 = vmatpush1.msra.mxu0 0.0
    %368 = vmatprep.subr.mxu0 0.0
    %369 = vmatpush1.msra.mxu0 0.0
    %370 = vmatprep.subr.mxu0 0.0
    %371 = vmatpush1.msra.mxu0 0.0
    %372 = vmatprep.subr.mxu0 0.0
    %373 = vmatpush1.msra.mxu0 0.0
    %374 = vmatprep.subr.mxu0 0.0
    %375 = vmatpush1.msra.mxu0 0.0
    %376 = vmatprep.subr.mxu0 0.0
    %377 = vmatpush1.msra.mxu0 0.0
    %378 = vmatprep.subr.mxu0 0.0
    %379 = vmatpush1.msra.mxu0 0.0
    %380 = vmatprep.subr.mxu0 0.0
    %381 = vmatpush1.msra.mxu0 0.0
    %382 = vmatprep.subr.mxu0 0.0
    %383 = vmatpush1.msra.mxu0 0.0
    %384 = vmatprep.subr.mxu0 0.0
    %385 = vmatpush1.msra.mxu0 0.0
    %386 = vmatprep.subr.mxu0 0.0
    %387 = vmatpush1.msra.mxu0 0.0
    %388 = vmatprep.subr.mxu0 0.0
    %389 = vmatpush1.msra.mxu0 0.0
    %390 = vmatprep.mubr.f32.mxu0 0.0
    %391 = vmatmul.mubr.f32.gmra.mrb[0].mxu0 %v241
    %v392 = vpop.f32.mrb[0].mxu0
    %v393 = vadd.f32 0.0, %v392
    %v394 = vpop.f32.mrb[0].mxu0
    %v395 = vadd.f32 0.0, %v394
    %396 = vdwg.mxu0
    %v398 = vsel %vm29, %v195, 0
    %v401 = vsel %vm32, %v191, 0
    %v404 = vsel %vm32, %v192, 0
    %v407 = vsel %vm32, %v193, 0
    %v410 = vsel %vm32, %v194, 0
    %412 = vmatprep.subr.mxu0 %v404
    %413 = vmatpush1.msra.mxu0 %v401
    %414 = vmatprep.subr.mxu0 0.0
    %415 = vmatpush1.msra.mxu0 0.0
    %416 = vmatprep.subr.mxu0 0.0
    %417 = vmatpush1.msra.mxu0 0.0
    %418 = vmatprep.subr.mxu0 0.0
    %419 = vmatpush1.msra.mxu0 0.0
    %420 = vmatprep.subr.mxu0 0.0
    %421 = vmatpush1.msra.mxu0 0.0
    %422 = vmatprep.subr.mxu0 0.0
    %423 = vmatpush1.msra.mxu0 0.0
    %424 = vmatprep.subr.mxu0 0.0
    %425 = vmatpush1.msra.mxu0 0.0
    %426 = vmatprep.subr.mxu0 0.0
    %427 = vmatpush1.msra.mxu0 0.0
    %428 = vmatprep.subr.mxu0 0.0
    %429 = vmatpush1.msra.mxu0 0.0
    %430 = vmatprep.subr.mxu0 0.0
    %431 = vmatpush1.msra.mxu0 0.0
    %432 = vmatprep.subr.mxu0 0.0
    %433 = vmatpush1.msra.mxu0 0.0
    %434 = vmatprep.subr.mxu0 0.0
    %435 = vmatpush1.msra.mxu0 0.0
    %436 = vmatprep.subr.mxu0 0.0
    %437 = vmatpush1.msra.mxu0 0.0
    %438 = vmatprep.subr.mxu0 0.0
    %439 = vmatpush1.msra.mxu0 0.0
    %440 = vmatprep.subr.mxu0 0.0
    %441 = vmatpush1.msra.mxu0 0.0
    %442 = vmatprep.subr.mxu0 0.0
    %443 = vmatpush1.msra.mxu0 0.0
    %444 = vmatprep.subr.mxu0 0.0
    %445 = vmatpush1.msra.mxu0 0.0
    %446 = vmatprep.subr.mxu0 0.0
    %447 = vmatpush1.msra.mxu0 0.0
    %448 = vmatprep.subr.mxu0 0.0
    %449 = vmatpush1.msra.mxu0 0.0
    %450 = vmatprep.subr.mxu0 0.0
    %451 = vmatpush1.msra.mxu0 0.0
    %452 = vmatprep.subr.mxu0 0.0
    %453 = vmatpush1.msra.mxu0 0.0
    %454 = vmatprep.subr.mxu0 0.0
    %455 = vmatpush1.msra.mxu0 0.0
    %456 = vmatprep.subr.mxu0 0.0
    %457 = vmatpush1.msra.mxu0 0.0
    %458 = vmatprep.subr.mxu0 0.0
    %459 = vmatpush1.msra.mxu0 0.0
    %460 = vmatprep.subr.mxu0 0.0
    %461 = vmatpush1.msra.mxu0 0.0
    %462 = vmatprep.subr.mxu0 0.0
    %463 = vmatpush1.msra.mxu0 0.0
    %464 = vmatprep.subr.mxu0 0.0
    %465 = vmatpush1.msra.mxu0 0.0
    %466 = vmatprep.subr.mxu0 0.0
    %467 = vmatpush1.msra.mxu0 0.0
    %468 = vmatprep.subr.mxu0 0.0
    %469 = vmatpush1.msra.mxu0 0.0
    %470 = vmatprep.subr.mxu0 0.0
    %471 = vmatpush1.msra.mxu0 0.0
    %472 = vmatprep.subr.mxu0 0.0
    %473 = vmatpush1.msra.mxu0 0.0
    %474 = vmatprep.subr.mxu0 0.0
    %475 = vmatpush1.msra.mxu0 0.0
    %476 = vmatprep.mubr.f32.mxu0 0.0
    %477 = vmatmul.mubr.f32.gmra.mrb[0].mxu0 %v398
    %v478 = vpop.f32.mrb[0].mxu0
    %v479 = vadd.f32 %v322, %v478
    %v480 = vpop.f32.mrb[0].mxu0
    %v481 = vadd.f32 %v324, %v480
    %482 = vdwg.mxu0
    %483 = vmatprep.subr.mxu0 %v410
    %484 = vmatpush1.msra.mxu0 %v407
    %485 = vmatprep.subr.mxu0 0.0
    %486 = vmatpush1.msra.mxu0 0.0
    %487 = vmatprep.subr.mxu0 0.0
    %488 = vmatpush1.msra.mxu0 0.0
    %489 = vmatprep.subr.mxu0 0.0
    %490 = vmatpush1.msra.mxu0 0.0
    %491 = vmatprep.subr.mxu0 0.0
    %492 = vmatpush1.msra.mxu0 0.0
    %493 = vmatprep.subr.mxu0 0.0
    %494 = vmatpush1.msra.mxu0 0.0
    %495 = vmatprep.subr.mxu0 0.0
    %496 = vmatpush1.msra.mxu0 0.0
    %497 = vmatprep.subr.mxu0 0.0
    %498 = vmatpush1.msra.mxu0 0.0
    %499 = vmatprep.subr.mxu0 0.0
    %500 = vmatpush1.msra.mxu0 0.0
    %501 = vmatprep.subr.mxu0 0.0
    %502 = vmatpush1.msra.mxu0 0.0
    %503 = vmatprep.subr.mxu0 0.0
    %504 = vmatpush1.msra.mxu0 0.0
    %505 = vmatprep.subr.mxu0 0.0
    %506 = vmatpush1.msra.mxu0 0.0
    %507 = vmatprep.subr.mxu0 0.0
    %508 = vmatpush1.msra.mxu0 0.0
    %509 = vmatprep.subr.mxu0 0.0
    %510 = vmatpush1.msra.mxu0 0.0
    %511 = vmatprep.subr.mxu0 0.0
    %512 = vmatpush1.msra.mxu0 0.0
    %513 = vmatprep.subr.mxu0 0.0
    %514 = vmatpush1.msra.mxu0 0.0
    %515 = vmatprep.subr.mxu0 0.0
    %516 = vmatpush1.msra.mxu0 0.0
    %517 = vmatprep.subr.mxu0 0.0
    %518 = vmatpush1.msra.mxu0 0.0
    %519 = vmatprep.subr.mxu0 0.0
    %520 = vmatpush1.msra.mxu0 0.0
    %521 = vmatprep.subr.mxu0 0.0
    %522 = vmatpush1.msra.mxu0 0.0
    %523 = vmatprep.subr.mxu0 0.0
    %524 = vmatpush1.msra.mxu0 0.0
    %525 = vmatprep.subr.mxu0 0.0
    %526 = vmatpush1.msra.mxu0 0.0
    %527 = vmatprep.subr.mxu0 0.0
    %528 = vmatpush1.msra.mxu0 0.0
    %529 = vmatprep.subr.mxu0 0.0
    %530 = vmatpush1.msra.mxu0 0.0
    %531 = vmatprep.subr.mxu0 0.0
    %532 = vmatpush1.msra.mxu0 0.0
    %533 = vmatprep.subr.mxu0 0.0
    %534 = vmatpush1.msra.mxu0 0.0
    %535 = vmatprep.subr.mxu0 0.0
    %536 = vmatpush1.msra.mxu0 0.0
    %537 = vmatprep.subr.mxu0 0.0
    %538 = vmatpush1.msra.mxu0 0.0
    %539 = vmatprep.subr.mxu0 0.0
    %540 = vmatpush1.msra.mxu0 0.0
    %541 = vmatprep.subr.mxu0 0.0
    %542 = vmatpush1.msra.mxu0 0.0
    %543 = vmatprep.subr.mxu0 0.0
    %544 = vmatpush1.msra.mxu0 0.0
    %545 = vmatprep.subr.mxu0 0.0
    %546 = vmatpush1.msra.mxu0 0.0
    %547 = vmatprep.mubr.f32.mxu0 0.0
    %548 = vmatmul.mubr.f32.gmra.mrb[0].mxu0 %v398
    %v549 = vpop.f32.mrb[0].mxu0
    %v550 = vadd.f32 %v393, %v549
    %v551 = vpop.f32.mrb[0].mxu0
    %v552 = vadd.f32 %v395, %v551
    %553 = vdwg.mxu0
    %s554 = scalar_lea.vmem %s2, 16
    %v555 = vld [vmem:[%s554] sm:$0xff]
    %556 = vrot.lane.b32.xlu0 %v191, 16
    %v557 = vpop.permute.xlu0 %556
    %558 = vrot.lane.b32.xlu0 %v192, 16
    %v559 = vpop.permute.xlu0 %558
    %560 = vrot.lane.b32.xlu0 %v193, 16
    %v561 = vpop.permute.xlu0 %560
    %562 = vrot.lane.b32.xlu0 %v194, 16
    %v563 = vpop.permute.xlu0 %562
    %vm564 = vcmp.lt.s32.totalorder %v207, 16
    %v565 = vsel %vm564, %v561, %v563
    %v566 = vsel %vm564, %v559, %v561
    %v567 = vsel %vm564, %v557, %v559
    %v568 = vsel %vm564, %v563, %v557
    %s569 = scalar_lea.vmem %s3, 8
    %v570 = vld [vmem:[%s569] sm:$0xf]
    %v572 = vlaneseq
    %v573 = vshrl.u32 %v572, 7
    %v574 = vsub.s32 0, %v573
    %v575 = vrot.slane %v570, %v574
    %v576 = vlaneseq
    %v577 = vshrl.u32 %v576, 7
    %v578 = vsub.s32 1, %v577
    %v579 = vrot.slane %v570, %v578
    %v580 = vlaneseq
    %v581 = vshrl.u32 %v580, 7
    %v582 = vsub.s32 2, %v581
    %v583 = vrot.slane %v570, %v582
    %v584 = vlaneseq
    %v585 = vshrl.u32 %v584, 7
    %v586 = vsub.s32 3, %v585
    %v587 = vrot.slane %v570, %v586
    %v592 = vmul.f32 %v568, %v575
    %v593 = vmul.f32 %v567, %v579
    %v594 = vmul.f32 %v566, %v583
    %v595 = vmul.f32 %v565, %v587
    %v597 = vsel %vm29, %v555, 0
    %v600 = vsel %vm32, %v592, 0
    %v603 = vsel %vm32, %v593, 0
    %v606 = vsel %vm32, %v594, 0
    %v609 = vsel %vm32, %v595, 0
    %611 = vmatprep.subr.mxu0 %v603
    %612 = vmatpush1.msra.mxu0 %v600
    %613 = vmatprep.subr.mxu0 0.0
    %614 = vmatpush1.msra.mxu0 0.0
    %615 = vmatprep.subr.mxu0 0.0
    %616 = vmatpush1.msra.mxu0 0.0
    %617 = vmatprep.subr.mxu0 0.0
    %618 = vmatpush1.msra.mxu0 0.0
    %619 = vmatprep.subr.mxu0 0.0
    %620 = vmatpush1.msra.mxu0 0.0
    %621 = vmatprep.subr.mxu0 0.0
    %622 = vmatpush1.msra.mxu0 0.0
    %623 = vmatprep.subr.mxu0 0.0
    %624 = vmatpush1.msra.mxu0 0.0
    %625 = vmatprep.subr.mxu0 0.0
    %626 = vmatpush1.msra.mxu0 0.0
    %627 = vmatprep.subr.mxu0 0.0
    %628 = vmatpush1.msra.mxu0 0.0
    %629 = vmatprep.subr.mxu0 0.0
    %630 = vmatpush1.msra.mxu0 0.0
    %631 = vmatprep.subr.mxu0 0.0
    %632 = vmatpush1.msra.mxu0 0.0
    %633 = vmatprep.subr.mxu0 0.0
    %634 = vmatpush1.msra.mxu0 0.0
    %635 = vmatprep.subr.mxu0 0.0
    %636 = vmatpush1.msra.mxu0 0.0
    %637 = vmatprep.subr.mxu0 0.0
    %638 = vmatpush1.msra.mxu0 0.0
    %639 = vmatprep.subr.mxu0 0.0
    %640 = vmatpush1.msra.mxu0 0.0
    %641 = vmatprep.subr.mxu0 0.0
    %642 = vmatpush1.msra.mxu0 0.0
    %643 = vmatprep.subr.mxu0 0.0
    %644 = vmatpush1.msra.mxu0 0.0
    %645 = vmatprep.subr.mxu0 0.0
    %646 = vmatpush1.msra.mxu0 0.0
    %647 = vmatprep.subr.mxu0 0.0
    %648 = vmatpush1.msra.mxu0 0.0
    %649 = vmatprep.subr.mxu0 0.0
    %650 = vmatpush1.msra.mxu0 0.0
    %651 = vmatprep.subr.mxu0 0.0
    %652 = vmatpush1.msra.mxu0 0.0
    %653 = vmatprep.subr.mxu0 0.0
    %654 = vmatpush1.msra.mxu0 0.0
    %655 = vmatprep.subr.mxu0 0.0
    %656 = vmatpush1.msra.mxu0 0.0
    %657 = vmatprep.subr.mxu0 0.0
    %658 = vmatpush1.msra.mxu0 0.0
    %659 = vmatprep.subr.mxu0 0.0
    %660 = vmatpush1.msra.mxu0 0.0
    %661 = vmatprep.subr.mxu0 0.0
    %662 = vmatpush1.msra.mxu0 0.0
    %663 = vmatprep.subr.mxu0 0.0
    %664 = vmatpush1.msra.mxu0 0.0
    %665 = vmatprep.subr.mxu0 0.0
    %666 = vmatpush1.msra.mxu0 0.0
    %667 = vmatprep.subr.mxu0 0.0
    %668 = vmatpush1.msra.mxu0 0.0
    %669 = vmatprep.subr.mxu0 0.0
    %670 = vmatpush1.msra.mxu0 0.0
    %671 = vmatprep.subr.mxu0 0.0
    %672 = vmatpush1.msra.mxu0 0.0
    %673 = vmatprep.subr.mxu0 0.0
    %674 = vmatpush1.msra.mxu0 0.0
    %675 = vmatprep.mubr.f32.mxu0 0.0
    %676 = vmatmul.mubr.f32.gmra.mrb[0].mxu0 %v597
    %v677 = vpop.f32.mrb[0].mxu0
    %v678 = vadd.f32 0.0, %v677
    %v679 = vpop.f32.mrb[0].mxu0
    %v680 = vadd.f32 0.0, %v679
    %681 = vdwg.mxu0
    %682 = vmatprep.subr.mxu0 %v609
    %683 = vmatpush1.msra.mxu0 %v606
    %684 = vmatprep.subr.mxu0 0.0
    %685 = vmatpush1.msra.mxu0 0.0
    %686 = vmatprep.subr.mxu0 0.0
    %687 = vmatpush1.msra.mxu0 0.0
    %688 = vmatprep.subr.mxu0 0.0
    %689 = vmatpush1.msra.mxu0 0.0
    %690 = vmatprep.subr.mxu0 0.0
    %691 = vmatpush1.msra.mxu0 0.0
    %692 = vmatprep.subr.mxu0 0.0
    %693 = vmatpush1.msra.mxu0 0.0
    %694 = vmatprep.subr.mxu0 0.0
    %695 = vmatpush1.msra.mxu0 0.0
    %696 = vmatprep.subr.mxu0 0.0
    %697 = vmatpush1.msra.mxu0 0.0
    %698 = vmatprep.subr.mxu0 0.0
    %699 = vmatpush1.msra.mxu0 0.0
    %700 = vmatprep.subr.mxu0 0.0
    %701 = vmatpush1.msra.mxu0 0.0
    %702 = vmatprep.subr.mxu0 0.0
    %703 = vmatpush1.msra.mxu0 0.0
    %704 = vmatprep.subr.mxu0 0.0
    %705 = vmatpush1.msra.mxu0 0.0
    %706 = vmatprep.subr.mxu0 0.0
    %707 = vmatpush1.msra.mxu0 0.0
    %708 = vmatprep.subr.mxu0 0.0
    %709 = vmatpush1.msra.mxu0 0.0
    %710 = vmatprep.subr.mxu0 0.0
    %711 = vmatpush1.msra.mxu0 0.0
    %712 = vmatprep.subr.mxu0 0.0
    %713 = vmatpush1.msra.mxu0 0.0
    %714 = vmatprep.subr.mxu0 0.0
    %715 = vmatpush1.msra.mxu0 0.0
    %716 = vmatprep.subr.mxu0 0.0
    %717 = vmatpush1.msra.mxu0 0.0
    %718 = vmatprep.subr.mxu0 0.0
    %719 = vmatpush1.msra.mxu0 0.0
    %720 = vmatprep.subr.mxu0 0.0
    %721 = vmatpush1.msra.mxu0 0.0
    %722 = vmatprep.subr.mxu0 0.0
    %723 = vmatpush1.msra.mxu0 0.0
    %724 = vmatprep.subr.mxu0 0.0
    %725 = vmatpush1.msra.mxu0 0.0
    %726 = vmatprep.subr.mxu0 0.0
    %727 = vmatpush1.msra.mxu0 0.0
    %728 = vmatprep.subr.mxu0 0.0
    %729 = vmatpush1.msra.mxu0 0.0
    %730 = vmatprep.subr.mxu0 0.0
    %731 = vmatpush1.msra.mxu0 0.0
    %732 = vmatprep.subr.mxu0 0.0
    %733 = vmatpush1.msra.mxu0 0.0
    %734 = vmatprep.subr.mxu0 0.0
    %735 = vmatpush1.msra.mxu0 0.0
    %736 = vmatprep.subr.mxu0 0.0
    %737 = vmatpush1.msra.mxu0 0.0
    %738 = vmatprep.subr.mxu0 0.0
    %739 = vmatpush1.msra.mxu0 0.0
    %740 = vmatprep.subr.mxu0 0.0
    %741 = vmatpush1.msra.mxu0 0.0
    %742 = vmatprep.subr.mxu0 0.0
    %743 = vmatpush1.msra.mxu0 0.0
    %744 = vmatprep.subr.mxu0 0.0
    %745 = vmatpush1.msra.mxu0 0.0
    %746 = vmatprep.mubr.f32.mxu0 0.0
    %747 = vmatmul.mubr.f32.gmra.mrb[0].mxu0 %v597
    %v748 = vpop.f32.mrb[0].mxu0
    %v749 = vadd.f32 0.0, %v748
    %v750 = vpop.f32.mrb[0].mxu0
    %v751 = vadd.f32 0.0, %v750
    %752 = vdwg.mxu0
    %v753 = vadd.f32 %v479, %v678
    %v754 = vadd.f32 %v481, %v680
    %v755 = vadd.f32 %v550, %v749
    %v756 = vadd.f32 %v552, %v751
    %s757 = scalar_lea.vmem %s2, 24
    %v758 = vld [vmem:[%s757] sm:$0xff]
    %759 = vrot.lane.b32.xlu0 %v191, 15
    %v760 = vpop.permute.xlu0 %759
    %761 = vrot.lane.b32.xlu0 %v192, 15
    %v762 = vpop.permute.xlu0 %761
    %763 = vrot.lane.b32.xlu0 %v193, 15
    %v764 = vpop.permute.xlu0 %763
    %765 = vrot.lane.b32.xlu0 %v194, 15
    %v766 = vpop.permute.xlu0 %765
    %vm767 = vcmp.lt.s32.totalorder %v207, 15
    %v768 = vsel %vm767, %v764, %v766
    %v769 = vsel %vm767, %v762, %v764
    %v770 = vsel %vm767, %v760, %v762
    %v771 = vsel %vm767, %v766, %v760
    %s772 = scalar_lea.vmem %s3, 12
    %v773 = vld [vmem:[%s772] sm:$0xf]
    %v775 = vlaneseq
    %v776 = vshrl.u32 %v775, 7
    %v777 = vsub.s32 0, %v776
    %v778 = vrot.slane %v773, %v777
    %v779 = vlaneseq
    %v780 = vshrl.u32 %v779, 7
    %v781 = vsub.s32 1, %v780
    %v782 = vrot.slane %v773, %v781
    %v783 = vlaneseq
    %v784 = vshrl.u32 %v783, 7
    %v785 = vsub.s32 2, %v784
    %v786 = vrot.slane %v773, %v785
    %v787 = vlaneseq
    %v788 = vshrl.u32 %v787, 7
    %v789 = vsub.s32 3, %v788
    %v790 = vrot.slane %v773, %v789
    %v795 = vmul.f32 %v771, %v778
    %v796 = vmul.f32 %v770, %v782
    %v797 = vmul.f32 %v769, %v786
    %v798 = vmul.f32 %v768, %v790
    %v800 = vsel %vm29, %v758, 0
    %v803 = vsel %vm32, %v795, 0
    %v806 = vsel %vm32, %v796, 0
    %v809 = vsel %vm32, %v797, 0
    %v812 = vsel %vm32, %v798, 0
    %814 = vmatprep.subr.mxu0 %v806
    %815 = vmatpush1.msra.mxu0 %v803
    %816 = vmatprep.subr.mxu0 0.0
    %817 = vmatpush1.msra.mxu0 0.0
    %818 = vmatprep.subr.mxu0 0.0
    %819 = vmatpush1.msra.mxu0 0.0
    %820 = vmatprep.subr.mxu0 0.0
    %821 = vmatpush1.msra.mxu0 0.0
    %822 = vmatprep.subr.mxu0 0.0
    %823 = vmatpush1.msra.mxu0 0.0
    %824 = vmatprep.subr.mxu0 0.0
    %825 = vmatpush1.msra.mxu0 0.0
    %826 = vmatprep.subr.mxu0 0.0
    %827 = vmatpush1.msra.mxu0 0.0
    %828 = vmatprep.subr.mxu0 0.0
    %829 = vmatpush1.msra.mxu0 0.0
    %830 = vmatprep.subr.mxu0 0.0
    %831 = vmatpush1.msra.mxu0 0.0
    %832 = vmatprep.subr.mxu0 0.0
    %833 = vmatpush1.msra.mxu0 0.0
    %834 = vmatprep.subr.mxu0 0.0
    %835 = vmatpush1.msra.mxu0 0.0
    %836 = vmatprep.subr.mxu0 0.0
    %837 = vmatpush1.msra.mxu0 0.0
    %838 = vmatprep.subr.mxu0 0.0
    %839 = vmatpush1.msra.mxu0 0.0
    %840 = vmatprep.subr.mxu0 0.0
    %841 = vmatpush1.msra.mxu0 0.0
    %842 = vmatprep.subr.mxu0 0.0
    %843 = vmatpush1.msra.mxu0 0.0
    %844 = vmatprep.subr.mxu0 0.0
    %845 = vmatpush1.msra.mxu0 0.0
    %846 = vmatprep.subr.mxu0 0.0
    %847 = vmatpush1.msra.mxu0 0.0
    %848 = vmatprep.subr.mxu0 0.0
    %849 = vmatpush1.msra.mxu0 0.0
    %850 = vmatprep.subr.mxu0 0.0
    %851 = vmatpush1.msra.mxu0 0.0
    %852 = vmatprep.subr.mxu0 0.0
    %853 = vmatpush1.msra.mxu0 0.0
    %854 = vmatprep.subr.mxu0 0.0
    %855 = vmatpush1.msra.mxu0 0.0
    %856 = vmatprep.subr.mxu0 0.0
    %857 = vmatpush1.msra.mxu0 0.0
    %858 = vmatprep.subr.mxu0 0.0
    %859 = vmatpush1.msra.mxu0 0.0
    %860 = vmatprep.subr.mxu0 0.0
    %861 = vmatpush1.msra.mxu0 0.0
    %862 = vmatprep.subr.mxu0 0.0
    %863 = vmatpush1.msra.mxu0 0.0
    %864 = vmatprep.subr.mxu0 0.0
    %865 = vmatpush1.msra.mxu0 0.0
    %866 = vmatprep.subr.mxu0 0.0
    %867 = vmatpush1.msra.mxu0 0.0
    %868 = vmatprep.subr.mxu0 0.0
    %869 = vmatpush1.msra.mxu0 0.0
    %870 = vmatprep.subr.mxu0 0.0
    %871 = vmatpush1.msra.mxu0 0.0
    %872 = vmatprep.subr.mxu0 0.0
    %873 = vmatpush1.msra.mxu0 0.0
    %874 = vmatprep.subr.mxu0 0.0
    %875 = vmatpush1.msra.mxu0 0.0
    %876 = vmatprep.subr.mxu0 0.0
    %877 = vmatpush1.msra.mxu0 0.0
    %878 = vmatprep.mubr.f32.mxu0 0.0
    %879 = vmatmul.mubr.f32.gmra.mrb[0].mxu0 %v800
    %v880 = vpop.f32.mrb[0].mxu0
    %v881 = vadd.f32 0.0, %v880
    %v882 = vpop.f32.mrb[0].mxu0
    %v883 = vadd.f32 0.0, %v882
    %884 = vdwg.mxu0
    %885 = vmatprep.subr.mxu0 %v812
    %886 = vmatpush1.msra.mxu0 %v809
    %887 = vmatprep.subr.mxu0 0.0
    %888 = vmatpush1.msra.mxu0 0.0
    %889 = vmatprep.subr.mxu0 0.0
    %890 = vmatpush1.msra.mxu0 0.0
    %891 = vmatprep.subr.mxu0 0.0
    %892 = vmatpush1.msra.mxu0 0.0
    %893 = vmatprep.subr.mxu0 0.0
    %894 = vmatpush1.msra.mxu0 0.0
    %895 = vmatprep.subr.mxu0 0.0
    %896 = vmatpush1.msra.mxu0 0.0
    %897 = vmatprep.subr.mxu0 0.0
    %898 = vmatpush1.msra.mxu0 0.0
    %899 = vmatprep.subr.mxu0 0.0
    %900 = vmatpush1.msra.mxu0 0.0
    %901 = vmatprep.subr.mxu0 0.0
    %902 = vmatpush1.msra.mxu0 0.0
    %903 = vmatprep.subr.mxu0 0.0
    %904 = vmatpush1.msra.mxu0 0.0
    %905 = vmatprep.subr.mxu0 0.0
    %906 = vmatpush1.msra.mxu0 0.0
    %907 = vmatprep.subr.mxu0 0.0
    %908 = vmatpush1.msra.mxu0 0.0
    %909 = vmatprep.subr.mxu0 0.0
    %910 = vmatpush1.msra.mxu0 0.0
    %911 = vmatprep.subr.mxu0 0.0
    %912 = vmatpush1.msra.mxu0 0.0
    %913 = vmatprep.subr.mxu0 0.0
    %914 = vmatpush1.msra.mxu0 0.0
    %915 = vmatprep.subr.mxu0 0.0
    %916 = vmatpush1.msra.mxu0 0.0
    %917 = vmatprep.subr.mxu0 0.0
    %918 = vmatpush1.msra.mxu0 0.0
    %919 = vmatprep.subr.mxu0 0.0
    %920 = vmatpush1.msra.mxu0 0.0
    %921 = vmatprep.subr.mxu0 0.0
    %922 = vmatpush1.msra.mxu0 0.0
    %923 = vmatprep.subr.mxu0 0.0
    %924 = vmatpush1.msra.mxu0 0.0
    %925 = vmatprep.subr.mxu0 0.0
    %926 = vmatpush1.msra.mxu0 0.0
    %927 = vmatprep.subr.mxu0 0.0
    %928 = vmatpush1.msra.mxu0 0.0
    %929 = vmatprep.subr.mxu0 0.0
    %930 = vmatpush1.msra.mxu0 0.0
    %931 = vmatprep.subr.mxu0 0.0
    %932 = vmatpush1.msra.mxu0 0.0
    %933 = vmatprep.subr.mxu0 0.0
    %934 = vmatpush1.msra.mxu0 0.0
    %935 = vmatprep.subr.mxu0 0.0
    %936 = vmatpush1.msra.mxu0 0.0
    %937 = vmatprep.subr.mxu0 0.0
    %938 = vmatpush1.msra.mxu0 0.0
    %939 = vmatprep.subr.mxu0 0.0
    %940 = vmatpush1.msra.mxu0 0.0
    %941 = vmatprep.subr.mxu0 0.0
    %942 = vmatpush1.msra.mxu0 0.0
    %943 = vmatprep.subr.mxu0 0.0
    %944 = vmatpush1.msra.mxu0 0.0
    %945 = vmatprep.subr.mxu0 0.0
    %946 = vmatpush1.msra.mxu0 0.0
    %947 = vmatprep.subr.mxu0 0.0
    %948 = vmatpush1.msra.mxu0 0.0
    %949 = vmatprep.mubr.f32.mxu0 0.0
    %950 = vmatmul.mubr.f32.gmra.mrb[0].mxu0 %v800
    %v951 = vpop.f32.mrb[0].mxu0
    %v952 = vadd.f32 0.0, %v951
    %v953 = vpop.f32.mrb[0].mxu0
    %v954 = vadd.f32 0.0, %v953
    %955 = vdwg.mxu0
    %v956 = vadd.f32 %v753, %v881
    %v957 = vadd.f32 %v754, %v883
    %v958 = vadd.f32 %v755, %v952
    %v959 = vadd.f32 %v756, %v954
    %s960 = scalar_lea.vmem %s2, 32
    %v961 = vld [vmem:[%s960] sm:$0xff]
    %962 = vrot.lane.b32.xlu0 %v191, 1
    %v963 = vpop.permute.xlu0 %962
    %964 = vrot.lane.b32.xlu0 %v192, 1
    %v965 = vpop.permute.xlu0 %964
    %966 = vrot.lane.b32.xlu0 %v193, 1
    %v967 = vpop.permute.xlu0 %966
    %968 = vrot.lane.b32.xlu0 %v194, 1
    %v969 = vpop.permute.xlu0 %968
    %vm970 = vcmp.lt.s32.totalorder %v207, 1
    %v971 = vsel %vm970, %v967, %v969
    %v972 = vsel %vm970, %v965, %v967
    %v973 = vsel %vm970, %v963, %v965
    %v974 = vsel %vm970, %v969, %v963
    %s975 = scalar_lea.vmem %s3, 16
    %v976 = vld [vmem:[%s975] sm:$0xf]
    %v978 = vlaneseq
    %v979 = vshrl.u32 %v978, 7
    %v980 = vsub.s32 0, %v979
    %v981 = vrot.slane %v976, %v980
    %v982 = vlaneseq
    %v983 = vshrl.u32 %v982, 7
    %v984 = vsub.s32 1, %v983
    %v985 = vrot.slane %v976, %v984
    %v986 = vlaneseq
    %v987 = vshrl.u32 %v986, 7
    %v988 = vsub.s32 2, %v987
    %v989 = vrot.slane %v976, %v988
    %v990 = vlaneseq
    %v991 = vshrl.u32 %v990, 7
    %v992 = vsub.s32 3, %v991
    %v993 = vrot.slane %v976, %v992
    %v998 = vmul.f32 %v974, %v981
    %v999 = vmul.f32 %v973, %v985
    %v1000 = vmul.f32 %v972, %v989
    %v1001 = vmul.f32 %v971, %v993
    %v1003 = vsel %vm29, %v961, 0
    %v1006 = vsel %vm32, %v998, 0
    %v1009 = vsel %vm32, %v999, 0
    %v1012 = vsel %vm32, %v1000, 0
    %v1015 = vsel %vm32, %v1001, 0
    %1017 = vmatprep.subr.mxu0 %v1009
    %1018 = vmatpush1.msra.mxu0 %v1006
    %1019 = vmatprep.subr.mxu0 0.0
    %1020 = vmatpush1.msra.mxu0 0.0
    %1021 = vmatprep.subr.mxu0 0.0
    %1022 = vmatpush1.msra.mxu0 0.0
    %1023 = vmatprep.subr.mxu0 0.0
    %1024 = vmatpush1.msra.mxu0 0.0
    %1025 = vmatprep.subr.mxu0 0.0
    %1026 = vmatpush1.msra.mxu0 0.0
    %1027 = vmatprep.subr.mxu0 0.0
    %1028 = vmatpush1.msra.mxu0 0.0
    %1029 = vmatprep.subr.mxu0 0.0
    %1030 = vmatpush1.msra.mxu0 0.0
    %1031 = vmatprep.subr.mxu0 0.0
    %1032 = vmatpush1.msra.mxu0 0.0
    %1033 = vmatprep.subr.mxu0 0.0
    %1034 = vmatpush1.msra.mxu0 0.0
    %1035 = vmatprep.subr.mxu0 0.0
    %1036 = vmatpush1.msra.mxu0 0.0
    %1037 = vmatprep.subr.mxu0 0.0
    %1038 = vmatpush1.msra.mxu0 0.0
    %1039 = vmatprep.subr.mxu0 0.0
    %1040 = vmatpush1.msra.mxu0 0.0
    %1041 = vmatprep.subr.mxu0 0.0
    %1042 = vmatpush1.msra.mxu0 0.0
    %1043 = vmatprep.subr.mxu0 0.0
    %1044 = vmatpush1.msra.mxu0 0.0
    %1045 = vmatprep.subr.mxu0 0.0
    %1046 = vmatpush1.msra.mxu0 0.0
    %1047 = vmatprep.subr.mxu0 0.0
    %1048 = vmatpush1.msra.mxu0 0.0
    %1049 = vmatprep.subr.mxu0 0.0
    %1050 = vmatpush1.msra.mxu0 0.0
    %1051 = vmatprep.subr.mxu0 0.0
    %1052 = vmatpush1.msra.mxu0 0.0
    %1053 = vmatprep.subr.mxu0 0.0
    %1054 = vmatpush1.msra.mxu0 0.0
    %1055 = vmatprep.subr.mxu0 0.0
    %1056 = vmatpush1.msra.mxu0 0.0
    %1057 = vmatprep.subr.mxu0 0.0
    %1058 = vmatpush1.msra.mxu0 0.0
    %1059 = vmatprep.subr.mxu0 0.0
    %1060 = vmatpush1.msra.mxu0 0.0
    %1061 = vmatprep.subr.mxu0 0.0
    %1062 = vmatpush1.msra.mxu0 0.0
    %1063 = vmatprep.subr.mxu0 0.0
    %1064 = vmatpush1.msra.mxu0 0.0
    %1065 = vmatprep.subr.mxu0 0.0
    %1066 = vmatpush1.msra.mxu0 0.0
    %1067 = vmatprep.subr.mxu0 0.0
    %1068 = vmatpush1.msra.mxu0 0.0
    %1069 = vmatprep.subr.mxu0 0.0
    %1070 = vmatpush1.msra.mxu0 0.0
    %1071 = vmatprep.subr.mxu0 0.0
    %1072 = vmatpush1.msra.mxu0 0.0
    %1073 = vmatprep.subr.mxu0 0.0
    %1074 = vmatpush1.msra.mxu0 0.0
    %1075 = vmatprep.subr.mxu0 0.0
    %1076 = vmatpush1.msra.mxu0 0.0
    %1077 = vmatprep.subr.mxu0 0.0
    %1078 = vmatpush1.msra.mxu0 0.0
    %1079 = vmatprep.subr.mxu0 0.0
    %1080 = vmatpush1.msra.mxu0 0.0
    %1081 = vmatprep.mubr.f32.mxu0 0.0
    %1082 = vmatmul.mubr.f32.gmra.mrb[0].mxu0 %v1003
    %v1083 = vpop.f32.mrb[0].mxu0
    %v1084 = vadd.f32 0.0, %v1083
    %v1085 = vpop.f32.mrb[0].mxu0
    %v1086 = vadd.f32 0.0, %v1085
    %1087 = vdwg.mxu0
    %1088 = vmatprep.subr.mxu0 %v1015
    %1089 = vmatpush1.msra.mxu0 %v1012
    %1090 = vmatprep.subr.mxu0 0.0
    %1091 = vmatpush1.msra.mxu0 0.0
    %1092 = vmatprep.subr.mxu0 0.0
    %1093 = vmatpush1.msra.mxu0 0.0
    %1094 = vmatprep.subr.mxu0 0.0
    %1095 = vmatpush1.msra.mxu0 0.0
    %1096 = vmatprep.subr.mxu0 0.0
    %1097 = vmatpush1.msra.mxu0 0.0
    %1098 = vmatprep.subr.mxu0 0.0
    %1099 = vmatpush1.msra.mxu0 0.0
    %1100 = vmatprep.subr.mxu0 0.0
    %1101 = vmatpush1.msra.mxu0 0.0
    %1102 = vmatprep.subr.mxu0 0.0
    %1103 = vmatpush1.msra.mxu0 0.0
    %1104 = vmatprep.subr.mxu0 0.0
    %1105 = vmatpush1.msra.mxu0 0.0
    %1106 = vmatprep.subr.mxu0 0.0
    %1107 = vmatpush1.msra.mxu0 0.0
    %1108 = vmatprep.subr.mxu0 0.0
    %1109 = vmatpush1.msra.mxu0 0.0
    %1110 = vmatprep.subr.mxu0 0.0
    %1111 = vmatpush1.msra.mxu0 0.0
    %1112 = vmatprep.subr.mxu0 0.0
    %1113 = vmatpush1.msra.mxu0 0.0
    %1114 = vmatprep.subr.mxu0 0.0
    %1115 = vmatpush1.msra.mxu0 0.0
    %1116 = vmatprep.subr.mxu0 0.0
    %1117 = vmatpush1.msra.mxu0 0.0
    %1118 = vmatprep.subr.mxu0 0.0
    %1119 = vmatpush1.msra.mxu0 0.0
    %1120 = vmatprep.subr.mxu0 0.0
    %1121 = vmatpush1.msra.mxu0 0.0
    %1122 = vmatprep.subr.mxu0 0.0
    %1123 = vmatpush1.msra.mxu0 0.0
    %1124 = vmatprep.subr.mxu0 0.0
    %1125 = vmatpush1.msra.mxu0 0.0
    %1126 = vmatprep.subr.mxu0 0.0
    %1127 = vmatpush1.msra.mxu0 0.0
    %1128 = vmatprep.subr.mxu0 0.0
    %1129 = vmatpush1.msra.mxu0 0.0
    %1130 = vmatprep.subr.mxu0 0.0
    %1131 = vmatpush1.msra.mxu0 0.0
    %1132 = vmatprep.subr.mxu0 0.0
    %1133 = vmatpush1.msra.mxu0 0.0
    %1134 = vmatprep.subr.mxu0 0.0
    %1135 = vmatpush1.msra.mxu0 0.0
    %1136 = vmatprep.subr.mxu0 0.0
    %1137 = vmatpush1.msra.mxu0 0.0
    %1138 = vmatprep.subr.mxu0 0.0
    %1139 = vmatpush1.msra.mxu0 0.0
    %1140 = vmatprep.subr.mxu0 0.0
    %1141 = vmatpush1.msra.mxu0 0.0
    %1142 = vmatprep.subr.mxu0 0.0
    %1143 = vmatpush1.msra.mxu0 0.0
    %1144 = vmatprep.subr.mxu0 0.0
    %1145 = vmatpush1.msra.mxu0 0.0
    %1146 = vmatprep.subr.mxu0 0.0
    %1147 = vmatpush1.msra.mxu0 0.0
    %1148 = vmatprep.subr.mxu0 0.0
    %1149 = vmatpush1.msra.mxu0 0.0
    %1150 = vmatprep.subr.mxu0 0.0
    %1151 = vmatpush1.msra.mxu0 0.0
    %1152 = vmatprep.mubr.f32.mxu0 0.0
    %1153 = vmatmul.mubr.f32.gmra.mrb[0].mxu0 %v1003
    %v1154 = vpop.f32.mrb[0].mxu0
    %v1155 = vadd.f32 0.0, %v1154
    %v1156 = vpop.f32.mrb[0].mxu0
    %v1157 = vadd.f32 0.0, %v1156
    %1158 = vdwg.mxu0
    %v1159 = vadd.f32 %v956, %v1084
    %v1160 = vadd.f32 %v957, %v1086
    %v1161 = vadd.f32 %v958, %v1155
    %v1162 = vadd.f32 %v959, %v1157
    %s1163 = scalar_lea.vmem %s2, 40
    %v1164 = vld [vmem:[%s1163] sm:$0xff]
    %1165 = vrot.lane.b32.xlu0 %v191, 127
    %v1166 = vpop.permute.xlu0 %1165
    %1167 = vrot.lane.b32.xlu0 %v192, 127
    %v1168 = vpop.permute.xlu0 %1167
    %1169 = vrot.lane.b32.xlu0 %v193, 127
    %v1170 = vpop.permute.xlu0 %1169
    %1171 = vrot.lane.b32.xlu0 %v194, 127
    %v1172 = vpop.permute.xlu0 %1171
    %vm1173 = vcmp.lt.s32.totalorder %v207, 127
    %v1174 = vsel %vm1173, %v1170, %v1172
    %v1175 = vsel %vm1173, %v1168, %v1170
    %v1176 = vsel %vm1173, %v1166, %v1168
    %v1177 = vsel %vm1173, %v1172, %v1166
    %s1178 = scalar_lea.vmem %s3, 20
    %v1179 = vld [vmem:[%s1178] sm:$0xf]
    %v1181 = vlaneseq
    %v1182 = vshrl.u32 %v1181, 7
    %v1183 = vsub.s32 0, %v1182
    %v1184 = vrot.slane %v1179, %v1183
    %v1185 = vlaneseq
    %v1186 = vshrl.u32 %v1185, 7
    %v1187 = vsub.s32 1, %v1186
    %v1188 = vrot.slane %v1179, %v1187
    %v1189 = vlaneseq
    %v1190 = vshrl.u32 %v1189, 7
    %v1191 = vsub.s32 2, %v1190
    %v1192 = vrot.slane %v1179, %v1191
    %v1193 = vlaneseq
    %v1194 = vshrl.u32 %v1193, 7
    %v1195 = vsub.s32 3, %v1194
    %v1196 = vrot.slane %v1179, %v1195
    %v1201 = vmul.f32 %v1176, %v1184
    %v1202 = vmul.f32 %v1175, %v1188
    %v1203 = vmul.f32 %v1174, %v1192
    %v1204 = vmul.f32 %v1177, %v1196
    %v1206 = vsel %vm29, %v1164, 0
    %v1209 = vsel %vm32, %v1201, 0
    %v1212 = vsel %vm32, %v1202, 0
    %v1215 = vsel %vm32, %v1203, 0
    %v1218 = vsel %vm32, %v1204, 0
    %1220 = vmatprep.subr.mxu0 %v1212
    %1221 = vmatpush1.msra.mxu0 %v1209
    %1222 = vmatprep.subr.mxu0 0.0
    %1223 = vmatpush1.msra.mxu0 0.0
    %1224 = vmatprep.subr.mxu0 0.0
    %1225 = vmatpush1.msra.mxu0 0.0
    %1226 = vmatprep.subr.mxu0 0.0
    %1227 = vmatpush1.msra.mxu0 0.0
    %1228 = vmatprep.subr.mxu0 0.0
    %1229 = vmatpush1.msra.mxu0 0.0
    %1230 = vmatprep.subr.mxu0 0.0
    %1231 = vmatpush1.msra.mxu0 0.0
    %1232 = vmatprep.subr.mxu0 0.0
    %1233 = vmatpush1.msra.mxu0 0.0
    %1234 = vmatprep.subr.mxu0 0.0
    %1235 = vmatpush1.msra.mxu0 0.0
    %1236 = vmatprep.subr.mxu0 0.0
    %1237 = vmatpush1.msra.mxu0 0.0
    %1238 = vmatprep.subr.mxu0 0.0
    %1239 = vmatpush1.msra.mxu0 0.0
    %1240 = vmatprep.subr.mxu0 0.0
    %1241 = vmatpush1.msra.mxu0 0.0
    %1242 = vmatprep.subr.mxu0 0.0
    %1243 = vmatpush1.msra.mxu0 0.0
    %1244 = vmatprep.subr.mxu0 0.0
    %1245 = vmatpush1.msra.mxu0 0.0
    %1246 = vmatprep.subr.mxu0 0.0
    %1247 = vmatpush1.msra.mxu0 0.0
    %1248 = vmatprep.subr.mxu0 0.0
    %1249 = vmatpush1.msra.mxu0 0.0
    %1250 = vmatprep.subr.mxu0 0.0
    %1251 = vmatpush1.msra.mxu0 0.0
    %1252 = vmatprep.subr.mxu0 0.0
    %1253 = vmatpush1.msra.mxu0 0.0
    %1254 = vmatprep.subr.mxu0 0.0
    %1255 = vmatpush1.msra.mxu0 0.0
    %1256 = vmatprep.subr.mxu0 0.0
    %1257 = vmatpush1.msra.mxu0 0.0
    %1258 = vmatprep.subr.mxu0 0.0
    %1259 = vmatpush1.msra.mxu0 0.0
    %1260 = vmatprep.subr.mxu0 0.0
    %1261 = vmatpush1.msra.mxu0 0.0
    %1262 = vmatprep.subr.mxu0 0.0
    %1263 = vmatpush1.msra.mxu0 0.0
    %1264 = vmatprep.subr.mxu0 0.0
    %1265 = vmatpush1.msra.mxu0 0.0
    %1266 = vmatprep.subr.mxu0 0.0
    %1267 = vmatpush1.msra.mxu0 0.0
    %1268 = vmatprep.subr.mxu0 0.0
    %1269 = vmatpush1.msra.mxu0 0.0
    %1270 = vmatprep.subr.mxu0 0.0
    %1271 = vmatpush1.msra.mxu0 0.0
    %1272 = vmatprep.subr.mxu0 0.0
    %1273 = vmatpush1.msra.mxu0 0.0
    %1274 = vmatprep.subr.mxu0 0.0
    %1275 = vmatpush1.msra.mxu0 0.0
    %1276 = vmatprep.subr.mxu0 0.0
    %1277 = vmatpush1.msra.mxu0 0.0
    %1278 = vmatprep.subr.mxu0 0.0
    %1279 = vmatpush1.msra.mxu0 0.0
    %1280 = vmatprep.subr.mxu0 0.0
    %1281 = vmatpush1.msra.mxu0 0.0
    %1282 = vmatprep.subr.mxu0 0.0
    %1283 = vmatpush1.msra.mxu0 0.0
    %1284 = vmatprep.mubr.f32.mxu0 0.0
    %1285 = vmatmul.mubr.f32.gmra.mrb[0].mxu0 %v1206
    %v1286 = vpop.f32.mrb[0].mxu0
    %v1287 = vadd.f32 0.0, %v1286
    %v1288 = vpop.f32.mrb[0].mxu0
    %v1289 = vadd.f32 0.0, %v1288
    %1290 = vdwg.mxu0
    %1291 = vmatprep.subr.mxu0 %v1218
    %1292 = vmatpush1.msra.mxu0 %v1215
    %1293 = vmatprep.subr.mxu0 0.0
    %1294 = vmatpush1.msra.mxu0 0.0
    %1295 = vmatprep.subr.mxu0 0.0
    %1296 = vmatpush1.msra.mxu0 0.0
    %1297 = vmatprep.subr.mxu0 0.0
    %1298 = vmatpush1.msra.mxu0 0.0
    %1299 = vmatprep.subr.mxu0 0.0
    %1300 = vmatpush1.msra.mxu0 0.0
    %1301 = vmatprep.subr.mxu0 0.0
    %1302 = vmatpush1.msra.mxu0 0.0
    %1303 = vmatprep.subr.mxu0 0.0
    %1304 = vmatpush1.msra.mxu0 0.0
    %1305 = vmatprep.subr.mxu0 0.0
    %1306 = vmatpush1.msra.mxu0 0.0
    %1307 = vmatprep.subr.mxu0 0.0
    %1308 = vmatpush1.msra.mxu0 0.0
    %1309 = vmatprep.subr.mxu0 0.0
    %1310 = vmatpush1.msra.mxu0 0.0
    %1311 = vmatprep.subr.mxu0 0.0
    %1312 = vmatpush1.msra.mxu0 0.0
    %1313 = vmatprep.subr.mxu0 0.0
    %1314 = vmatpush1.msra.mxu0 0.0
    %1315 = vmatprep.subr.mxu0 0.0
    %1316 = vmatpush1.msra.mxu0 0.0
    %1317 = vmatprep.subr.mxu0 0.0
    %1318 = vmatpush1.msra.mxu0 0.0
    %1319 = vmatprep.subr.mxu0 0.0
    %1320 = vmatpush1.msra.mxu0 0.0
    %1321 = vmatprep.subr.mxu0 0.0
    %1322 = vmatpush1.msra.mxu0 0.0
    %1323 = vmatprep.subr.mxu0 0.0
    %1324 = vmatpush1.msra.mxu0 0.0
    %1325 = vmatprep.subr.mxu0 0.0
    %1326 = vmatpush1.msra.mxu0 0.0
    %1327 = vmatprep.subr.mxu0 0.0
    %1328 = vmatpush1.msra.mxu0 0.0
    %1329 = vmatprep.subr.mxu0 0.0
    %1330 = vmatpush1.msra.mxu0 0.0
    %1331 = vmatprep.subr.mxu0 0.0
    %1332 = vmatpush1.msra.mxu0 0.0
    %1333 = vmatprep.subr.mxu0 0.0
    %1334 = vmatpush1.msra.mxu0 0.0
    %1335 = vmatprep.subr.mxu0 0.0
    %1336 = vmatpush1.msra.mxu0 0.0
    %1337 = vmatprep.subr.mxu0 0.0
    %1338 = vmatpush1.msra.mxu0 0.0
    %1339 = vmatprep.subr.mxu0 0.0
    %1340 = vmatpush1.msra.mxu0 0.0
    %1341 = vmatprep.subr.mxu0 0.0
    %1342 = vmatpush1.msra.mxu0 0.0
    %1343 = vmatprep.subr.mxu0 0.0
    %1344 = vmatpush1.msra.mxu0 0.0
    %1345 = vmatprep.subr.mxu0 0.0
    %1346 = vmatpush1.msra.mxu0 0.0
    %1347 = vmatprep.subr.mxu0 0.0
    %1348 = vmatpush1.msra.mxu0 0.0
    %1349 = vmatprep.subr.mxu0 0.0
    %1350 = vmatpush1.msra.mxu0 0.0
    %1351 = vmatprep.subr.mxu0 0.0
    %1352 = vmatpush1.msra.mxu0 0.0
    %1353 = vmatprep.subr.mxu0 0.0
    %1354 = vmatpush1.msra.mxu0 0.0
    %1355 = vmatprep.mubr.f32.mxu0 0.0
    %1356 = vmatmul.mubr.f32.gmra.mrb[0].mxu0 %v1206
    %v1357 = vpop.f32.mrb[0].mxu0
    %v1358 = vadd.f32 0.0, %v1357
    %v1359 = vpop.f32.mrb[0].mxu0
    %v1360 = vadd.f32 0.0, %v1359
    %1361 = vdwg.mxu0
    %v1362 = vadd.f32 %v1159, %v1287
    %v1363 = vadd.f32 %v1160, %v1289
    %v1364 = vadd.f32 %v1161, %v1358
    %v1365 = vadd.f32 %v1162, %v1360
    %s1366 = scalar_lea.vmem %s2, 48
    %v1367 = vld [vmem:[%s1366] sm:$0xff]
    %1368 = vrot.lane.b32.xlu0 %v191, 113
    %v1369 = vpop.permute.xlu0 %1368
    %1370 = vrot.lane.b32.xlu0 %v192, 113
    %v1371 = vpop.permute.xlu0 %1370
    %1372 = vrot.lane.b32.xlu0 %v193, 113
    %v1373 = vpop.permute.xlu0 %1372
    %1374 = vrot.lane.b32.xlu0 %v194, 113
    %v1375 = vpop.permute.xlu0 %1374
    %vm1376 = vcmp.lt.s32.totalorder %v207, 113
    %v1377 = vsel %vm1376, %v1373, %v1375
    %v1378 = vsel %vm1376, %v1371, %v1373
    %v1379 = vsel %vm1376, %v1369, %v1371
    %v1380 = vsel %vm1376, %v1375, %v1369
    %s1381 = scalar_lea.vmem %s3, 24
    %v1382 = vld [vmem:[%s1381] sm:$0xf]
    %v1384 = vlaneseq
    %v1385 = vshrl.u32 %v1384, 7
    %v1386 = vsub.s32 0, %v1385
    %v1387 = vrot.slane %v1382, %v1386
    %v1388 = vlaneseq
    %v1389 = vshrl.u32 %v1388, 7
    %v1390 = vsub.s32 1, %v1389
    %v1391 = vrot.slane %v1382, %v1390
    %v1392 = vlaneseq
    %v1393 = vshrl.u32 %v1392, 7
    %v1394 = vsub.s32 2, %v1393
    %v1395 = vrot.slane %v1382, %v1394
    %v1396 = vlaneseq
    %v1397 = vshrl.u32 %v1396, 7
    %v1398 = vsub.s32 3, %v1397
    %v1399 = vrot.slane %v1382, %v1398
    %v1404 = vmul.f32 %v1379, %v1387
    %v1405 = vmul.f32 %v1378, %v1391
    %v1406 = vmul.f32 %v1377, %v1395
    %v1407 = vmul.f32 %v1380, %v1399
    %v1409 = vsel %vm29, %v1367, 0
    %v1412 = vsel %vm32, %v1404, 0
    %v1415 = vsel %vm32, %v1405, 0
    %v1418 = vsel %vm32, %v1406, 0
    %v1421 = vsel %vm32, %v1407, 0
    %1423 = vmatprep.subr.mxu0 %v1415
    %1424 = vmatpush1.msra.mxu0 %v1412
    %1425 = vmatprep.subr.mxu0 0.0
    %1426 = vmatpush1.msra.mxu0 0.0
    %1427 = vmatprep.subr.mxu0 0.0
    %1428 = vmatpush1.msra.mxu0 0.0
    %1429 = vmatprep.subr.mxu0 0.0
    %1430 = vmatpush1.msra.mxu0 0.0
    %1431 = vmatprep.subr.mxu0 0.0
    %1432 = vmatpush1.msra.mxu0 0.0
    %1433 = vmatprep.subr.mxu0 0.0
    %1434 = vmatpush1.msra.mxu0 0.0
    %1435 = vmatprep.subr.mxu0 0.0
    %1436 = vmatpush1.msra.mxu0 0.0
    %1437 = vmatprep.subr.mxu0 0.0
    %1438 = vmatpush1.msra.mxu0 0.0
    %1439 = vmatprep.subr.mxu0 0.0
    %1440 = vmatpush1.msra.mxu0 0.0
    %1441 = vmatprep.subr.mxu0 0.0
    %1442 = vmatpush1.msra.mxu0 0.0
    %1443 = vmatprep.subr.mxu0 0.0
    %1444 = vmatpush1.msra.mxu0 0.0
    %1445 = vmatprep.subr.mxu0 0.0
    %1446 = vmatpush1.msra.mxu0 0.0
    %1447 = vmatprep.subr.mxu0 0.0
    %1448 = vmatpush1.msra.mxu0 0.0
    %1449 = vmatprep.subr.mxu0 0.0
    %1450 = vmatpush1.msra.mxu0 0.0
    %1451 = vmatprep.subr.mxu0 0.0
    %1452 = vmatpush1.msra.mxu0 0.0
    %1453 = vmatprep.subr.mxu0 0.0
    %1454 = vmatpush1.msra.mxu0 0.0
    %1455 = vmatprep.subr.mxu0 0.0
    %1456 = vmatpush1.msra.mxu0 0.0
    %1457 = vmatprep.subr.mxu0 0.0
    %1458 = vmatpush1.msra.mxu0 0.0
    %1459 = vmatprep.subr.mxu0 0.0
    %1460 = vmatpush1.msra.mxu0 0.0
    %1461 = vmatprep.subr.mxu0 0.0
    %1462 = vmatpush1.msra.mxu0 0.0
    %1463 = vmatprep.subr.mxu0 0.0
    %1464 = vmatpush1.msra.mxu0 0.0
    %1465 = vmatprep.subr.mxu0 0.0
    %1466 = vmatpush1.msra.mxu0 0.0
    %1467 = vmatprep.subr.mxu0 0.0
    %1468 = vmatpush1.msra.mxu0 0.0
    %1469 = vmatprep.subr.mxu0 0.0
    %1470 = vmatpush1.msra.mxu0 0.0
    %1471 = vmatprep.subr.mxu0 0.0
    %1472 = vmatpush1.msra.mxu0 0.0
    %1473 = vmatprep.subr.mxu0 0.0
    %1474 = vmatpush1.msra.mxu0 0.0
    %1475 = vmatprep.subr.mxu0 0.0
    %1476 = vmatpush1.msra.mxu0 0.0
    %1477 = vmatprep.subr.mxu0 0.0
    %1478 = vmatpush1.msra.mxu0 0.0
    %1479 = vmatprep.subr.mxu0 0.0
    %1480 = vmatpush1.msra.mxu0 0.0
    %1481 = vmatprep.subr.mxu0 0.0
    %1482 = vmatpush1.msra.mxu0 0.0
    %1483 = vmatprep.subr.mxu0 0.0
    %1484 = vmatpush1.msra.mxu0 0.0
    %1485 = vmatprep.subr.mxu0 0.0
    %1486 = vmatpush1.msra.mxu0 0.0
    %1487 = vmatprep.mubr.f32.mxu0 0.0
    %1488 = vmatmul.mubr.f32.gmra.mrb[0].mxu0 %v1409
    %v1489 = vpop.f32.mrb[0].mxu0
    %v1490 = vadd.f32 0.0, %v1489
    %v1491 = vpop.f32.mrb[0].mxu0
    %v1492 = vadd.f32 0.0, %v1491
    %1493 = vdwg.mxu0
    %1494 = vmatprep.subr.mxu0 %v1421
    %1495 = vmatpush1.msra.mxu0 %v1418
    %1496 = vmatprep.subr.mxu0 0.0
    %1497 = vmatpush1.msra.mxu0 0.0
    %1498 = vmatprep.subr.mxu0 0.0
    %1499 = vmatpush1.msra.mxu0 0.0
    %1500 = vmatprep.subr.mxu0 0.0
    %1501 = vmatpush1.msra.mxu0 0.0
    %1502 = vmatprep.subr.mxu0 0.0
    %1503 = vmatpush1.msra.mxu0 0.0
    %1504 = vmatprep.subr.mxu0 0.0
    %1505 = vmatpush1.msra.mxu0 0.0
    %1506 = vmatprep.subr.mxu0 0.0
    %1507 = vmatpush1.msra.mxu0 0.0
    %1508 = vmatprep.subr.mxu0 0.0
    %1509 = vmatpush1.msra.mxu0 0.0
    %1510 = vmatprep.subr.mxu0 0.0
    %1511 = vmatpush1.msra.mxu0 0.0
    %1512 = vmatprep.subr.mxu0 0.0
    %1513 = vmatpush1.msra.mxu0 0.0
    %1514 = vmatprep.subr.mxu0 0.0
    %1515 = vmatpush1.msra.mxu0 0.0
    %1516 = vmatprep.subr.mxu0 0.0
    %1517 = vmatpush1.msra.mxu0 0.0
    %1518 = vmatprep.subr.mxu0 0.0
    %1519 = vmatpush1.msra.mxu0 0.0
    %1520 = vmatprep.subr.mxu0 0.0
    %1521 = vmatpush1.msra.mxu0 0.0
    %1522 = vmatprep.subr.mxu0 0.0
    %1523 = vmatpush1.msra.mxu0 0.0
    %1524 = vmatprep.subr.mxu0 0.0
    %1525 = vmatpush1.msra.mxu0 0.0
    %1526 = vmatprep.subr.mxu0 0.0
    %1527 = vmatpush1.msra.mxu0 0.0
    %1528 = vmatprep.subr.mxu0 0.0
    %1529 = vmatpush1.msra.mxu0 0.0
    %1530 = vmatprep.subr.mxu0 0.0
    %1531 = vmatpush1.msra.mxu0 0.0
    %1532 = vmatprep.subr.mxu0 0.0
    %1533 = vmatpush1.msra.mxu0 0.0
    %1534 = vmatprep.subr.mxu0 0.0
    %1535 = vmatpush1.msra.mxu0 0.0
    %1536 = vmatprep.subr.mxu0 0.0
    %1537 = vmatpush1.msra.mxu0 0.0
    %1538 = vmatprep.subr.mxu0 0.0
    %1539 = vmatpush1.msra.mxu0 0.0
    %1540 = vmatprep.subr.mxu0 0.0
    %1541 = vmatpush1.msra.mxu0 0.0
    %1542 = vmatprep.subr.mxu0 0.0
    %1543 = vmatpush1.msra.mxu0 0.0
    %1544 = vmatprep.subr.mxu0 0.0
    %1545 = vmatpush1.msra.mxu0 0.0
    %1546 = vmatprep.subr.mxu0 0.0
    %1547 = vmatpush1.msra.mxu0 0.0
    %1548 = vmatprep.subr.mxu0 0.0
    %1549 = vmatpush1.msra.mxu0 0.0
    %1550 = vmatprep.subr.mxu0 0.0
    %1551 = vmatpush1.msra.mxu0 0.0
    %1552 = vmatprep.subr.mxu0 0.0
    %1553 = vmatpush1.msra.mxu0 0.0
    %1554 = vmatprep.subr.mxu0 0.0
    %1555 = vmatpush1.msra.mxu0 0.0
    %1556 = vmatprep.subr.mxu0 0.0
    %1557 = vmatpush1.msra.mxu0 0.0
    %1558 = vmatprep.mubr.f32.mxu0 0.0
    %1559 = vmatmul.mubr.f32.gmra.mrb[0].mxu0 %v1409
    %v1560 = vpop.f32.mrb[0].mxu0
    %v1561 = vadd.f32 0.0, %v1560
    %v1562 = vpop.f32.mrb[0].mxu0
    %v1563 = vadd.f32 0.0, %v1562
    %1564 = vdwg.mxu0
    %v1565 = vadd.f32 %v1362, %v1490
    %v1566 = vadd.f32 %v1363, %v1492
    %v1567 = vadd.f32 %v1364, %v1561
    %v1568 = vadd.f32 %v1365, %v1563
    %s1569 = scalar_lea.vmem %s2, 56
    %v1570 = vld [vmem:[%s1569] sm:$0xff]
    %1571 = vrot.lane.b32.xlu0 %v191, 112
    %v1572 = vpop.permute.xlu0 %1571
    %1573 = vrot.lane.b32.xlu0 %v192, 112
    %v1574 = vpop.permute.xlu0 %1573
    %1575 = vrot.lane.b32.xlu0 %v193, 112
    %v1576 = vpop.permute.xlu0 %1575
    %1577 = vrot.lane.b32.xlu0 %v194, 112
    %v1578 = vpop.permute.xlu0 %1577
    %vm1579 = vcmp.lt.s32.totalorder %v207, 112
    %v1580 = vsel %vm1579, %v1576, %v1578
    %v1581 = vsel %vm1579, %v1574, %v1576
    %v1582 = vsel %vm1579, %v1572, %v1574
    %v1583 = vsel %vm1579, %v1578, %v1572
    %s1584 = scalar_lea.vmem %s3, 28
    %v1585 = vld [vmem:[%s1584] sm:$0xf]
    %v1587 = vlaneseq
    %v1588 = vshrl.u32 %v1587, 7
    %v1589 = vsub.s32 0, %v1588
    %v1590 = vrot.slane %v1585, %v1589
    %v1591 = vlaneseq
    %v1592 = vshrl.u32 %v1591, 7
    %v1593 = vsub.s32 1, %v1592
    %v1594 = vrot.slane %v1585, %v1593
    %v1595 = vlaneseq
    %v1596 = vshrl.u32 %v1595, 7
    %v1597 = vsub.s32 2, %v1596
    %v1598 = vrot.slane %v1585, %v1597
    %v1599 = vlaneseq
    %v1600 = vshrl.u32 %v1599, 7
    %v1601 = vsub.s32 3, %v1600
    %v1602 = vrot.slane %v1585, %v1601
    %v1607 = vmul.f32 %v1582, %v1590
    %v1608 = vmul.f32 %v1581, %v1594
    %v1609 = vmul.f32 %v1580, %v1598
    %v1610 = vmul.f32 %v1583, %v1602
    %v1612 = vsel %vm29, %v1570, 0
    %v1615 = vsel %vm32, %v1607, 0
    %v1618 = vsel %vm32, %v1608, 0
    %v1621 = vsel %vm32, %v1609, 0
    %v1624 = vsel %vm32, %v1610, 0
    %1626 = vmatprep.subr.mxu0 %v1618
    %1627 = vmatpush1.msra.mxu0 %v1615
    %1628 = vmatprep.subr.mxu0 0.0
    %1629 = vmatpush1.msra.mxu0 0.0
    %1630 = vmatprep.subr.mxu0 0.0
    %1631 = vmatpush1.msra.mxu0 0.0
    %1632 = vmatprep.subr.mxu0 0.0
    %1633 = vmatpush1.msra.mxu0 0.0
    %1634 = vmatprep.subr.mxu0 0.0
    %1635 = vmatpush1.msra.mxu0 0.0
    %1636 = vmatprep.subr.mxu0 0.0
    %1637 = vmatpush1.msra.mxu0 0.0
    %1638 = vmatprep.subr.mxu0 0.0
    %1639 = vmatpush1.msra.mxu0 0.0
    %1640 = vmatprep.subr.mxu0 0.0
    %1641 = vmatpush1.msra.mxu0 0.0
    %1642 = vmatprep.subr.mxu0 0.0
    %1643 = vmatpush1.msra.mxu0 0.0
    %1644 = vmatprep.subr.mxu0 0.0
    %1645 = vmatpush1.msra.mxu0 0.0
    %1646 = vmatprep.subr.mxu0 0.0
    %1647 = vmatpush1.msra.mxu0 0.0
    %1648 = vmatprep.subr.mxu0 0.0
    %1649 = vmatpush1.msra.mxu0 0.0
    %1650 = vmatprep.subr.mxu0 0.0
    %1651 = vmatpush1.msra.mxu0 0.0
    %1652 = vmatprep.subr.mxu0 0.0
    %1653 = vmatpush1.msra.mxu0 0.0
    %1654 = vmatprep.subr.mxu0 0.0
    %1655 = vmatpush1.msra.mxu0 0.0
    %1656 = vmatprep.subr.mxu0 0.0
    %1657 = vmatpush1.msra.mxu0 0.0
    %1658 = vmatprep.subr.mxu0 0.0
    %1659 = vmatpush1.msra.mxu0 0.0
    %1660 = vmatprep.subr.mxu0 0.0
    %1661 = vmatpush1.msra.mxu0 0.0
    %1662 = vmatprep.subr.mxu0 0.0
    %1663 = vmatpush1.msra.mxu0 0.0
    %1664 = vmatprep.subr.mxu0 0.0
    %1665 = vmatpush1.msra.mxu0 0.0
    %1666 = vmatprep.subr.mxu0 0.0
    %1667 = vmatpush1.msra.mxu0 0.0
    %1668 = vmatprep.subr.mxu0 0.0
    %1669 = vmatpush1.msra.mxu0 0.0
    %1670 = vmatprep.subr.mxu0 0.0
    %1671 = vmatpush1.msra.mxu0 0.0
    %1672 = vmatprep.subr.mxu0 0.0
    %1673 = vmatpush1.msra.mxu0 0.0
    %1674 = vmatprep.subr.mxu0 0.0
    %1675 = vmatpush1.msra.mxu0 0.0
    %1676 = vmatprep.subr.mxu0 0.0
    %1677 = vmatpush1.msra.mxu0 0.0
    %1678 = vmatprep.subr.mxu0 0.0
    %1679 = vmatpush1.msra.mxu0 0.0
    %1680 = vmatprep.subr.mxu0 0.0
    %1681 = vmatpush1.msra.mxu0 0.0
    %1682 = vmatprep.subr.mxu0 0.0
    %1683 = vmatpush1.msra.mxu0 0.0
    %1684 = vmatprep.subr.mxu0 0.0
    %1685 = vmatpush1.msra.mxu0 0.0
    %1686 = vmatprep.subr.mxu0 0.0
    %1687 = vmatpush1.msra.mxu0 0.0
    %1688 = vmatprep.subr.mxu0 0.0
    %1689 = vmatpush1.msra.mxu0 0.0
    %1690 = vmatprep.mubr.f32.mxu0 0.0
    %1691 = vmatmul.mubr.f32.gmra.mrb[0].mxu0 %v1612
    %v1692 = vpop.f32.mrb[0].mxu0
    %v1693 = vadd.f32 0.0, %v1692
    %v1694 = vpop.f32.mrb[0].mxu0
    %v1695 = vadd.f32 0.0, %v1694
    %1696 = vdwg.mxu0
    %1697 = vmatprep.subr.mxu0 %v1624
    %1698 = vmatpush1.msra.mxu0 %v1621
    %1699 = vmatprep.subr.mxu0 0.0
    %1700 = vmatpush1.msra.mxu0 0.0
    %1701 = vmatprep.subr.mxu0 0.0
    %1702 = vmatpush1.msra.mxu0 0.0
    %1703 = vmatprep.subr.mxu0 0.0
    %1704 = vmatpush1.msra.mxu0 0.0
    %1705 = vmatprep.subr.mxu0 0.0
    %1706 = vmatpush1.msra.mxu0 0.0
    %1707 = vmatprep.subr.mxu0 0.0
    %1708 = vmatpush1.msra.mxu0 0.0
    %1709 = vmatprep.subr.mxu0 0.0
    %1710 = vmatpush1.msra.mxu0 0.0
    %1711 = vmatprep.subr.mxu0 0.0
    %1712 = vmatpush1.msra.mxu0 0.0
    %1713 = vmatprep.subr.mxu0 0.0
    %1714 = vmatpush1.msra.mxu0 0.0
    %1715 = vmatprep.subr.mxu0 0.0
    %1716 = vmatpush1.msra.mxu0 0.0
    %1717 = vmatprep.subr.mxu0 0.0
    %1718 = vmatpush1.msra.mxu0 0.0
    %1719 = vmatprep.subr.mxu0 0.0
    %1720 = vmatpush1.msra.mxu0 0.0
    %1721 = vmatprep.subr.mxu0 0.0
    %1722 = vmatpush1.msra.mxu0 0.0
    %1723 = vmatprep.subr.mxu0 0.0
    %1724 = vmatpush1.msra.mxu0 0.0
    %1725 = vmatprep.subr.mxu0 0.0
    %1726 = vmatpush1.msra.mxu0 0.0
    %1727 = vmatprep.subr.mxu0 0.0
    %1728 = vmatpush1.msra.mxu0 0.0
    %1729 = vmatprep.subr.mxu0 0.0
    %1730 = vmatpush1.msra.mxu0 0.0
    %1731 = vmatprep.subr.mxu0 0.0
    %1732 = vmatpush1.msra.mxu0 0.0
    %1733 = vmatprep.subr.mxu0 0.0
    %1734 = vmatpush1.msra.mxu0 0.0
    %1735 = vmatprep.subr.mxu0 0.0
    %1736 = vmatpush1.msra.mxu0 0.0
    %1737 = vmatprep.subr.mxu0 0.0
    %1738 = vmatpush1.msra.mxu0 0.0
    %1739 = vmatprep.subr.mxu0 0.0
    %1740 = vmatpush1.msra.mxu0 0.0
    %1741 = vmatprep.subr.mxu0 0.0
    %1742 = vmatpush1.msra.mxu0 0.0
    %1743 = vmatprep.subr.mxu0 0.0
    %1744 = vmatpush1.msra.mxu0 0.0
    %1745 = vmatprep.subr.mxu0 0.0
    %1746 = vmatpush1.msra.mxu0 0.0
    %1747 = vmatprep.subr.mxu0 0.0
    %1748 = vmatpush1.msra.mxu0 0.0
    %1749 = vmatprep.subr.mxu0 0.0
    %1750 = vmatpush1.msra.mxu0 0.0
    %1751 = vmatprep.subr.mxu0 0.0
    %1752 = vmatpush1.msra.mxu0 0.0
    %1753 = vmatprep.subr.mxu0 0.0
    %1754 = vmatpush1.msra.mxu0 0.0
    %1755 = vmatprep.subr.mxu0 0.0
    %1756 = vmatpush1.msra.mxu0 0.0
    %1757 = vmatprep.subr.mxu0 0.0
    %1758 = vmatpush1.msra.mxu0 0.0
    %1759 = vmatprep.subr.mxu0 0.0
    %1760 = vmatpush1.msra.mxu0 0.0
    %1761 = vmatprep.mubr.f32.mxu0 0.0
    %1762 = vmatmul.mubr.f32.gmra.mrb[0].mxu0 %v1612
    %v1763 = vpop.f32.mrb[0].mxu0
    %v1764 = vadd.f32 0.0, %v1763
    %v1765 = vpop.f32.mrb[0].mxu0
    %v1766 = vadd.f32 0.0, %v1765
    %1767 = vdwg.mxu0
    %v1768 = vadd.f32 %v1565, %v1693
    %v1769 = vadd.f32 %v1566, %v1695
    %v1770 = vadd.f32 %v1567, %v1764
    %v1771 = vadd.f32 %v1568, %v1766
    %s1772 = scalar_lea.vmem %s2, 64
    %v1773 = vld [vmem:[%s1772] sm:$0xff]
    %1774 = vrot.lane.b32.xlu0 %v191, 111
    %v1775 = vpop.permute.xlu0 %1774
    %1776 = vrot.lane.b32.xlu0 %v192, 111
    %v1777 = vpop.permute.xlu0 %1776
    %1778 = vrot.lane.b32.xlu0 %v193, 111
    %v1779 = vpop.permute.xlu0 %1778
    %1780 = vrot.lane.b32.xlu0 %v194, 111
    %v1781 = vpop.permute.xlu0 %1780
    %vm1782 = vcmp.lt.s32.totalorder %v207, 111
    %v1783 = vsel %vm1782, %v1779, %v1781
    %v1784 = vsel %vm1782, %v1777, %v1779
    %v1785 = vsel %vm1782, %v1775, %v1777
    %v1786 = vsel %vm1782, %v1781, %v1775
    %s1787 = scalar_lea.vmem %s3, 32
    %v1788 = vld [vmem:[%s1787] sm:$0xf]
    %v1790 = vlaneseq
    %v1791 = vshrl.u32 %v1790, 7
    %v1792 = vsub.s32 0, %v1791
    %v1793 = vrot.slane %v1788, %v1792
    %v1794 = vlaneseq
    %v1795 = vshrl.u32 %v1794, 7
    %v1796 = vsub.s32 1, %v1795
    %v1797 = vrot.slane %v1788, %v1796
    %v1798 = vlaneseq
    %v1799 = vshrl.u32 %v1798, 7
    %v1800 = vsub.s32 2, %v1799
    %v1801 = vrot.slane %v1788, %v1800
    %v1802 = vlaneseq
    %v1803 = vshrl.u32 %v1802, 7
    %v1804 = vsub.s32 3, %v1803
    %v1805 = vrot.slane %v1788, %v1804
    %v1810 = vmul.f32 %v1785, %v1793
    %v1811 = vmul.f32 %v1784, %v1797
    %v1812 = vmul.f32 %v1783, %v1801
    %v1813 = vmul.f32 %v1786, %v1805
    %v1815 = vsel %vm29, %v1773, 0
    %v1818 = vsel %vm32, %v1810, 0
    %v1821 = vsel %vm32, %v1811, 0
    %v1824 = vsel %vm32, %v1812, 0
    %v1827 = vsel %vm32, %v1813, 0
    %1829 = vmatprep.subr.mxu0 %v1821
    %1830 = vmatpush1.msra.mxu0 %v1818
    %1831 = vmatprep.subr.mxu0 0.0
    %1832 = vmatpush1.msra.mxu0 0.0
    %1833 = vmatprep.subr.mxu0 0.0
    %1834 = vmatpush1.msra.mxu0 0.0
    %1835 = vmatprep.subr.mxu0 0.0
    %1836 = vmatpush1.msra.mxu0 0.0
    %1837 = vmatprep.subr.mxu0 0.0
    %1838 = vmatpush1.msra.mxu0 0.0
    %1839 = vmatprep.subr.mxu0 0.0
    %1840 = vmatpush1.msra.mxu0 0.0
    %1841 = vmatprep.subr.mxu0 0.0
    %1842 = vmatpush1.msra.mxu0 0.0
    %1843 = vmatprep.subr.mxu0 0.0
    %1844 = vmatpush1.msra.mxu0 0.0
    %1845 = vmatprep.subr.mxu0 0.0
    %1846 = vmatpush1.msra.mxu0 0.0
    %1847 = vmatprep.subr.mxu0 0.0
    %1848 = vmatpush1.msra.mxu0 0.0
    %1849 = vmatprep.subr.mxu0 0.0
    %1850 = vmatpush1.msra.mxu0 0.0
    %1851 = vmatprep.subr.mxu0 0.0
    %1852 = vmatpush1.msra.mxu0 0.0
    %1853 = vmatprep.subr.mxu0 0.0
    %1854 = vmatpush1.msra.mxu0 0.0
    %1855 = vmatprep.subr.mxu0 0.0
    %1856 = vmatpush1.msra.mxu0 0.0
    %1857 = vmatprep.subr.mxu0 0.0
    %1858 = vmatpush1.msra.mxu0 0.0
    %1859 = vmatprep.subr.mxu0 0.0
    %1860 = vmatpush1.msra.mxu0 0.0
    %1861 = vmatprep.subr.mxu0 0.0
    %1862 = vmatpush1.msra.mxu0 0.0
    %1863 = vmatprep.subr.mxu0 0.0
    %1864 = vmatpush1.msra.mxu0 0.0
    %1865 = vmatprep.subr.mxu0 0.0
    %1866 = vmatpush1.msra.mxu0 0.0
    %1867 = vmatprep.subr.mxu0 0.0
    %1868 = vmatpush1.msra.mxu0 0.0
    %1869 = vmatprep.subr.mxu0 0.0
    %1870 = vmatpush1.msra.mxu0 0.0
    %1871 = vmatprep.subr.mxu0 0.0
    %1872 = vmatpush1.msra.mxu0 0.0
    %1873 = vmatprep.subr.mxu0 0.0
    %1874 = vmatpush1.msra.mxu0 0.0
    %1875 = vmatprep.subr.mxu0 0.0
    %1876 = vmatpush1.msra.mxu0 0.0
    %1877 = vmatprep.subr.mxu0 0.0
    %1878 = vmatpush1.msra.mxu0 0.0
    %1879 = vmatprep.subr.mxu0 0.0
    %1880 = vmatpush1.msra.mxu0 0.0
    %1881 = vmatprep.subr.mxu0 0.0
    %1882 = vmatpush1.msra.mxu0 0.0
    %1883 = vmatprep.subr.mxu0 0.0
    %1884 = vmatpush1.msra.mxu0 0.0
    %1885 = vmatprep.subr.mxu0 0.0
    %1886 = vmatpush1.msra.mxu0 0.0
    %1887 = vmatprep.subr.mxu0 0.0
    %1888 = vmatpush1.msra.mxu0 0.0
    %1889 = vmatprep.subr.mxu0 0.0
    %1890 = vmatpush1.msra.mxu0 0.0
    %1891 = vmatprep.subr.mxu0 0.0
    %1892 = vmatpush1.msra.mxu0 0.0
    %1893 = vmatprep.mubr.f32.mxu0 0.0
    %1894 = vmatmul.mubr.f32.gmra.mrb[0].mxu0 %v1815
    %v1895 = vpop.f32.mrb[0].mxu0
    %v1896 = vadd.f32 0.0, %v1895
    %v1897 = vpop.f32.mrb[0].mxu0
    %v1898 = vadd.f32 0.0, %v1897
    %1899 = vdwg.mxu0
    %1900 = vmatprep.subr.mxu0 %v1827
    %1901 = vmatpush1.msra.mxu0 %v1824
    %1902 = vmatprep.subr.mxu0 0.0
    %1903 = vmatpush1.msra.mxu0 0.0
    %1904 = vmatprep.subr.mxu0 0.0
    %1905 = vmatpush1.msra.mxu0 0.0
    %1906 = vmatprep.subr.mxu0 0.0
    %1907 = vmatpush1.msra.mxu0 0.0
    %1908 = vmatprep.subr.mxu0 0.0
    %1909 = vmatpush1.msra.mxu0 0.0
    %1910 = vmatprep.subr.mxu0 0.0
    %1911 = vmatpush1.msra.mxu0 0.0
    %1912 = vmatprep.subr.mxu0 0.0
    %1913 = vmatpush1.msra.mxu0 0.0
    %1914 = vmatprep.subr.mxu0 0.0
    %1915 = vmatpush1.msra.mxu0 0.0
    %1916 = vmatprep.subr.mxu0 0.0
    %1917 = vmatpush1.msra.mxu0 0.0
    %1918 = vmatprep.subr.mxu0 0.0
    %1919 = vmatpush1.msra.mxu0 0.0
    %1920 = vmatprep.subr.mxu0 0.0
    %1921 = vmatpush1.msra.mxu0 0.0
    %1922 = vmatprep.subr.mxu0 0.0
    %1923 = vmatpush1.msra.mxu0 0.0
    %1924 = vmatprep.subr.mxu0 0.0
    %1925 = vmatpush1.msra.mxu0 0.0
    %1926 = vmatprep.subr.mxu0 0.0
    %1927 = vmatpush1.msra.mxu0 0.0
    %1928 = vmatprep.subr.mxu0 0.0
    %1929 = vmatpush1.msra.mxu0 0.0
    %1930 = vmatprep.subr.mxu0 0.0
    %1931 = vmatpush1.msra.mxu0 0.0
    %1932 = vmatprep.subr.mxu0 0.0
    %1933 = vmatpush1.msra.mxu0 0.0
    %1934 = vmatprep.subr.mxu0 0.0
    %1935 = vmatpush1.msra.mxu0 0.0
    %1936 = vmatprep.subr.mxu0 0.0
    %1937 = vmatpush1.msra.mxu0 0.0
    %1938 = vmatprep.subr.mxu0 0.0
    %1939 = vmatpush1.msra.mxu0 0.0
    %1940 = vmatprep.subr.mxu0 0.0
    %1941 = vmatpush1.msra.mxu0 0.0
    %1942 = vmatprep.subr.mxu0 0.0
    %1943 = vmatpush1.msra.mxu0 0.0
    %1944 = vmatprep.subr.mxu0 0.0
    %1945 = vmatpush1.msra.mxu0 0.0
    %1946 = vmatprep.subr.mxu0 0.0
    %1947 = vmatpush1.msra.mxu0 0.0
    %1948 = vmatprep.subr.mxu0 0.0
    %1949 = vmatpush1.msra.mxu0 0.0
    %1950 = vmatprep.subr.mxu0 0.0
    %1951 = vmatpush1.msra.mxu0 0.0
    %1952 = vmatprep.subr.mxu0 0.0
    %1953 = vmatpush1.msra.mxu0 0.0
    %1954 = vmatprep.subr.mxu0 0.0
    %1955 = vmatpush1.msra.mxu0 0.0
    %1956 = vmatprep.subr.mxu0 0.0
    %1957 = vmatpush1.msra.mxu0 0.0
    %1958 = vmatprep.subr.mxu0 0.0
    %1959 = vmatpush1.msra.mxu0 0.0
    %1960 = vmatprep.subr.mxu0 0.0
    %1961 = vmatpush1.msra.mxu0 0.0
    %1962 = vmatprep.subr.mxu0 0.0
    %1963 = vmatpush1.msra.mxu0 0.0
    %1964 = vmatprep.mubr.f32.mxu0 0.0
    %1965 = vmatmul.mubr.f32.gmra.mrb[0].mxu0 %v1815
    %v1966 = vpop.f32.mrb[0].mxu0
    %v1967 = vadd.f32 0.0, %v1966
    %v1968 = vpop.f32.mrb[0].mxu0
    %v1969 = vadd.f32 0.0, %v1968
    %1970 = vdwg.mxu0
    %v1971 = vadd.f32 %v1768, %v1896
    %v1972 = vadd.f32 %v1769, %v1898
    %v1973 = vadd.f32 %v1770, %v1967
    %v1974 = vadd.f32 %v1771, %v1969
    %s1975 = scalar_lea.vmem %s2, 72
    %v1976 = vld [vmem:[%s1975] sm:$0xff]
    %1977 = vrot.lane.b32.xlu0 %v191, 34
    %v1978 = vpop.permute.xlu0 %1977
    %1979 = vrot.lane.b32.xlu0 %v192, 34
    %v1980 = vpop.permute.xlu0 %1979
    %1981 = vrot.lane.b32.xlu0 %v193, 34
    %v1982 = vpop.permute.xlu0 %1981
    %1983 = vrot.lane.b32.xlu0 %v194, 34
    %v1984 = vpop.permute.xlu0 %1983
    %vm1985 = vcmp.lt.s32.totalorder %v207, 34
    %v1986 = vsel %vm1985, %v1982, %v1984
    %v1987 = vsel %vm1985, %v1980, %v1982
    %v1988 = vsel %vm1985, %v1978, %v1980
    %v1989 = vsel %vm1985, %v1984, %v1978
    %s1990 = scalar_lea.vmem %s3, 36
    %v1991 = vld [vmem:[%s1990] sm:$0xf]
    %v1993 = vlaneseq
    %v1994 = vshrl.u32 %v1993, 7
    %v1995 = vsub.s32 0, %v1994
    %v1996 = vrot.slane %v1991, %v1995
    %v1997 = vlaneseq
    %v1998 = vshrl.u32 %v1997, 7
    %v1999 = vsub.s32 1, %v1998
    %v2000 = vrot.slane %v1991, %v1999
    %v2001 = vlaneseq
    %v2002 = vshrl.u32 %v2001, 7
    %v2003 = vsub.s32 2, %v2002
    %v2004 = vrot.slane %v1991, %v2003
    %v2005 = vlaneseq
    %v2006 = vshrl.u32 %v2005, 7
    %v2007 = vsub.s32 3, %v2006
    %v2008 = vrot.slane %v1991, %v2007
    %v2013 = vmul.f32 %v1989, %v1996
    %v2014 = vmul.f32 %v1988, %v2000
    %v2015 = vmul.f32 %v1987, %v2004
    %v2016 = vmul.f32 %v1986, %v2008
    %v2018 = vsel %vm29, %v1976, 0
    %v2021 = vsel %vm32, %v2013, 0
    %v2024 = vsel %vm32, %v2014, 0
    %v2027 = vsel %vm32, %v2015, 0
    %v2030 = vsel %vm32, %v2016, 0
    %2032 = vmatprep.subr.mxu0 %v2024
    %2033 = vmatpush1.msra.mxu0 %v2021
    %2034 = vmatprep.subr.mxu0 0.0
    %2035 = vmatpush1.msra.mxu0 0.0
    %2036 = vmatprep.subr.mxu0 0.0
    %2037 = vmatpush1.msra.mxu0 0.0
    %2038 = vmatprep.subr.mxu0 0.0
    %2039 = vmatpush1.msra.mxu0 0.0
    %2040 = vmatprep.subr.mxu0 0.0
    %2041 = vmatpush1.msra.mxu0 0.0
    %2042 = vmatprep.subr.mxu0 0.0
    %2043 = vmatpush1.msra.mxu0 0.0
    %2044 = vmatprep.subr.mxu0 0.0
    %2045 = vmatpush1.msra.mxu0 0.0
    %2046 = vmatprep.subr.mxu0 0.0
    %2047 = vmatpush1.msra.mxu0 0.0
    %2048 = vmatprep.subr.mxu0 0.0
    %2049 = vmatpush1.msra.mxu0 0.0
    %2050 = vmatprep.subr.mxu0 0.0
    %2051 = vmatpush1.msra.mxu0 0.0
    %2052 = vmatprep.subr.mxu0 0.0
    %2053 = vmatpush1.msra.mxu0 0.0
    %2054 = vmatprep.subr.mxu0 0.0
    %2055 = vmatpush1.msra.mxu0 0.0
    %2056 = vmatprep.subr.mxu0 0.0
    %2057 = vmatpush1.msra.mxu0 0.0
    %2058 = vmatprep.subr.mxu0 0.0
    %2059 = vmatpush1.msra.mxu0 0.0
    %2060 = vmatprep.subr.mxu0 0.0
    %2061 = vmatpush1.msra.mxu0 0.0
    %2062 = vmatprep.subr.mxu0 0.0
    %2063 = vmatpush1.msra.mxu0 0.0
    %2064 = vmatprep.subr.mxu0 0.0
    %2065 = vmatpush1.msra.mxu0 0.0
    %2066 = vmatprep.subr.mxu0 0.0
    %2067 = vmatpush1.msra.mxu0 0.0
    %2068 = vmatprep.subr.mxu0 0.0
    %2069 = vmatpush1.msra.mxu0 0.0
    %2070 = vmatprep.subr.mxu0 0.0
    %2071 = vmatpush1.msra.mxu0 0.0
    %2072 = vmatprep.subr.mxu0 0.0
    %2073 = vmatpush1.msra.mxu0 0.0
    %2074 = vmatprep.subr.mxu0 0.0
    %2075 = vmatpush1.msra.mxu0 0.0
    %2076 = vmatprep.subr.mxu0 0.0
    %2077 = vmatpush1.msra.mxu0 0.0
    %2078 = vmatprep.subr.mxu0 0.0
    %2079 = vmatpush1.msra.mxu0 0.0
    %2080 = vmatprep.subr.mxu0 0.0
    %2081 = vmatpush1.msra.mxu0 0.0
    %2082 = vmatprep.subr.mxu0 0.0
    %2083 = vmatpush1.msra.mxu0 0.0
    %2084 = vmatprep.subr.mxu0 0.0
    %2085 = vmatpush1.msra.mxu0 0.0
    %2086 = vmatprep.subr.mxu0 0.0
    %2087 = vmatpush1.msra.mxu0 0.0
    %2088 = vmatprep.subr.mxu0 0.0
    %2089 = vmatpush1.msra.mxu0 0.0
    %2090 = vmatprep.subr.mxu0 0.0
    %2091 = vmatpush1.msra.mxu0 0.0
    %2092 = vmatprep.subr.mxu0 0.0
    %2093 = vmatpush1.msra.mxu0 0.0
    %2094 = vmatprep.subr.mxu0 0.0
    %2095 = vmatpush1.msra.mxu0 0.0
    %2096 = vmatprep.mubr.f32.mxu0 0.0
    %2097 = vmatmul.mubr.f32.gmra.mrb[0].mxu0 %v2018
    %v2098 = vpop.f32.mrb[0].mxu0
    %v2099 = vadd.f32 0.0, %v2098
    %v2100 = vpop.f32.mrb[0].mxu0
    %v2101 = vadd.f32 0.0, %v2100
    %2102 = vdwg.mxu0
    %2103 = vmatprep.subr.mxu0 %v2030
    %2104 = vmatpush1.msra.mxu0 %v2027
    %2105 = vmatprep.subr.mxu0 0.0
    %2106 = vmatpush1.msra.mxu0 0.0
    %2107 = vmatprep.subr.mxu0 0.0
    %2108 = vmatpush1.msra.mxu0 0.0
    %2109 = vmatprep.subr.mxu0 0.0
    %2110 = vmatpush1.msra.mxu0 0.0
    %2111 = vmatprep.subr.mxu0 0.0
    %2112 = vmatpush1.msra.mxu0 0.0
    %2113 = vmatprep.subr.mxu0 0.0
    %2114 = vmatpush1.msra.mxu0 0.0
    %2115 = vmatprep.subr.mxu0 0.0
    %2116 = vmatpush1.msra.mxu0 0.0
    %2117 = vmatprep.subr.mxu0 0.0
    %2118 = vmatpush1.msra.mxu0 0.0
    %2119 = vmatprep.subr.mxu0 0.0
    %2120 = vmatpush1.msra.mxu0 0.0
    %2121 = vmatprep.subr.mxu0 0.0
    %2122 = vmatpush1.msra.mxu0 0.0
    %2123 = vmatprep.subr.mxu0 0.0
    %2124 = vmatpush1.msra.mxu0 0.0
    %2125 = vmatprep.subr.mxu0 0.0
    %2126 = vmatpush1.msra.mxu0 0.0
    %2127 = vmatprep.subr.mxu0 0.0
    %2128 = vmatpush1.msra.mxu0 0.0
    %2129 = vmatprep.subr.mxu0 0.0
    %2130 = vmatpush1.msra.mxu0 0.0
    %2131 = vmatprep.subr.mxu0 0.0
    %2132 = vmatpush1.msra.mxu0 0.0
    %2133 = vmatprep.subr.mxu0 0.0
    %2134 = vmatpush1.msra.mxu0 0.0
    %2135 = vmatprep.subr.mxu0 0.0
    %2136 = vmatpush1.msra.mxu0 0.0
    %2137 = vmatprep.subr.mxu0 0.0
    %2138 = vmatpush1.msra.mxu0 0.0
    %2139 = vmatprep.subr.mxu0 0.0
    %2140 = vmatpush1.msra.mxu0 0.0
    %2141 = vmatprep.subr.mxu0 0.0
    %2142 = vmatpush1.msra.mxu0 0.0
    %2143 = vmatprep.subr.mxu0 0.0
    %2144 = vmatpush1.msra.mxu0 0.0
    %2145 = vmatprep.subr.mxu0 0.0
    %2146 = vmatpush1.msra.mxu0 0.0
    %2147 = vmatprep.subr.mxu0 0.0
    %2148 = vmatpush1.msra.mxu0 0.0
    %2149 = vmatprep.subr.mxu0 0.0
    %2150 = vmatpush1.msra.mxu0 0.0
    %2151 = vmatprep.subr.mxu0 0.0
    %2152 = vmatpush1.msra.mxu0 0.0
    %2153 = vmatprep.subr.mxu0 0.0
    %2154 = vmatpush1.msra.mxu0 0.0
    %2155 = vmatprep.subr.mxu0 0.0
    %2156 = vmatpush1.msra.mxu0 0.0
    %2157 = vmatprep.subr.mxu0 0.0
    %2158 = vmatpush1.msra.mxu0 0.0
    %2159 = vmatprep.subr.mxu0 0.0
    %2160 = vmatpush1.msra.mxu0 0.0
    %2161 = vmatprep.subr.mxu0 0.0
    %2162 = vmatpush1.msra.mxu0 0.0
    %2163 = vmatprep.subr.mxu0 0.0
    %2164 = vmatpush1.msra.mxu0 0.0
    %2165 = vmatprep.subr.mxu0 0.0
    %2166 = vmatpush1.msra.mxu0 0.0
    %2167 = vmatprep.mubr.f32.mxu0 0.0
    %2168 = vmatmul.mubr.f32.gmra.mrb[0].mxu0 %v2018
    %v2169 = vpop.f32.mrb[0].mxu0
    %v2170 = vadd.f32 0.0, %v2169
    %v2171 = vpop.f32.mrb[0].mxu0
    %v2172 = vadd.f32 0.0, %v2171
    %2173 = vdwg.mxu0
    %v2174 = vadd.f32 %v1971, %v2099
    %v2175 = vadd.f32 %v1972, %v2101
    %v2176 = vadd.f32 %v1973, %v2170
    %v2177 = vadd.f32 %v1974, %v2172
    %s2178 = scalar_lea.vmem %s2, 80
    %v2179 = vld [vmem:[%s2178] sm:$0xff]
    %2180 = vrot.lane.b32.xlu0 %v191, 32
    %v2181 = vpop.permute.xlu0 %2180
    %2182 = vrot.lane.b32.xlu0 %v192, 32
    %v2183 = vpop.permute.xlu0 %2182
    %2184 = vrot.lane.b32.xlu0 %v193, 32
    %v2185 = vpop.permute.xlu0 %2184
    %2186 = vrot.lane.b32.xlu0 %v194, 32
    %v2187 = vpop.permute.xlu0 %2186
    %vm2188 = vcmp.lt.s32.totalorder %v207, 32
    %v2189 = vsel %vm2188, %v2185, %v2187
    %v2190 = vsel %vm2188, %v2183, %v2185
    %v2191 = vsel %vm2188, %v2181, %v2183
    %v2192 = vsel %vm2188, %v2187, %v2181
    %s2193 = scalar_lea.vmem %s3, 40
    %v2194 = vld [vmem:[%s2193] sm:$0xf]
    %v2196 = vlaneseq
    %v2197 = vshrl.u32 %v2196, 7
    %v2198 = vsub.s32 0, %v2197
    %v2199 = vrot.slane %v2194, %v2198
    %v2200 = vlaneseq
    %v2201 = vshrl.u32 %v2200, 7
    %v2202 = vsub.s32 1, %v2201
    %v2203 = vrot.slane %v2194, %v2202
    %v2204 = vlaneseq
    %v2205 = vshrl.u32 %v2204, 7
    %v2206 = vsub.s32 2, %v2205
    %v2207 = vrot.slane %v2194, %v2206
    %v2208 = vlaneseq
    %v2209 = vshrl.u32 %v2208, 7
    %v2210 = vsub.s32 3, %v2209
    %v2211 = vrot.slane %v2194, %v2210
    %v2216 = vmul.f32 %v2192, %v2199
    %v2217 = vmul.f32 %v2191, %v2203
    %v2218 = vmul.f32 %v2190, %v2207
    %v2219 = vmul.f32 %v2189, %v2211
    %v2221 = vsel %vm29, %v2179, 0
    %v2224 = vsel %vm32, %v2216, 0
    %v2227 = vsel %vm32, %v2217, 0
    %v2230 = vsel %vm32, %v2218, 0
    %v2233 = vsel %vm32, %v2219, 0
    %2235 = vmatprep.subr.mxu0 %v2227
    %2236 = vmatpush1.msra.mxu0 %v2224
    %2237 = vmatprep.subr.mxu0 0.0
    %2238 = vmatpush1.msra.mxu0 0.0
    %2239 = vmatprep.subr.mxu0 0.0
    %2240 = vmatpush1.msra.mxu0 0.0
    %2241 = vmatprep.subr.mxu0 0.0
    %2242 = vmatpush1.msra.mxu0 0.0
    %2243 = vmatprep.subr.mxu0 0.0
    %2244 = vmatpush1.msra.mxu0 0.0
    %2245 = vmatprep.subr.mxu0 0.0
    %2246 = vmatpush1.msra.mxu0 0.0
    %2247 = vmatprep.subr.mxu0 0.0
    %2248 = vmatpush1.msra.mxu0 0.0
    %2249 = vmatprep.subr.mxu0 0.0
    %2250 = vmatpush1.msra.mxu0 0.0
    %2251 = vmatprep.subr.mxu0 0.0
    %2252 = vmatpush1.msra.mxu0 0.0
    %2253 = vmatprep.subr.mxu0 0.0
    %2254 = vmatpush1.msra.mxu0 0.0
    %2255 = vmatprep.subr.mxu0 0.0
    %2256 = vmatpush1.msra.mxu0 0.0
    %2257 = vmatprep.subr.mxu0 0.0
    %2258 = vmatpush1.msra.mxu0 0.0
    %2259 = vmatprep.subr.mxu0 0.0
    %2260 = vmatpush1.msra.mxu0 0.0
    %2261 = vmatprep.subr.mxu0 0.0
    %2262 = vmatpush1.msra.mxu0 0.0
    %2263 = vmatprep.subr.mxu0 0.0
    %2264 = vmatpush1.msra.mxu0 0.0
    %2265 = vmatprep.subr.mxu0 0.0
    %2266 = vmatpush1.msra.mxu0 0.0
    %2267 = vmatprep.subr.mxu0 0.0
    %2268 = vmatpush1.msra.mxu0 0.0
    %2269 = vmatprep.subr.mxu0 0.0
    %2270 = vmatpush1.msra.mxu0 0.0
    %2271 = vmatprep.subr.mxu0 0.0
    %2272 = vmatpush1.msra.mxu0 0.0
    %2273 = vmatprep.subr.mxu0 0.0
    %2274 = vmatpush1.msra.mxu0 0.0
    %2275 = vmatprep.subr.mxu0 0.0
    %2276 = vmatpush1.msra.mxu0 0.0
    %2277 = vmatprep.subr.mxu0 0.0
    %2278 = vmatpush1.msra.mxu0 0.0
    %2279 = vmatprep.subr.mxu0 0.0
    %2280 = vmatpush1.msra.mxu0 0.0
    %2281 = vmatprep.subr.mxu0 0.0
    %2282 = vmatpush1.msra.mxu0 0.0
    %2283 = vmatprep.subr.mxu0 0.0
    %2284 = vmatpush1.msra.mxu0 0.0
    %2285 = vmatprep.subr.mxu0 0.0
    %2286 = vmatpush1.msra.mxu0 0.0
    %2287 = vmatprep.subr.mxu0 0.0
    %2288 = vmatpush1.msra.mxu0 0.0
    %2289 = vmatprep.subr.mxu0 0.0
    %2290 = vmatpush1.msra.mxu0 0.0
    %2291 = vmatprep.subr.mxu0 0.0
    %2292 = vmatpush1.msra.mxu0 0.0
    %2293 = vmatprep.subr.mxu0 0.0
    %2294 = vmatpush1.msra.mxu0 0.0
    %2295 = vmatprep.subr.mxu0 0.0
    %2296 = vmatpush1.msra.mxu0 0.0
    %2297 = vmatprep.subr.mxu0 0.0
    %2298 = vmatpush1.msra.mxu0 0.0
    %2299 = vmatprep.mubr.f32.mxu0 0.0
    %2300 = vmatmul.mubr.f32.gmra.mrb[0].mxu0 %v2221
    %v2301 = vpop.f32.mrb[0].mxu0
    %v2302 = vadd.f32 0.0, %v2301
    %v2303 = vpop.f32.mrb[0].mxu0
    %v2304 = vadd.f32 0.0, %v2303
    %2305 = vdwg.mxu0
    %2306 = vmatprep.subr.mxu0 %v2233
    %2307 = vmatpush1.msra.mxu0 %v2230
    %2308 = vmatprep.subr.mxu0 0.0
    %2309 = vmatpush1.msra.mxu0 0.0
    %2310 = vmatprep.subr.mxu0 0.0
    %2311 = vmatpush1.msra.mxu0 0.0
    %2312 = vmatprep.subr.mxu0 0.0
    %2313 = vmatpush1.msra.mxu0 0.0
    %2314 = vmatprep.subr.mxu0 0.0
    %2315 = vmatpush1.msra.mxu0 0.0
    %2316 = vmatprep.subr.mxu0 0.0
    %2317 = vmatpush1.msra.mxu0 0.0
    %2318 = vmatprep.subr.mxu0 0.0
    %2319 = vmatpush1.msra.mxu0 0.0
    %2320 = vmatprep.subr.mxu0 0.0
    %2321 = vmatpush1.msra.mxu0 0.0
    %2322 = vmatprep.subr.mxu0 0.0
    %2323 = vmatpush1.msra.mxu0 0.0
    %2324 = vmatprep.subr.mxu0 0.0
    %2325 = vmatpush1.msra.mxu0 0.0
    %2326 = vmatprep.subr.mxu0 0.0
    %2327 = vmatpush1.msra.mxu0 0.0
    %2328 = vmatprep.subr.mxu0 0.0
    %2329 = vmatpush1.msra.mxu0 0.0
    %2330 = vmatprep.subr.mxu0 0.0
    %2331 = vmatpush1.msra.mxu0 0.0
    %2332 = vmatprep.subr.mxu0 0.0
    %2333 = vmatpush1.msra.mxu0 0.0
    %2334 = vmatprep.subr.mxu0 0.0
    %2335 = vmatpush1.msra.mxu0 0.0
    %2336 = vmatprep.subr.mxu0 0.0
    %2337 = vmatpush1.msra.mxu0 0.0
    %2338 = vmatprep.subr.mxu0 0.0
    %2339 = vmatpush1.msra.mxu0 0.0
    %2340 = vmatprep.subr.mxu0 0.0
    %2341 = vmatpush1.msra.mxu0 0.0
    %2342 = vmatprep.subr.mxu0 0.0
    %2343 = vmatpush1.msra.mxu0 0.0
    %2344 = vmatprep.subr.mxu0 0.0
    %2345 = vmatpush1.msra.mxu0 0.0
    %2346 = vmatprep.subr.mxu0 0.0
    %2347 = vmatpush1.msra.mxu0 0.0
    %2348 = vmatprep.subr.mxu0 0.0
    %2349 = vmatpush1.msra.mxu0 0.0
    %2350 = vmatprep.subr.mxu0 0.0
    %2351 = vmatpush1.msra.mxu0 0.0
    %2352 = vmatprep.subr.mxu0 0.0
    %2353 = vmatpush1.msra.mxu0 0.0
    %2354 = vmatprep.subr.mxu0 0.0
    %2355 = vmatpush1.msra.mxu0 0.0
    %2356 = vmatprep.subr.mxu0 0.0
    %2357 = vmatpush1.msra.mxu0 0.0
    %2358 = vmatprep.subr.mxu0 0.0
    %2359 = vmatpush1.msra.mxu0 0.0
    %2360 = vmatprep.subr.mxu0 0.0
    %2361 = vmatpush1.msra.mxu0 0.0
    %2362 = vmatprep.subr.mxu0 0.0
    %2363 = vmatpush1.msra.mxu0 0.0
    %2364 = vmatprep.subr.mxu0 0.0
    %2365 = vmatpush1.msra.mxu0 0.0
    %2366 = vmatprep.subr.mxu0 0.0
    %2367 = vmatpush1.msra.mxu0 0.0
    %2368 = vmatprep.subr.mxu0 0.0
    %2369 = vmatpush1.msra.mxu0 0.0
    %2370 = vmatprep.mubr.f32.mxu0 0.0
    %2371 = vmatmul.mubr.f32.gmra.mrb[0].mxu0 %v2221
    %v2372 = vpop.f32.mrb[0].mxu0
    %v2373 = vadd.f32 0.0, %v2372
    %v2374 = vpop.f32.mrb[0].mxu0
    %v2375 = vadd.f32 0.0, %v2374
    %2376 = vdwg.mxu0
    %v2377 = vadd.f32 %v2174, %v2302
    %v2378 = vadd.f32 %v2175, %v2304
    %v2379 = vadd.f32 %v2176, %v2373
    %v2380 = vadd.f32 %v2177, %v2375
    %s2381 = scalar_lea.vmem %s2, 88
    %v2382 = vld [vmem:[%s2381] sm:$0xff]
    %2383 = vrot.lane.b32.xlu0 %v191, 30
    %v2384 = vpop.permute.xlu0 %2383
    %2385 = vrot.lane.b32.xlu0 %v192, 30
    %v2386 = vpop.permute.xlu0 %2385
    %2387 = vrot.lane.b32.xlu0 %v193, 30
    %v2388 = vpop.permute.xlu0 %2387
    %2389 = vrot.lane.b32.xlu0 %v194, 30
    %v2390 = vpop.permute.xlu0 %2389
    %vm2391 = vcmp.lt.s32.totalorder %v207, 30
    %v2392 = vsel %vm2391, %v2388, %v2390
    %v2393 = vsel %vm2391, %v2386, %v2388
    %v2394 = vsel %vm2391, %v2384, %v2386
    %v2395 = vsel %vm2391, %v2390, %v2384
    %s2396 = scalar_lea.vmem %s3, 44
    %v2397 = vld [vmem:[%s2396] sm:$0xf]
    %v2399 = vlaneseq
    %v2400 = vshrl.u32 %v2399, 7
    %v2401 = vsub.s32 0, %v2400
    %v2402 = vrot.slane %v2397, %v2401
    %v2403 = vlaneseq
    %v2404 = vshrl.u32 %v2403, 7
    %v2405 = vsub.s32 1, %v2404
    %v2406 = vrot.slane %v2397, %v2405
    %v2407 = vlaneseq
    %v2408 = vshrl.u32 %v2407, 7
    %v2409 = vsub.s32 2, %v2408
    %v2410 = vrot.slane %v2397, %v2409
    %v2411 = vlaneseq
    %v2412 = vshrl.u32 %v2411, 7
    %v2413 = vsub.s32 3, %v2412
    %v2414 = vrot.slane %v2397, %v2413
    %v2419 = vmul.f32 %v2395, %v2402
    %v2420 = vmul.f32 %v2394, %v2406
    %v2421 = vmul.f32 %v2393, %v2410
    %v2422 = vmul.f32 %v2392, %v2414
    %v2424 = vsel %vm29, %v2382, 0
    %v2427 = vsel %vm32, %v2419, 0
    %v2430 = vsel %vm32, %v2420, 0
    %v2433 = vsel %vm32, %v2421, 0
    %v2436 = vsel %vm32, %v2422, 0
    %2438 = vmatprep.subr.mxu0 %v2430
    %2439 = vmatpush1.msra.mxu0 %v2427
    %2440 = vmatprep.subr.mxu0 0.0
    %2441 = vmatpush1.msra.mxu0 0.0
    %2442 = vmatprep.subr.mxu0 0.0
    %2443 = vmatpush1.msra.mxu0 0.0
    %2444 = vmatprep.subr.mxu0 0.0
    %2445 = vmatpush1.msra.mxu0 0.0
    %2446 = vmatprep.subr.mxu0 0.0
    %2447 = vmatpush1.msra.mxu0 0.0
    %2448 = vmatprep.subr.mxu0 0.0
    %2449 = vmatpush1.msra.mxu0 0.0
    %2450 = vmatprep.subr.mxu0 0.0
    %2451 = vmatpush1.msra.mxu0 0.0
    %2452 = vmatprep.subr.mxu0 0.0
    %2453 = vmatpush1.msra.mxu0 0.0
    %2454 = vmatprep.subr.mxu0 0.0
    %2455 = vmatpush1.msra.mxu0 0.0
    %2456 = vmatprep.subr.mxu0 0.0
    %2457 = vmatpush1.msra.mxu0 0.0
    %2458 = vmatprep.subr.mxu0 0.0
    %2459 = vmatpush1.msra.mxu0 0.0
    %2460 = vmatprep.subr.mxu0 0.0
    %2461 = vmatpush1.msra.mxu0 0.0
    %2462 = vmatprep.subr.mxu0 0.0
    %2463 = vmatpush1.msra.mxu0 0.0
    %2464 = vmatprep.subr.mxu0 0.0
    %2465 = vmatpush1.msra.mxu0 0.0
    %2466 = vmatprep.subr.mxu0 0.0
    %2467 = vmatpush1.msra.mxu0 0.0
    %2468 = vmatprep.subr.mxu0 0.0
    %2469 = vmatpush1.msra.mxu0 0.0
    %2470 = vmatprep.subr.mxu0 0.0
    %2471 = vmatpush1.msra.mxu0 0.0
    %2472 = vmatprep.subr.mxu0 0.0
    %2473 = vmatpush1.msra.mxu0 0.0
    %2474 = vmatprep.subr.mxu0 0.0
    %2475 = vmatpush1.msra.mxu0 0.0
    %2476 = vmatprep.subr.mxu0 0.0
    %2477 = vmatpush1.msra.mxu0 0.0
    %2478 = vmatprep.subr.mxu0 0.0
    %2479 = vmatpush1.msra.mxu0 0.0
    %2480 = vmatprep.subr.mxu0 0.0
    %2481 = vmatpush1.msra.mxu0 0.0
    %2482 = vmatprep.subr.mxu0 0.0
    %2483 = vmatpush1.msra.mxu0 0.0
    %2484 = vmatprep.subr.mxu0 0.0
    %2485 = vmatpush1.msra.mxu0 0.0
    %2486 = vmatprep.subr.mxu0 0.0
    %2487 = vmatpush1.msra.mxu0 0.0
    %2488 = vmatprep.subr.mxu0 0.0
    %2489 = vmatpush1.msra.mxu0 0.0
    %2490 = vmatprep.subr.mxu0 0.0
    %2491 = vmatpush1.msra.mxu0 0.0
    %2492 = vmatprep.subr.mxu0 0.0
    %2493 = vmatpush1.msra.mxu0 0.0
    %2494 = vmatprep.subr.mxu0 0.0
    %2495 = vmatpush1.msra.mxu0 0.0
    %2496 = vmatprep.subr.mxu0 0.0
    %2497 = vmatpush1.msra.mxu0 0.0
    %2498 = vmatprep.subr.mxu0 0.0
    %2499 = vmatpush1.msra.mxu0 0.0
    %2500 = vmatprep.subr.mxu0 0.0
    %2501 = vmatpush1.msra.mxu0 0.0
    %2502 = vmatprep.mubr.f32.mxu0 0.0
    %2503 = vmatmul.mubr.f32.gmra.mrb[0].mxu0 %v2424
    %v2504 = vpop.f32.mrb[0].mxu0
    %v2505 = vadd.f32 0.0, %v2504
    %v2506 = vpop.f32.mrb[0].mxu0
    %v2507 = vadd.f32 0.0, %v2506
    %2508 = vdwg.mxu0
    %2509 = vmatprep.subr.mxu0 %v2436
    %2510 = vmatpush1.msra.mxu0 %v2433
    %2511 = vmatprep.subr.mxu0 0.0
    %2512 = vmatpush1.msra.mxu0 0.0
    %2513 = vmatprep.subr.mxu0 0.0
    %2514 = vmatpush1.msra.mxu0 0.0
    %2515 = vmatprep.subr.mxu0 0.0
    %2516 = vmatpush1.msra.mxu0 0.0
    %2517 = vmatprep.subr.mxu0 0.0
    %2518 = vmatpush1.msra.mxu0 0.0
    %2519 = vmatprep.subr.mxu0 0.0
    %2520 = vmatpush1.msra.mxu0 0.0
    %2521 = vmatprep.subr.mxu0 0.0
    %2522 = vmatpush1.msra.mxu0 0.0
    %2523 = vmatprep.subr.mxu0 0.0
    %2524 = vmatpush1.msra.mxu0 0.0
    %2525 = vmatprep.subr.mxu0 0.0
    %2526 = vmatpush1.msra.mxu0 0.0
    %2527 = vmatprep.subr.mxu0 0.0
    %2528 = vmatpush1.msra.mxu0 0.0
    %2529 = vmatprep.subr.mxu0 0.0
    %2530 = vmatpush1.msra.mxu0 0.0
    %2531 = vmatprep.subr.mxu0 0.0
    %2532 = vmatpush1.msra.mxu0 0.0
    %2533 = vmatprep.subr.mxu0 0.0
    %2534 = vmatpush1.msra.mxu0 0.0
    %2535 = vmatprep.subr.mxu0 0.0
    %2536 = vmatpush1.msra.mxu0 0.0
    %2537 = vmatprep.subr.mxu0 0.0
    %2538 = vmatpush1.msra.mxu0 0.0
    %2539 = vmatprep.subr.mxu0 0.0
    %2540 = vmatpush1.msra.mxu0 0.0
    %2541 = vmatprep.subr.mxu0 0.0
    %2542 = vmatpush1.msra.mxu0 0.0
    %2543 = vmatprep.subr.mxu0 0.0
    %2544 = vmatpush1.msra.mxu0 0.0
    %2545 = vmatprep.subr.mxu0 0.0
    %2546 = vmatpush1.msra.mxu0 0.0
    %2547 = vmatprep.subr.mxu0 0.0
    %2548 = vmatpush1.msra.mxu0 0.0
    %2549 = vmatprep.subr.mxu0 0.0
    %2550 = vmatpush1.msra.mxu0 0.0
    %2551 = vmatprep.subr.mxu0 0.0
    %2552 = vmatpush1.msra.mxu0 0.0
    %2553 = vmatprep.subr.mxu0 0.0
    %2554 = vmatpush1.msra.mxu0 0.0
    %2555 = vmatprep.subr.mxu0 0.0
    %2556 = vmatpush1.msra.mxu0 0.0
    %2557 = vmatprep.subr.mxu0 0.0
    %2558 = vmatpush1.msra.mxu0 0.0
    %2559 = vmatprep.subr.mxu0 0.0
    %2560 = vmatpush1.msra.mxu0 0.0
    %2561 = vmatprep.subr.mxu0 0.0
    %2562 = vmatpush1.msra.mxu0 0.0
    %2563 = vmatprep.subr.mxu0 0.0
    %2564 = vmatpush1.msra.mxu0 0.0
    %2565 = vmatprep.subr.mxu0 0.0
    %2566 = vmatpush1.msra.mxu0 0.0
    %2567 = vmatprep.subr.mxu0 0.0
    %2568 = vmatpush1.msra.mxu0 0.0
    %2569 = vmatprep.subr.mxu0 0.0
    %2570 = vmatpush1.msra.mxu0 0.0
    %2571 = vmatprep.subr.mxu0 0.0
    %2572 = vmatpush1.msra.mxu0 0.0
    %2573 = vmatprep.mubr.f32.mxu0 0.0
    %2574 = vmatmul.mubr.f32.gmra.mrb[0].mxu0 %v2424
    %v2575 = vpop.f32.mrb[0].mxu0
    %v2576 = vadd.f32 0.0, %v2575
    %v2577 = vpop.f32.mrb[0].mxu0
    %v2578 = vadd.f32 0.0, %v2577
    %2579 = vdwg.mxu0
    %v2580 = vadd.f32 %v2377, %v2505
    %v2581 = vadd.f32 %v2378, %v2507
    %v2582 = vadd.f32 %v2379, %v2576
    %v2583 = vadd.f32 %v2380, %v2578
    %s2584 = scalar_lea.vmem %s2, 96
    %v2585 = vld [vmem:[%s2584] sm:$0xff]
    %2586 = vrot.lane.b32.xlu0 %v191, 2
    %v2587 = vpop.permute.xlu0 %2586
    %2588 = vrot.lane.b32.xlu0 %v192, 2
    %v2589 = vpop.permute.xlu0 %2588
    %2590 = vrot.lane.b32.xlu0 %v193, 2
    %v2591 = vpop.permute.xlu0 %2590
    %2592 = vrot.lane.b32.xlu0 %v194, 2
    %v2593 = vpop.permute.xlu0 %2592
    %vm2594 = vcmp.lt.s32.totalorder %v207, 2
    %v2595 = vsel %vm2594, %v2591, %v2593
    %v2596 = vsel %vm2594, %v2589, %v2591
    %v2597 = vsel %vm2594, %v2587, %v2589
    %v2598 = vsel %vm2594, %v2593, %v2587
    %s2599 = scalar_lea.vmem %s3, 48
    %v2600 = vld [vmem:[%s2599] sm:$0xf]
    %v2602 = vlaneseq
    %v2603 = vshrl.u32 %v2602, 7
    %v2604 = vsub.s32 0, %v2603
    %v2605 = vrot.slane %v2600, %v2604
    %v2606 = vlaneseq
    %v2607 = vshrl.u32 %v2606, 7
    %v2608 = vsub.s32 1, %v2607
    %v2609 = vrot.slane %v2600, %v2608
    %v2610 = vlaneseq
    %v2611 = vshrl.u32 %v2610, 7
    %v2612 = vsub.s32 2, %v2611
    %v2613 = vrot.slane %v2600, %v2612
    %v2614 = vlaneseq
    %v2615 = vshrl.u32 %v2614, 7
    %v2616 = vsub.s32 3, %v2615
    %v2617 = vrot.slane %v2600, %v2616
    %v2622 = vmul.f32 %v2598, %v2605
    %v2623 = vmul.f32 %v2597, %v2609
    %v2624 = vmul.f32 %v2596, %v2613
    %v2625 = vmul.f32 %v2595, %v2617
    %v2627 = vsel %vm29, %v2585, 0
    %v2630 = vsel %vm32, %v2622, 0
    %v2633 = vsel %vm32, %v2623, 0
    %v2636 = vsel %vm32, %v2624, 0
    %v2639 = vsel %vm32, %v2625, 0
    %2641 = vmatprep.subr.mxu0 %v2633
    %2642 = vmatpush1.msra.mxu0 %v2630
    %2643 = vmatprep.subr.mxu0 0.0
    %2644 = vmatpush1.msra.mxu0 0.0
    %2645 = vmatprep.subr.mxu0 0.0
    %2646 = vmatpush1.msra.mxu0 0.0
    %2647 = vmatprep.subr.mxu0 0.0
    %2648 = vmatpush1.msra.mxu0 0.0
    %2649 = vmatprep.subr.mxu0 0.0
    %2650 = vmatpush1.msra.mxu0 0.0
    %2651 = vmatprep.subr.mxu0 0.0
    %2652 = vmatpush1.msra.mxu0 0.0
    %2653 = vmatprep.subr.mxu0 0.0
    %2654 = vmatpush1.msra.mxu0 0.0
    %2655 = vmatprep.subr.mxu0 0.0
    %2656 = vmatpush1.msra.mxu0 0.0
    %2657 = vmatprep.subr.mxu0 0.0
    %2658 = vmatpush1.msra.mxu0 0.0
    %2659 = vmatprep.subr.mxu0 0.0
    %2660 = vmatpush1.msra.mxu0 0.0
    %2661 = vmatprep.subr.mxu0 0.0
    %2662 = vmatpush1.msra.mxu0 0.0
    %2663 = vmatprep.subr.mxu0 0.0
    %2664 = vmatpush1.msra.mxu0 0.0
    %2665 = vmatprep.subr.mxu0 0.0
    %2666 = vmatpush1.msra.mxu0 0.0
    %2667 = vmatprep.subr.mxu0 0.0
    %2668 = vmatpush1.msra.mxu0 0.0
    %2669 = vmatprep.subr.mxu0 0.0
    %2670 = vmatpush1.msra.mxu0 0.0
    %2671 = vmatprep.subr.mxu0 0.0
    %2672 = vmatpush1.msra.mxu0 0.0
    %2673 = vmatprep.subr.mxu0 0.0
    %2674 = vmatpush1.msra.mxu0 0.0
    %2675 = vmatprep.subr.mxu0 0.0
    %2676 = vmatpush1.msra.mxu0 0.0
    %2677 = vmatprep.subr.mxu0 0.0
    %2678 = vmatpush1.msra.mxu0 0.0
    %2679 = vmatprep.subr.mxu0 0.0
    %2680 = vmatpush1.msra.mxu0 0.0
    %2681 = vmatprep.subr.mxu0 0.0
    %2682 = vmatpush1.msra.mxu0 0.0
    %2683 = vmatprep.subr.mxu0 0.0
    %2684 = vmatpush1.msra.mxu0 0.0
    %2685 = vmatprep.subr.mxu0 0.0
    %2686 = vmatpush1.msra.mxu0 0.0
    %2687 = vmatprep.subr.mxu0 0.0
    %2688 = vmatpush1.msra.mxu0 0.0
    %2689 = vmatprep.subr.mxu0 0.0
    %2690 = vmatpush1.msra.mxu0 0.0
    %2691 = vmatprep.subr.mxu0 0.0
    %2692 = vmatpush1.msra.mxu0 0.0
    %2693 = vmatprep.subr.mxu0 0.0
    %2694 = vmatpush1.msra.mxu0 0.0
    %2695 = vmatprep.subr.mxu0 0.0
    %2696 = vmatpush1.msra.mxu0 0.0
    %2697 = vmatprep.subr.mxu0 0.0
    %2698 = vmatpush1.msra.mxu0 0.0
    %2699 = vmatprep.subr.mxu0 0.0
    %2700 = vmatpush1.msra.mxu0 0.0
    %2701 = vmatprep.subr.mxu0 0.0
    %2702 = vmatpush1.msra.mxu0 0.0
    %2703 = vmatprep.subr.mxu0 0.0
    %2704 = vmatpush1.msra.mxu0 0.0
    %2705 = vmatprep.mubr.f32.mxu0 0.0
    %2706 = vmatmul.mubr.f32.gmra.mrb[0].mxu0 %v2627
    %v2707 = vpop.f32.mrb[0].mxu0
    %v2708 = vadd.f32 0.0, %v2707
    %v2709 = vpop.f32.mrb[0].mxu0
    %v2710 = vadd.f32 0.0, %v2709
    %2711 = vdwg.mxu0
    %2712 = vmatprep.subr.mxu0 %v2639
    %2713 = vmatpush1.msra.mxu0 %v2636
    %2714 = vmatprep.subr.mxu0 0.0
    %2715 = vmatpush1.msra.mxu0 0.0
    %2716 = vmatprep.subr.mxu0 0.0
    %2717 = vmatpush1.msra.mxu0 0.0
    %2718 = vmatprep.subr.mxu0 0.0
    %2719 = vmatpush1.msra.mxu0 0.0
    %2720 = vmatprep.subr.mxu0 0.0
    %2721 = vmatpush1.msra.mxu0 0.0
    %2722 = vmatprep.subr.mxu0 0.0
    %2723 = vmatpush1.msra.mxu0 0.0
    %2724 = vmatprep.subr.mxu0 0.0
    %2725 = vmatpush1.msra.mxu0 0.0
    %2726 = vmatprep.subr.mxu0 0.0
    %2727 = vmatpush1.msra.mxu0 0.0
    %2728 = vmatprep.subr.mxu0 0.0
    %2729 = vmatpush1.msra.mxu0 0.0
    %2730 = vmatprep.subr.mxu0 0.0
    %2731 = vmatpush1.msra.mxu0 0.0
    %2732 = vmatprep.subr.mxu0 0.0
    %2733 = vmatpush1.msra.mxu0 0.0
    %2734 = vmatprep.subr.mxu0 0.0
    %2735 = vmatpush1.msra.mxu0 0.0
    %2736 = vmatprep.subr.mxu0 0.0
    %2737 = vmatpush1.msra.mxu0 0.0
    %2738 = vmatprep.subr.mxu0 0.0
    %2739 = vmatpush1.msra.mxu0 0.0
    %2740 = vmatprep.subr.mxu0 0.0
    %2741 = vmatpush1.msra.mxu0 0.0
    %2742 = vmatprep.subr.mxu0 0.0
    %2743 = vmatpush1.msra.mxu0 0.0
    %2744 = vmatprep.subr.mxu0 0.0
    %2745 = vmatpush1.msra.mxu0 0.0
    %2746 = vmatprep.subr.mxu0 0.0
    %2747 = vmatpush1.msra.mxu0 0.0
    %2748 = vmatprep.subr.mxu0 0.0
    %2749 = vmatpush1.msra.mxu0 0.0
    %2750 = vmatprep.subr.mxu0 0.0
    %2751 = vmatpush1.msra.mxu0 0.0
    %2752 = vmatprep.subr.mxu0 0.0
    %2753 = vmatpush1.msra.mxu0 0.0
    %2754 = vmatprep.subr.mxu0 0.0
    %2755 = vmatpush1.msra.mxu0 0.0
    %2756 = vmatprep.subr.mxu0 0.0
    %2757 = vmatpush1.msra.mxu0 0.0
    %2758 = vmatprep.subr.mxu0 0.0
    %2759 = vmatpush1.msra.mxu0 0.0
    %2760 = vmatprep.subr.mxu0 0.0
    %2761 = vmatpush1.msra.mxu0 0.0
    %2762 = vmatprep.subr.mxu0 0.0
    %2763 = vmatpush1.msra.mxu0 0.0
    %2764 = vmatprep.subr.mxu0 0.0
    %2765 = vmatpush1.msra.mxu0 0.0
    %2766 = vmatprep.subr.mxu0 0.0
    %2767 = vmatpush1.msra.mxu0 0.0
    %2768 = vmatprep.subr.mxu0 0.0
    %2769 = vmatpush1.msra.mxu0 0.0
    %2770 = vmatprep.subr.mxu0 0.0
    %2771 = vmatpush1.msra.mxu0 0.0
    %2772 = vmatprep.subr.mxu0 0.0
    %2773 = vmatpush1.msra.mxu0 0.0
    %2774 = vmatprep.subr.mxu0 0.0
    %2775 = vmatpush1.msra.mxu0 0.0
    %2776 = vmatprep.mubr.f32.mxu0 0.0
    %2777 = vmatmul.mubr.f32.gmra.mrb[0].mxu0 %v2627
    %v2778 = vpop.f32.mrb[0].mxu0
    %v2779 = vadd.f32 0.0, %v2778
    %v2780 = vpop.f32.mrb[0].mxu0
    %v2781 = vadd.f32 0.0, %v2780
    %2782 = vdwg.mxu0
    %v2783 = vadd.f32 %v2580, %v2708
    %v2784 = vadd.f32 %v2581, %v2710
    %v2785 = vadd.f32 %v2582, %v2779
    %v2786 = vadd.f32 %v2583, %v2781
    %s2787 = scalar_lea.vmem %s2, 104
    %v2788 = vld [vmem:[%s2787] sm:$0xff]
    %2789 = vrot.lane.b32.xlu0 %v191, 126
    %v2790 = vpop.permute.xlu0 %2789
    %2791 = vrot.lane.b32.xlu0 %v192, 126
    %v2792 = vpop.permute.xlu0 %2791
    %2793 = vrot.lane.b32.xlu0 %v193, 126
    %v2794 = vpop.permute.xlu0 %2793
    %2795 = vrot.lane.b32.xlu0 %v194, 126
    %v2796 = vpop.permute.xlu0 %2795
    %vm2797 = vcmp.lt.s32.totalorder %v207, 126
    %v2798 = vsel %vm2797, %v2794, %v2796
    %v2799 = vsel %vm2797, %v2792, %v2794
    %v2800 = vsel %vm2797, %v2790, %v2792
    %v2801 = vsel %vm2797, %v2796, %v2790
    %s2802 = scalar_lea.vmem %s3, 52
    %v2803 = vld [vmem:[%s2802] sm:$0xf]
    %v2805 = vlaneseq
    %v2806 = vshrl.u32 %v2805, 7
    %v2807 = vsub.s32 0, %v2806
    %v2808 = vrot.slane %v2803, %v2807
    %v2809 = vlaneseq
    %v2810 = vshrl.u32 %v2809, 7
    %v2811 = vsub.s32 1, %v2810
    %v2812 = vrot.slane %v2803, %v2811
    %v2813 = vlaneseq
    %v2814 = vshrl.u32 %v2813, 7
    %v2815 = vsub.s32 2, %v2814
    %v2816 = vrot.slane %v2803, %v2815
    %v2817 = vlaneseq
    %v2818 = vshrl.u32 %v2817, 7
    %v2819 = vsub.s32 3, %v2818
    %v2820 = vrot.slane %v2803, %v2819
    %v2825 = vmul.f32 %v2800, %v2808
    %v2826 = vmul.f32 %v2799, %v2812
    %v2827 = vmul.f32 %v2798, %v2816
    %v2828 = vmul.f32 %v2801, %v2820
    %v2830 = vsel %vm29, %v2788, 0
    %v2833 = vsel %vm32, %v2825, 0
    %v2836 = vsel %vm32, %v2826, 0
    %v2839 = vsel %vm32, %v2827, 0
    %v2842 = vsel %vm32, %v2828, 0
    %2844 = vmatprep.subr.mxu0 %v2836
    %2845 = vmatpush1.msra.mxu0 %v2833
    %2846 = vmatprep.subr.mxu0 0.0
    %2847 = vmatpush1.msra.mxu0 0.0
    %2848 = vmatprep.subr.mxu0 0.0
    %2849 = vmatpush1.msra.mxu0 0.0
    %2850 = vmatprep.subr.mxu0 0.0
    %2851 = vmatpush1.msra.mxu0 0.0
    %2852 = vmatprep.subr.mxu0 0.0
    %2853 = vmatpush1.msra.mxu0 0.0
    %2854 = vmatprep.subr.mxu0 0.0
    %2855 = vmatpush1.msra.mxu0 0.0
    %2856 = vmatprep.subr.mxu0 0.0
    %2857 = vmatpush1.msra.mxu0 0.0
    %2858 = vmatprep.subr.mxu0 0.0
    %2859 = vmatpush1.msra.mxu0 0.0
    %2860 = vmatprep.subr.mxu0 0.0
    %2861 = vmatpush1.msra.mxu0 0.0
    %2862 = vmatprep.subr.mxu0 0.0
    %2863 = vmatpush1.msra.mxu0 0.0
    %2864 = vmatprep.subr.mxu0 0.0
    %2865 = vmatpush1.msra.mxu0 0.0
    %2866 = vmatprep.subr.mxu0 0.0
    %2867 = vmatpush1.msra.mxu0 0.0
    %2868 = vmatprep.subr.mxu0 0.0
    %2869 = vmatpush1.msra.mxu0 0.0
    %2870 = vmatprep.subr.mxu0 0.0
    %2871 = vmatpush1.msra.mxu0 0.0
    %2872 = vmatprep.subr.mxu0 0.0
    %2873 = vmatpush1.msra.mxu0 0.0
    %2874 = vmatprep.subr.mxu0 0.0
    %2875 = vmatpush1.msra.mxu0 0.0
    %2876 = vmatprep.subr.mxu0 0.0
    %2877 = vmatpush1.msra.mxu0 0.0
    %2878 = vmatprep.subr.mxu0 0.0
    %2879 = vmatpush1.msra.mxu0 0.0
    %2880 = vmatprep.subr.mxu0 0.0
    %2881 = vmatpush1.msra.mxu0 0.0
    %2882 = vmatprep.subr.mxu0 0.0
    %2883 = vmatpush1.msra.mxu0 0.0
    %2884 = vmatprep.subr.mxu0 0.0
    %2885 = vmatpush1.msra.mxu0 0.0
    %2886 = vmatprep.subr.mxu0 0.0
    %2887 = vmatpush1.msra.mxu0 0.0
    %2888 = vmatprep.subr.mxu0 0.0
    %2889 = vmatpush1.msra.mxu0 0.0
    %2890 = vmatprep.subr.mxu0 0.0
    %2891 = vmatpush1.msra.mxu0 0.0
    %2892 = vmatprep.subr.mxu0 0.0
    %2893 = vmatpush1.msra.mxu0 0.0
    %2894 = vmatprep.subr.mxu0 0.0
    %2895 = vmatpush1.msra.mxu0 0.0
    %2896 = vmatprep.subr.mxu0 0.0
    %2897 = vmatpush1.msra.mxu0 0.0
    %2898 = vmatprep.subr.mxu0 0.0
    %2899 = vmatpush1.msra.mxu0 0.0
    %2900 = vmatprep.subr.mxu0 0.0
    %2901 = vmatpush1.msra.mxu0 0.0
    %2902 = vmatprep.subr.mxu0 0.0
    %2903 = vmatpush1.msra.mxu0 0.0
    %2904 = vmatprep.subr.mxu0 0.0
    %2905 = vmatpush1.msra.mxu0 0.0
    %2906 = vmatprep.subr.mxu0 0.0
    %2907 = vmatpush1.msra.mxu0 0.0
    %2908 = vmatprep.mubr.f32.mxu0 0.0
    %2909 = vmatmul.mubr.f32.gmra.mrb[0].mxu0 %v2830
    %v2910 = vpop.f32.mrb[0].mxu0
    %v2911 = vadd.f32 0.0, %v2910
    %v2912 = vpop.f32.mrb[0].mxu0
    %v2913 = vadd.f32 0.0, %v2912
    %2914 = vdwg.mxu0
    %2915 = vmatprep.subr.mxu0 %v2842
    %2916 = vmatpush1.msra.mxu0 %v2839
    %2917 = vmatprep.subr.mxu0 0.0
    %2918 = vmatpush1.msra.mxu0 0.0
    %2919 = vmatprep.subr.mxu0 0.0
    %2920 = vmatpush1.msra.mxu0 0.0
    %2921 = vmatprep.subr.mxu0 0.0
    %2922 = vmatpush1.msra.mxu0 0.0
    %2923 = vmatprep.subr.mxu0 0.0
    %2924 = vmatpush1.msra.mxu0 0.0
    %2925 = vmatprep.subr.mxu0 0.0
    %2926 = vmatpush1.msra.mxu0 0.0
    %2927 = vmatprep.subr.mxu0 0.0
    %2928 = vmatpush1.msra.mxu0 0.0
    %2929 = vmatprep.subr.mxu0 0.0
    %2930 = vmatpush1.msra.mxu0 0.0
    %2931 = vmatprep.subr.mxu0 0.0
    %2932 = vmatpush1.msra.mxu0 0.0
    %2933 = vmatprep.subr.mxu0 0.0
    %2934 = vmatpush1.msra.mxu0 0.0
    %2935 = vmatprep.subr.mxu0 0.0
    %2936 = vmatpush1.msra.mxu0 0.0
    %2937 = vmatprep.subr.mxu0 0.0
    %2938 = vmatpush1.msra.mxu0 0.0
    %2939 = vmatprep.subr.mxu0 0.0
    %2940 = vmatpush1.msra.mxu0 0.0
    %2941 = vmatprep.subr.mxu0 0.0
    %2942 = vmatpush1.msra.mxu0 0.0
    %2943 = vmatprep.subr.mxu0 0.0
    %2944 = vmatpush1.msra.mxu0 0.0
    %2945 = vmatprep.subr.mxu0 0.0
    %2946 = vmatpush1.msra.mxu0 0.0
    %2947 = vmatprep.subr.mxu0 0.0
    %2948 = vmatpush1.msra.mxu0 0.0
    %2949 = vmatprep.subr.mxu0 0.0
    %2950 = vmatpush1.msra.mxu0 0.0
    %2951 = vmatprep.subr.mxu0 0.0
    %2952 = vmatpush1.msra.mxu0 0.0
    %2953 = vmatprep.subr.mxu0 0.0
    %2954 = vmatpush1.msra.mxu0 0.0
    %2955 = vmatprep.subr.mxu0 0.0
    %2956 = vmatpush1.msra.mxu0 0.0
    %2957 = vmatprep.subr.mxu0 0.0
    %2958 = vmatpush1.msra.mxu0 0.0
    %2959 = vmatprep.subr.mxu0 0.0
    %2960 = vmatpush1.msra.mxu0 0.0
    %2961 = vmatprep.subr.mxu0 0.0
    %2962 = vmatpush1.msra.mxu0 0.0
    %2963 = vmatprep.subr.mxu0 0.0
    %2964 = vmatpush1.msra.mxu0 0.0
    %2965 = vmatprep.subr.mxu0 0.0
    %2966 = vmatpush1.msra.mxu0 0.0
    %2967 = vmatprep.subr.mxu0 0.0
    %2968 = vmatpush1.msra.mxu0 0.0
    %2969 = vmatprep.subr.mxu0 0.0
    %2970 = vmatpush1.msra.mxu0 0.0
    %2971 = vmatprep.subr.mxu0 0.0
    %2972 = vmatpush1.msra.mxu0 0.0
    %2973 = vmatprep.subr.mxu0 0.0
    %2974 = vmatpush1.msra.mxu0 0.0
    %2975 = vmatprep.subr.mxu0 0.0
    %2976 = vmatpush1.msra.mxu0 0.0
    %2977 = vmatprep.subr.mxu0 0.0
    %2978 = vmatpush1.msra.mxu0 0.0
    %2979 = vmatprep.mubr.f32.mxu0 0.0
    %2980 = vmatmul.mubr.f32.gmra.mrb[0].mxu0 %v2830
    %v2981 = vpop.f32.mrb[0].mxu0
    %v2982 = vadd.f32 0.0, %v2981
    %v2983 = vpop.f32.mrb[0].mxu0
    %v2984 = vadd.f32 0.0, %v2983
    %2985 = vdwg.mxu0
    %v2986 = vadd.f32 %v2783, %v2911
    %v2987 = vadd.f32 %v2784, %v2913
    %v2988 = vadd.f32 %v2785, %v2982
    %v2989 = vadd.f32 %v2786, %v2984
    %s2990 = scalar_lea.vmem %s2, 112
    %v2991 = vld [vmem:[%s2990] sm:$0xff]
    %2992 = vrot.lane.b32.xlu0 %v191, 98
    %v2993 = vpop.permute.xlu0 %2992
    %2994 = vrot.lane.b32.xlu0 %v192, 98
    %v2995 = vpop.permute.xlu0 %2994
    %2996 = vrot.lane.b32.xlu0 %v193, 98
    %v2997 = vpop.permute.xlu0 %2996
    %2998 = vrot.lane.b32.xlu0 %v194, 98
    %v2999 = vpop.permute.xlu0 %2998
    %vm3000 = vcmp.lt.s32.totalorder %v207, 98
    %v3001 = vsel %vm3000, %v2997, %v2999
    %v3002 = vsel %vm3000, %v2995, %v2997
    %v3003 = vsel %vm3000, %v2993, %v2995
    %v3004 = vsel %vm3000, %v2999, %v2993
    %s3005 = scalar_lea.vmem %s3, 56
    %v3006 = vld [vmem:[%s3005] sm:$0xf]
    %v3008 = vlaneseq
    %v3009 = vshrl.u32 %v3008, 7
    %v3010 = vsub.s32 0, %v3009
    %v3011 = vrot.slane %v3006, %v3010
    %v3012 = vlaneseq
    %v3013 = vshrl.u32 %v3012, 7
    %v3014 = vsub.s32 1, %v3013
    %v3015 = vrot.slane %v3006, %v3014
    %v3016 = vlaneseq
    %v3017 = vshrl.u32 %v3016, 7
    %v3018 = vsub.s32 2, %v3017
    %v3019 = vrot.slane %v3006, %v3018
    %v3020 = vlaneseq
    %v3021 = vshrl.u32 %v3020, 7
    %v3022 = vsub.s32 3, %v3021
    %v3023 = vrot.slane %v3006, %v3022
    %v3028 = vmul.f32 %v3003, %v3011
    %v3029 = vmul.f32 %v3002, %v3015
    %v3030 = vmul.f32 %v3001, %v3019
    %v3031 = vmul.f32 %v3004, %v3023
    %v3033 = vsel %vm29, %v2991, 0
    %v3036 = vsel %vm32, %v3028, 0
    %v3039 = vsel %vm32, %v3029, 0
    %v3042 = vsel %vm32, %v3030, 0
    %v3045 = vsel %vm32, %v3031, 0
    %3047 = vmatprep.subr.mxu0 %v3039
    %3048 = vmatpush1.msra.mxu0 %v3036
    %3049 = vmatprep.subr.mxu0 0.0
    %3050 = vmatpush1.msra.mxu0 0.0
    %3051 = vmatprep.subr.mxu0 0.0
    %3052 = vmatpush1.msra.mxu0 0.0
    %3053 = vmatprep.subr.mxu0 0.0
    %3054 = vmatpush1.msra.mxu0 0.0
    %3055 = vmatprep.subr.mxu0 0.0
    %3056 = vmatpush1.msra.mxu0 0.0
    %3057 = vmatprep.subr.mxu0 0.0
    %3058 = vmatpush1.msra.mxu0 0.0
    %3059 = vmatprep.subr.mxu0 0.0
    %3060 = vmatpush1.msra.mxu0 0.0
    %3061 = vmatprep.subr.mxu0 0.0
    %3062 = vmatpush1.msra.mxu0 0.0
    %3063 = vmatprep.subr.mxu0 0.0
    %3064 = vmatpush1.msra.mxu0 0.0
    %3065 = vmatprep.subr.mxu0 0.0
    %3066 = vmatpush1.msra.mxu0 0.0
    %3067 = vmatprep.subr.mxu0 0.0
    %3068 = vmatpush1.msra.mxu0 0.0
    %3069 = vmatprep.subr.mxu0 0.0
    %3070 = vmatpush1.msra.mxu0 0.0
    %3071 = vmatprep.subr.mxu0 0.0
    %3072 = vmatpush1.msra.mxu0 0.0
    %3073 = vmatprep.subr.mxu0 0.0
    %3074 = vmatpush1.msra.mxu0 0.0
    %3075 = vmatprep.subr.mxu0 0.0
    %3076 = vmatpush1.msra.mxu0 0.0
    %3077 = vmatprep.subr.mxu0 0.0
    %3078 = vmatpush1.msra.mxu0 0.0
    %3079 = vmatprep.subr.mxu0 0.0
    %3080 = vmatpush1.msra.mxu0 0.0
    %3081 = vmatprep.subr.mxu0 0.0
    %3082 = vmatpush1.msra.mxu0 0.0
    %3083 = vmatprep.subr.mxu0 0.0
    %3084 = vmatpush1.msra.mxu0 0.0
    %3085 = vmatprep.subr.mxu0 0.0
    %3086 = vmatpush1.msra.mxu0 0.0
    %3087 = vmatprep.subr.mxu0 0.0
    %3088 = vmatpush1.msra.mxu0 0.0
    %3089 = vmatprep.subr.mxu0 0.0
    %3090 = vmatpush1.msra.mxu0 0.0
    %3091 = vmatprep.subr.mxu0 0.0
    %3092 = vmatpush1.msra.mxu0 0.0
    %3093 = vmatprep.subr.mxu0 0.0
    %3094 = vmatpush1.msra.mxu0 0.0
    %3095 = vmatprep.subr.mxu0 0.0
    %3096 = vmatpush1.msra.mxu0 0.0
    %3097 = vmatprep.subr.mxu0 0.0
    %3098 = vmatpush1.msra.mxu0 0.0
    %3099 = vmatprep.subr.mxu0 0.0
    %3100 = vmatpush1.msra.mxu0 0.0
    %3101 = vmatprep.subr.mxu0 0.0
    %3102 = vmatpush1.msra.mxu0 0.0
    %3103 = vmatprep.subr.mxu0 0.0
    %3104 = vmatpush1.msra.mxu0 0.0
    %3105 = vmatprep.subr.mxu0 0.0
    %3106 = vmatpush1.msra.mxu0 0.0
    %3107 = vmatprep.subr.mxu0 0.0
    %3108 = vmatpush1.msra.mxu0 0.0
    %3109 = vmatprep.subr.mxu0 0.0
    %3110 = vmatpush1.msra.mxu0 0.0
    %3111 = vmatprep.mubr.f32.mxu0 0.0
    %3112 = vmatmul.mubr.f32.gmra.mrb[0].mxu0 %v3033
    %v3113 = vpop.f32.mrb[0].mxu0
    %v3114 = vadd.f32 0.0, %v3113
    %v3115 = vpop.f32.mrb[0].mxu0
    %v3116 = vadd.f32 0.0, %v3115
    %3117 = vdwg.mxu0
    %3118 = vmatprep.subr.mxu0 %v3045
    %3119 = vmatpush1.msra.mxu0 %v3042
    %3120 = vmatprep.subr.mxu0 0.0
    %3121 = vmatpush1.msra.mxu0 0.0
    %3122 = vmatprep.subr.mxu0 0.0
    %3123 = vmatpush1.msra.mxu0 0.0
    %3124 = vmatprep.subr.mxu0 0.0
    %3125 = vmatpush1.msra.mxu0 0.0
    %3126 = vmatprep.subr.mxu0 0.0
    %3127 = vmatpush1.msra.mxu0 0.0
    %3128 = vmatprep.subr.mxu0 0.0
    %3129 = vmatpush1.msra.mxu0 0.0
    %3130 = vmatprep.subr.mxu0 0.0
    %3131 = vmatpush1.msra.mxu0 0.0
    %3132 = vmatprep.subr.mxu0 0.0
    %3133 = vmatpush1.msra.mxu0 0.0
    %3134 = vmatprep.subr.mxu0 0.0
    %3135 = vmatpush1.msra.mxu0 0.0
    %3136 = vmatprep.subr.mxu0 0.0
    %3137 = vmatpush1.msra.mxu0 0.0
    %3138 = vmatprep.subr.mxu0 0.0
    %3139 = vmatpush1.msra.mxu0 0.0
    %3140 = vmatprep.subr.mxu0 0.0
    %3141 = vmatpush1.msra.mxu0 0.0
    %3142 = vmatprep.subr.mxu0 0.0
    %3143 = vmatpush1.msra.mxu0 0.0
    %3144 = vmatprep.subr.mxu0 0.0
    %3145 = vmatpush1.msra.mxu0 0.0
    %3146 = vmatprep.subr.mxu0 0.0
    %3147 = vmatpush1.msra.mxu0 0.0
    %3148 = vmatprep.subr.mxu0 0.0
    %3149 = vmatpush1.msra.mxu0 0.0
    %3150 = vmatprep.subr.mxu0 0.0
    %3151 = vmatpush1.msra.mxu0 0.0
    %3152 = vmatprep.subr.mxu0 0.0
    %3153 = vmatpush1.msra.mxu0 0.0
    %3154 = vmatprep.subr.mxu0 0.0
    %3155 = vmatpush1.msra.mxu0 0.0
    %3156 = vmatprep.subr.mxu0 0.0
    %3157 = vmatpush1.msra.mxu0 0.0
    %3158 = vmatprep.subr.mxu0 0.0
    %3159 = vmatpush1.msra.mxu0 0.0
    %3160 = vmatprep.subr.mxu0 0.0
    %3161 = vmatpush1.msra.mxu0 0.0
    %3162 = vmatprep.subr.mxu0 0.0
    %3163 = vmatpush1.msra.mxu0 0.0
    %3164 = vmatprep.subr.mxu0 0.0
    %3165 = vmatpush1.msra.mxu0 0.0
    %3166 = vmatprep.subr.mxu0 0.0
    %3167 = vmatpush1.msra.mxu0 0.0
    %3168 = vmatprep.subr.mxu0 0.0
    %3169 = vmatpush1.msra.mxu0 0.0
    %3170 = vmatprep.subr.mxu0 0.0
    %3171 = vmatpush1.msra.mxu0 0.0
    %3172 = vmatprep.subr.mxu0 0.0
    %3173 = vmatpush1.msra.mxu0 0.0
    %3174 = vmatprep.subr.mxu0 0.0
    %3175 = vmatpush1.msra.mxu0 0.0
    %3176 = vmatprep.subr.mxu0 0.0
    %3177 = vmatpush1.msra.mxu0 0.0
    %3178 = vmatprep.subr.mxu0 0.0
    %3179 = vmatpush1.msra.mxu0 0.0
    %3180 = vmatprep.subr.mxu0 0.0
    %3181 = vmatpush1.msra.mxu0 0.0
    %3182 = vmatprep.mubr.f32.mxu0 0.0
    %3183 = vmatmul.mubr.f32.gmra.mrb[0].mxu0 %v3033
    %v3184 = vpop.f32.mrb[0].mxu0
    %v3185 = vadd.f32 0.0, %v3184
    %v3186 = vpop.f32.mrb[0].mxu0
    %v3187 = vadd.f32 0.0, %v3186
    %3188 = vdwg.mxu0
    %v3189 = vadd.f32 %v2986, %v3114
    %v3190 = vadd.f32 %v2987, %v3116
    %v3191 = vadd.f32 %v2988, %v3185
    %v3192 = vadd.f32 %v2989, %v3187
    %s3193 = scalar_lea.vmem %s2, 120
    %v3194 = vld [vmem:[%s3193] sm:$0xff]
    %3195 = vrot.lane.b32.xlu0 %v191, 96
    %v3196 = vpop.permute.xlu0 %3195
    %3197 = vrot.lane.b32.xlu0 %v192, 96
    %v3198 = vpop.permute.xlu0 %3197
    %3199 = vrot.lane.b32.xlu0 %v193, 96
    %v3200 = vpop.permute.xlu0 %3199
    %3201 = vrot.lane.b32.xlu0 %v194, 96
    %v3202 = vpop.permute.xlu0 %3201
    %vm3203 = vcmp.lt.s32.totalorder %v207, 96
    %v3204 = vsel %vm3203, %v3200, %v3202
    %v3205 = vsel %vm3203, %v3198, %v3200
    %v3206 = vsel %vm3203, %v3196, %v3198
    %v3207 = vsel %vm3203, %v3202, %v3196
    %s3208 = scalar_lea.vmem %s3, 60
    %v3209 = vld [vmem:[%s3208] sm:$0xf]
    %v3211 = vlaneseq
    %v3212 = vshrl.u32 %v3211, 7
    %v3213 = vsub.s32 0, %v3212
    %v3214 = vrot.slane %v3209, %v3213
    %v3215 = vlaneseq
    %v3216 = vshrl.u32 %v3215, 7
    %v3217 = vsub.s32 1, %v3216
    %v3218 = vrot.slane %v3209, %v3217
    %v3219 = vlaneseq
    %v3220 = vshrl.u32 %v3219, 7
    %v3221 = vsub.s32 2, %v3220
    %v3222 = vrot.slane %v3209, %v3221
    %v3223 = vlaneseq
    %v3224 = vshrl.u32 %v3223, 7
    %v3225 = vsub.s32 3, %v3224
    %v3226 = vrot.slane %v3209, %v3225
    %v3231 = vmul.f32 %v3206, %v3214
    %v3232 = vmul.f32 %v3205, %v3218
    %v3233 = vmul.f32 %v3204, %v3222
    %v3234 = vmul.f32 %v3207, %v3226
    %v3236 = vsel %vm29, %v3194, 0
    %v3239 = vsel %vm32, %v3231, 0
    %v3242 = vsel %vm32, %v3232, 0
    %v3245 = vsel %vm32, %v3233, 0
    %v3248 = vsel %vm32, %v3234, 0
    %3250 = vmatprep.subr.mxu0 %v3242
    %3251 = vmatpush1.msra.mxu0 %v3239
    %3252 = vmatprep.subr.mxu0 0.0
    %3253 = vmatpush1.msra.mxu0 0.0
    %3254 = vmatprep.subr.mxu0 0.0
    %3255 = vmatpush1.msra.mxu0 0.0
    %3256 = vmatprep.subr.mxu0 0.0
    %3257 = vmatpush1.msra.mxu0 0.0
    %3258 = vmatprep.subr.mxu0 0.0
    %3259 = vmatpush1.msra.mxu0 0.0
    %3260 = vmatprep.subr.mxu0 0.0
    %3261 = vmatpush1.msra.mxu0 0.0
    %3262 = vmatprep.subr.mxu0 0.0
    %3263 = vmatpush1.msra.mxu0 0.0
    %3264 = vmatprep.subr.mxu0 0.0
    %3265 = vmatpush1.msra.mxu0 0.0
    %3266 = vmatprep.subr.mxu0 0.0
    %3267 = vmatpush1.msra.mxu0 0.0
    %3268 = vmatprep.subr.mxu0 0.0
    %3269 = vmatpush1.msra.mxu0 0.0
    %3270 = vmatprep.subr.mxu0 0.0
    %3271 = vmatpush1.msra.mxu0 0.0
    %3272 = vmatprep.subr.mxu0 0.0
    %3273 = vmatpush1.msra.mxu0 0.0
    %3274 = vmatprep.subr.mxu0 0.0
    %3275 = vmatpush1.msra.mxu0 0.0
    %3276 = vmatprep.subr.mxu0 0.0
    %3277 = vmatpush1.msra.mxu0 0.0
    %3278 = vmatprep.subr.mxu0 0.0
    %3279 = vmatpush1.msra.mxu0 0.0
    %3280 = vmatprep.subr.mxu0 0.0
    %3281 = vmatpush1.msra.mxu0 0.0
    %3282 = vmatprep.subr.mxu0 0.0
    %3283 = vmatpush1.msra.mxu0 0.0
    %3284 = vmatprep.subr.mxu0 0.0
    %3285 = vmatpush1.msra.mxu0 0.0
    %3286 = vmatprep.subr.mxu0 0.0
    %3287 = vmatpush1.msra.mxu0 0.0
    %3288 = vmatprep.subr.mxu0 0.0
    %3289 = vmatpush1.msra.mxu0 0.0
    %3290 = vmatprep.subr.mxu0 0.0
    %3291 = vmatpush1.msra.mxu0 0.0
    %3292 = vmatprep.subr.mxu0 0.0
    %3293 = vmatpush1.msra.mxu0 0.0
    %3294 = vmatprep.subr.mxu0 0.0
    %3295 = vmatpush1.msra.mxu0 0.0
    %3296 = vmatprep.subr.mxu0 0.0
    %3297 = vmatpush1.msra.mxu0 0.0
    %3298 = vmatprep.subr.mxu0 0.0
    %3299 = vmatpush1.msra.mxu0 0.0
    %3300 = vmatprep.subr.mxu0 0.0
    %3301 = vmatpush1.msra.mxu0 0.0
    %3302 = vmatprep.subr.mxu0 0.0
    %3303 = vmatpush1.msra.mxu0 0.0
    %3304 = vmatprep.subr.mxu0 0.0
    %3305 = vmatpush1.msra.mxu0 0.0
    %3306 = vmatprep.subr.mxu0 0.0
    %3307 = vmatpush1.msra.mxu0 0.0
    %3308 = vmatprep.subr.mxu0 0.0
    %3309 = vmatpush1.msra.mxu0 0.0
    %3310 = vmatprep.subr.mxu0 0.0
    %3311 = vmatpush1.msra.mxu0 0.0
    %3312 = vmatprep.subr.mxu0 0.0
    %3313 = vmatpush1.msra.mxu0 0.0
    %3314 = vmatprep.mubr.f32.mxu0 0.0
    %3315 = vmatmul.mubr.f32.gmra.mrb[0].mxu0 %v3236
    %v3316 = vpop.f32.mrb[0].mxu0
    %v3317 = vadd.f32 0.0, %v3316
    %v3318 = vpop.f32.mrb[0].mxu0
    %v3319 = vadd.f32 0.0, %v3318
    %3320 = vdwg.mxu0
    %3321 = vmatprep.subr.mxu0 %v3248
    %3322 = vmatpush1.msra.mxu0 %v3245
    %3323 = vmatprep.subr.mxu0 0.0
    %3324 = vmatpush1.msra.mxu0 0.0
    %3325 = vmatprep.subr.mxu0 0.0
    %3326 = vmatpush1.msra.mxu0 0.0
    %3327 = vmatprep.subr.mxu0 0.0
    %3328 = vmatpush1.msra.mxu0 0.0
    %3329 = vmatprep.subr.mxu0 0.0
    %3330 = vmatpush1.msra.mxu0 0.0
    %3331 = vmatprep.subr.mxu0 0.0
    %3332 = vmatpush1.msra.mxu0 0.0
    %3333 = vmatprep.subr.mxu0 0.0
    %3334 = vmatpush1.msra.mxu0 0.0
    %3335 = vmatprep.subr.mxu0 0.0
    %3336 = vmatpush1.msra.mxu0 0.0
    %3337 = vmatprep.subr.mxu0 0.0
    %3338 = vmatpush1.msra.mxu0 0.0
    %3339 = vmatprep.subr.mxu0 0.0
    %3340 = vmatpush1.msra.mxu0 0.0
    %3341 = vmatprep.subr.mxu0 0.0
    %3342 = vmatpush1.msra.mxu0 0.0
    %3343 = vmatprep.subr.mxu0 0.0
    %3344 = vmatpush1.msra.mxu0 0.0
    %3345 = vmatprep.subr.mxu0 0.0
    %3346 = vmatpush1.msra.mxu0 0.0
    %3347 = vmatprep.subr.mxu0 0.0
    %3348 = vmatpush1.msra.mxu0 0.0
    %3349 = vmatprep.subr.mxu0 0.0
    %3350 = vmatpush1.msra.mxu0 0.0
    %3351 = vmatprep.subr.mxu0 0.0
    %3352 = vmatpush1.msra.mxu0 0.0
    %3353 = vmatprep.subr.mxu0 0.0
    %3354 = vmatpush1.msra.mxu0 0.0
    %3355 = vmatprep.subr.mxu0 0.0
    %3356 = vmatpush1.msra.mxu0 0.0
    %3357 = vmatprep.subr.mxu0 0.0
    %3358 = vmatpush1.msra.mxu0 0.0
    %3359 = vmatprep.subr.mxu0 0.0
    %3360 = vmatpush1.msra.mxu0 0.0
    %3361 = vmatprep.subr.mxu0 0.0
    %3362 = vmatpush1.msra.mxu0 0.0
    %3363 = vmatprep.subr.mxu0 0.0
    %3364 = vmatpush1.msra.mxu0 0.0
    %3365 = vmatprep.subr.mxu0 0.0
    %3366 = vmatpush1.msra.mxu0 0.0
    %3367 = vmatprep.subr.mxu0 0.0
    %3368 = vmatpush1.msra.mxu0 0.0
    %3369 = vmatprep.subr.mxu0 0.0
    %3370 = vmatpush1.msra.mxu0 0.0
    %3371 = vmatprep.subr.mxu0 0.0
    %3372 = vmatpush1.msra.mxu0 0.0
    %3373 = vmatprep.subr.mxu0 0.0
    %3374 = vmatpush1.msra.mxu0 0.0
    %3375 = vmatprep.subr.mxu0 0.0
    %3376 = vmatpush1.msra.mxu0 0.0
    %3377 = vmatprep.subr.mxu0 0.0
    %3378 = vmatpush1.msra.mxu0 0.0
    %3379 = vmatprep.subr.mxu0 0.0
    %3380 = vmatpush1.msra.mxu0 0.0
    %3381 = vmatprep.subr.mxu0 0.0
    %3382 = vmatpush1.msra.mxu0 0.0
    %3383 = vmatprep.subr.mxu0 0.0
    %3384 = vmatpush1.msra.mxu0 0.0
    %3385 = vmatprep.mubr.f32.mxu0 0.0
    %3386 = vmatmul.mubr.f32.gmra.mrb[0].mxu0 %v3236
    %v3387 = vpop.f32.mrb[0].mxu0
    %v3388 = vadd.f32 0.0, %v3387
    %v3389 = vpop.f32.mrb[0].mxu0
    %v3390 = vadd.f32 0.0, %v3389
    %3391 = vdwg.mxu0
    %v3392 = vadd.f32 %v3189, %v3317
    %v3393 = vadd.f32 %v3190, %v3319
    %v3394 = vadd.f32 %v3191, %v3388
    %v3395 = vadd.f32 %v3192, %v3390
    %s3396 = scalar_lea.vmem %s2, 128
    %v3397 = vld [vmem:[%s3396] sm:$0xff]
    %3398 = vrot.lane.b32.xlu0 %v191, 94
    %v3399 = vpop.permute.xlu0 %3398
    %3400 = vrot.lane.b32.xlu0 %v192, 94
    %v3401 = vpop.permute.xlu0 %3400
    %3402 = vrot.lane.b32.xlu0 %v193, 94
    %v3403 = vpop.permute.xlu0 %3402
    %3404 = vrot.lane.b32.xlu0 %v194, 94
    %v3405 = vpop.permute.xlu0 %3404
    %vm3406 = vcmp.lt.s32.totalorder %v207, 94
    %v3407 = vsel %vm3406, %v3403, %v3405
    %v3408 = vsel %vm3406, %v3401, %v3403
    %v3409 = vsel %vm3406, %v3399, %v3401
    %v3410 = vsel %vm3406, %v3405, %v3399
    %s3411 = scalar_lea.vmem %s3, 64
    %v3412 = vld [vmem:[%s3411] sm:$0xf]
    %v3414 = vlaneseq
    %v3415 = vshrl.u32 %v3414, 7
    %v3416 = vsub.s32 0, %v3415
    %v3417 = vrot.slane %v3412, %v3416
    %v3418 = vlaneseq
    %v3419 = vshrl.u32 %v3418, 7
    %v3420 = vsub.s32 1, %v3419
    %v3421 = vrot.slane %v3412, %v3420
    %v3422 = vlaneseq
    %v3423 = vshrl.u32 %v3422, 7
    %v3424 = vsub.s32 2, %v3423
    %v3425 = vrot.slane %v3412, %v3424
    %v3426 = vlaneseq
    %v3427 = vshrl.u32 %v3426, 7
    %v3428 = vsub.s32 3, %v3427
    %v3429 = vrot.slane %v3412, %v3428
    %v3434 = vmul.f32 %v3409, %v3417
    %v3435 = vmul.f32 %v3408, %v3421
    %v3436 = vmul.f32 %v3407, %v3425
    %v3437 = vmul.f32 %v3410, %v3429
    %v3439 = vsel %vm29, %v3397, 0
    %v3442 = vsel %vm32, %v3434, 0
    %v3445 = vsel %vm32, %v3435, 0
    %v3448 = vsel %vm32, %v3436, 0
    %v3451 = vsel %vm32, %v3437, 0
    %3453 = vmatprep.subr.mxu0 %v3445
    %3454 = vmatpush1.msra.mxu0 %v3442
    %3455 = vmatprep.subr.mxu0 0.0
    %3456 = vmatpush1.msra.mxu0 0.0
    %3457 = vmatprep.subr.mxu0 0.0
    %3458 = vmatpush1.msra.mxu0 0.0
    %3459 = vmatprep.subr.mxu0 0.0
    %3460 = vmatpush1.msra.mxu0 0.0
    %3461 = vmatprep.subr.mxu0 0.0
    %3462 = vmatpush1.msra.mxu0 0.0
    %3463 = vmatprep.subr.mxu0 0.0
    %3464 = vmatpush1.msra.mxu0 0.0
    %3465 = vmatprep.subr.mxu0 0.0
    %3466 = vmatpush1.msra.mxu0 0.0
    %3467 = vmatprep.subr.mxu0 0.0
    %3468 = vmatpush1.msra.mxu0 0.0
    %3469 = vmatprep.subr.mxu0 0.0
    %3470 = vmatpush1.msra.mxu0 0.0
    %3471 = vmatprep.subr.mxu0 0.0
    %3472 = vmatpush1.msra.mxu0 0.0
    %3473 = vmatprep.subr.mxu0 0.0
    %3474 = vmatpush1.msra.mxu0 0.0
    %3475 = vmatprep.subr.mxu0 0.0
    %3476 = vmatpush1.msra.mxu0 0.0
    %3477 = vmatprep.subr.mxu0 0.0
    %3478 = vmatpush1.msra.mxu0 0.0
    %3479 = vmatprep.subr.mxu0 0.0
    %3480 = vmatpush1.msra.mxu0 0.0
    %3481 = vmatprep.subr.mxu0 0.0
    %3482 = vmatpush1.msra.mxu0 0.0
    %3483 = vmatprep.subr.mxu0 0.0
    %3484 = vmatpush1.msra.mxu0 0.0
    %3485 = vmatprep.subr.mxu0 0.0
    %3486 = vmatpush1.msra.mxu0 0.0
    %3487 = vmatprep.subr.mxu0 0.0
    %3488 = vmatpush1.msra.mxu0 0.0
    %3489 = vmatprep.subr.mxu0 0.0
    %3490 = vmatpush1.msra.mxu0 0.0
    %3491 = vmatprep.subr.mxu0 0.0
    %3492 = vmatpush1.msra.mxu0 0.0
    %3493 = vmatprep.subr.mxu0 0.0
    %3494 = vmatpush1.msra.mxu0 0.0
    %3495 = vmatprep.subr.mxu0 0.0
    %3496 = vmatpush1.msra.mxu0 0.0
    %3497 = vmatprep.subr.mxu0 0.0
    %3498 = vmatpush1.msra.mxu0 0.0
    %3499 = vmatprep.subr.mxu0 0.0
    %3500 = vmatpush1.msra.mxu0 0.0
    %3501 = vmatprep.subr.mxu0 0.0
    %3502 = vmatpush1.msra.mxu0 0.0
    %3503 = vmatprep.subr.mxu0 0.0
    %3504 = vmatpush1.msra.mxu0 0.0
    %3505 = vmatprep.subr.mxu0 0.0
    %3506 = vmatpush1.msra.mxu0 0.0
    %3507 = vmatprep.subr.mxu0 0.0
    %3508 = vmatpush1.msra.mxu0 0.0
    %3509 = vmatprep.subr.mxu0 0.0
    %3510 = vmatpush1.msra.mxu0 0.0
    %3511 = vmatprep.subr.mxu0 0.0
    %3512 = vmatpush1.msra.mxu0 0.0
    %3513 = vmatprep.subr.mxu0 0.0
    %3514 = vmatpush1.msra.mxu0 0.0
    %3515 = vmatprep.subr.mxu0 0.0
    %3516 = vmatpush1.msra.mxu0 0.0
    %3517 = vmatprep.mubr.f32.mxu0 0.0
    %3518 = vmatmul.mubr.f32.gmra.mrb[0].mxu0 %v3439
    %v3519 = vpop.f32.mrb[0].mxu0
    %v3520 = vadd.f32 0.0, %v3519
    %v3521 = vpop.f32.mrb[0].mxu0
    %v3522 = vadd.f32 0.0, %v3521
    %3523 = vdwg.mxu0
    %3524 = vmatprep.subr.mxu0 %v3451
    %3525 = vmatpush1.msra.mxu0 %v3448
    %3526 = vmatprep.subr.mxu0 0.0
    %3527 = vmatpush1.msra.mxu0 0.0
    %3528 = vmatprep.subr.mxu0 0.0
    %3529 = vmatpush1.msra.mxu0 0.0
    %3530 = vmatprep.subr.mxu0 0.0
    %3531 = vmatpush1.msra.mxu0 0.0
    %3532 = vmatprep.subr.mxu0 0.0
    %3533 = vmatpush1.msra.mxu0 0.0
    %3534 = vmatprep.subr.mxu0 0.0
    %3535 = vmatpush1.msra.mxu0 0.0
    %3536 = vmatprep.subr.mxu0 0.0
    %3537 = vmatpush1.msra.mxu0 0.0
    %3538 = vmatprep.subr.mxu0 0.0
    %3539 = vmatpush1.msra.mxu0 0.0
    %3540 = vmatprep.subr.mxu0 0.0
    %3541 = vmatpush1.msra.mxu0 0.0
    %3542 = vmatprep.subr.mxu0 0.0
    %3543 = vmatpush1.msra.mxu0 0.0
    %3544 = vmatprep.subr.mxu0 0.0
    %3545 = vmatpush1.msra.mxu0 0.0
    %3546 = vmatprep.subr.mxu0 0.0
    %3547 = vmatpush1.msra.mxu0 0.0
    %3548 = vmatprep.subr.mxu0 0.0
    %3549 = vmatpush1.msra.mxu0 0.0
    %3550 = vmatprep.subr.mxu0 0.0
    %3551 = vmatpush1.msra.mxu0 0.0
    %3552 = vmatprep.subr.mxu0 0.0
    %3553 = vmatpush1.msra.mxu0 0.0
    %3554 = vmatprep.subr.mxu0 0.0
    %3555 = vmatpush1.msra.mxu0 0.0
    %3556 = vmatprep.subr.mxu0 0.0
    %3557 = vmatpush1.msra.mxu0 0.0
    %3558 = vmatprep.subr.mxu0 0.0
    %3559 = vmatpush1.msra.mxu0 0.0
    %3560 = vmatprep.subr.mxu0 0.0
    %3561 = vmatpush1.msra.mxu0 0.0
    %3562 = vmatprep.subr.mxu0 0.0
    %3563 = vmatpush1.msra.mxu0 0.0
    %3564 = vmatprep.subr.mxu0 0.0
    %3565 = vmatpush1.msra.mxu0 0.0
    %3566 = vmatprep.subr.mxu0 0.0
    %3567 = vmatpush1.msra.mxu0 0.0
    %3568 = vmatprep.subr.mxu0 0.0
    %3569 = vmatpush1.msra.mxu0 0.0
    %3570 = vmatprep.subr.mxu0 0.0
    %3571 = vmatpush1.msra.mxu0 0.0
    %3572 = vmatprep.subr.mxu0 0.0
    %3573 = vmatpush1.msra.mxu0 0.0
    %3574 = vmatprep.subr.mxu0 0.0
    %3575 = vmatpush1.msra.mxu0 0.0
    %3576 = vmatprep.subr.mxu0 0.0
    %3577 = vmatpush1.msra.mxu0 0.0
    %3578 = vmatprep.subr.mxu0 0.0
    %3579 = vmatpush1.msra.mxu0 0.0
    %3580 = vmatprep.subr.mxu0 0.0
    %3581 = vmatpush1.msra.mxu0 0.0
    %3582 = vmatprep.subr.mxu0 0.0
    %3583 = vmatpush1.msra.mxu0 0.0
    %3584 = vmatprep.subr.mxu0 0.0
    %3585 = vmatpush1.msra.mxu0 0.0
    %3586 = vmatprep.subr.mxu0 0.0
    %3587 = vmatpush1.msra.mxu0 0.0
    %3588 = vmatprep.mubr.f32.mxu0 0.0
    %3589 = vmatmul.mubr.f32.gmra.mrb[0].mxu0 %v3439
    %v3590 = vpop.f32.mrb[0].mxu0
    %v3591 = vadd.f32 0.0, %v3590
    %v3592 = vpop.f32.mrb[0].mxu0
    %v3593 = vadd.f32 0.0, %v3592
    %3594 = vdwg.mxu0
    %v3595 = vadd.f32 %v3392, %v3520
    %v3596 = vadd.f32 %v3393, %v3522
    %v3597 = vadd.f32 %v3394, %v3591
    %v3598 = vadd.f32 %v3395, %v3593
    %3599 = vset.pattern.permute.xlu0 7
    %3600 = vperm.xlu0 %3599, %v18
    %v3601 = vpop.permute.xlu0 %3600
    %v3603 = vadd.f32 %v3595, %v3601
    %v3604 = vadd.f32 %v3596, %v3601
    %v3605 = vadd.f32 %v3597, %v3601
    %v3606 = vadd.f32 %v3598, %v3601
    %v3607 = vmax.f32 %v3603, 0.0
    %v3608 = vmax.f32 %v3604, 0.0
    %v3609 = vmax.f32 %v3605, 0.0
    %v3610 = vmax.f32 %v3606, 0.0
    %v3611 = vmin.f32 %v3607, 6.0
    %v3612 = vmin.f32 %v3608, 6.0
    %v3613 = vmin.f32 %v3609, 6.0
    %v3614 = vmin.f32 %v3610, 6.0
    %3615 = vst [vmem:[#allocation2] sm:$0xff] %v3611
    %3616 = vst [vmem:[#allocation2 + $0x8] sm:$0xff] %v3612
    %s3617 = scalar_lea.vmem [#allocation2], 16
    %3618 = vst [vmem:[%s3617] sm:$0xff] %v3613
    %3619 = vst [vmem:[%s3617 + $0x8] sm:$0xff] %v3614
    // Predicated region
    $region18: #{tpu_custom_call.1} parent=1 // pred_check
      _
    $region19: #{tpu_custom_call.1} parent=1 // pred_check_branch
      %3621 = sbr.rel (0) target = $region21
    $region20: #{tpu_custom_call.1} parent=1 // pred_region
      %s3623 = ssub.s32 512, 512
      %3624 = vsyncadd [#allocation3], %s3623
      %s3625 = sshll.u32 [#allocation2], 4
      %s3626 = int_to_ptr.vmem [resolvable:$true] %s3625
      %3631 = dma.vmem_to_hbm [thread:$0]  %s3626, 512, %s4, [#allocation3], 256, 256, 16
    $region21: #{tpu_custom_call.1} parent=1 // pred_fallthru
      _
    // Predicated region
    $region22: #{tpu_custom_call.1} parent=1 // pred_check
      _
    $region23: #{tpu_custom_call.1} parent=1 // pred_check_branch
      %3633 = sbr.rel (0) target = $region25
    $region24: #{tpu_custom_call.1} parent=1 // pred_region
      %3634 = dma.done [#allocation3], 512
    $region25: #{tpu_custom_call.1} parent=1 // pred_fallthru
      _
    %3635 = vsyncpa [#allocation3], 1

</llo_original>
